<compile_context>
chip_gen: v5e
topology: v5e:2x2
jax: 0.10.0
libtpu: 0.0.40
codegen_flags: <defaults>
</compile_context>

<pallas_src>
import functools

import jax
import jax.numpy as jnp
from jax.experimental import pallas as pl
from jax.experimental.pallas import tpu as pltpu

# MXU operand dtype (accumulation is always f32).  Set to jnp.float32 for a
# bit-exact-to-f32 reference run.
_MXU_DTYPE = jnp.bfloat16

_CP = 8  # padded channel count (sublane tile); covers cx_chan=6 and cm_chan=2


# --------------------------------------------------------------------------
# In-kernel helpers
# --------------------------------------------------------------------------
def _conv3x3_fused(x, w_flat, b, mask_rep, lg, row_w, relu):
    """One 3x3 conv (stride 1, zero pad 1) on a lane-dense activation.

    x        : f32 (Cp, Lg)        lane-dense activation (batch folded in lanes)
    w_flat   : (Cp, 9*Cp)          im2col weights, tap-major [(dy*3+dx)*Cp+cin]
    b        : f32 (Cp, 1)
    mask_rep : f32 (9*Cp, Lg)      border masks repeated per input channel
    """
    cols = []
    for t in range(9):
        dy, dx = divmod(t, 3)
        off = (dy - 1) * row_w + (dx - 1)
        # out[p] = x[p + off]; every wrapped / out-of-bounds lane is zeroed by
        # the precomputed mask (this also kills cross-image contamination when
        # batch is folded into the lane axis).
        cols.append(x if off == 0 else pltpu.roll(x, (-off) % lg, 1))
    stack = jnp.concatenate(cols, axis=0)          # (9*Cp, Lg), tile-aligned
    stack = stack * mask_rep                       # single full-vreg VPU multiply
    acc = jnp.dot(w_flat, stack.astype(w_flat.dtype),
                  preferred_element_type=jnp.float32)   # ONE MXU matmul, K=9*Cp
    acc = acc + b
    if relu:
        acc = jnp.maximum(acc, 0.0)
    return acc


def _projnet_chain(x, w1_ref, b1_ref, w2_ref, b2_ref, mask_rep, lg, row_w,
                   num_blocks):
    """T resblocks: X = X + conv2(relu(conv1(X))); weights sliced per block."""
    for t in range(num_blocks):
        h1 = _conv3x3_fused(x, w1_ref[t], b1_ref[t], mask_rep, lg, row_w, True)
        h2 = _conv3x3_fused(h1, w2_ref[t], b2_ref[t], mask_rep, lg, row_w, False)
        x = x + h2
    return x


# --------------------------------------------------------------------------
# Pallas kernels
# --------------------------------------------------------------------------
def _init_kernel(mask_ref, wpre_ref, bpre_ref,
                 w1x_ref, b1x_ref, w2x_ref, b2x_ref,
                 w1m_ref, b1m_ref, w2m_ref, b2m_ref,
                 xin_ref, min_ref, ox_ref, om_ref,
                 *, lg, row_w, num_blocks):
    """Fused initial stage: [CX conv + concat + ProjnetX] and [ProjnetM]."""
    mask_rep = mask_ref[...]
    xin = xin_ref[...]                              # rows 0-1 = XZi0, rest 0
    # wpre rows 0-1 and 6-7 are zero -> pre-conv output is 0 there; xin rows
    # 2-7 are zero -> the add reproduces cat(XZi0, conv(XZi0, CX)) exactly.
    x = _conv3x3_fused(xin, wpre_ref[...], bpre_ref[...], mask_rep, lg, row_w,
                       False) + xin
    ox_ref[...] = _projnet_chain(x, w1x_ref, b1x_ref, w2x_ref, b2x_ref,
                                 mask_rep, lg, row_w, num_blocks)
    om_ref[...] = _projnet_chain(min_ref[...], w1m_ref, b1m_ref, w2m_ref,
                                 b2m_ref, mask_rep, lg, row_w, num_blocks)


def _stage_kernel(mask_ref, w1_ref, b1_ref, w2_ref, b2_ref,
                  new_ref, state_ref, o_ref, *, lg, row_w, num_blocks):
    """Fused recurrent stage: cat(IFdim, XZ) channel merge + ProjnetX chain."""
    mask_rep = mask_ref[...]
    state = state_ref[...]                          # previous padded projnet out
    row = jax.lax.broadcasted_iota(jnp.int32, state.shape, 0)
    # rows 0-1 <- new IFdim, rows 2+ <- previous hidden channels XZ (padding 0)
    x = jnp.where(row < 2, new_ref[...], state)
    o_ref[...] = _projnet_chain(x, w1_ref, b1_ref, w2_ref, b2_ref,
                                mask_rep, lg, row_w, num_blocks)


# --------------------------------------------------------------------------
# pallas_call wrappers
# --------------------------------------------------------------------------
def _num_lane_groups(batch):
    # v7x has 2 TensorCores -> keep a 2-wide 'parallel' grid; v5e/v6e have a
    # single TC -> collapse the grid entirely (batch fully folded into lanes).
    try:
        kind = jax.devices()[0].device_kind.lower()
    except Exception:
        kind = ""
    if "v7" in kind and batch >= 2 and batch % 2 == 0:
        return 2
    return 1


def _full_spec(shape):
    n = len(shape)
    return pl.BlockSpec(shape, lambda i, _n=n: (0,) * _n)


def _init_stage_call(params, xin, min_lane, mask_rep, grid_g, row_w):
    cp, t_blk = params["CP"], params["T"]
    L = xin.shape[1]
    lg = L // grid_g
    px, pm = params["proxX"], params["proxM"]
    kernel = functools.partial(_init_kernel, lg=lg, row_w=row_w,
                               num_blocks=t_blk)
    act_spec = pl.BlockSpec((cp, lg), lambda i: (0, i))
    return pl.pallas_call(
        kernel,
        out_shape=(jax.ShapeDtypeStruct((cp, L), jnp.float32),
                   jax.ShapeDtypeStruct((cp, L), jnp.float32)),
        grid_spec=pltpu.PrefetchScalarGridSpec(
            num_scalar_prefetch=0,
            grid=(grid_g,),
            in_specs=[
                _full_spec(mask_rep.shape),
                _full_spec(params["wpre"].shape),
                _full_spec(params["bpre"].shape),
                _full_spec(px["w1"].shape), _full_spec(px["b1"].shape),
                _full_spec(px["w2"].shape), _full_spec(px["b2"].shape),
                _full_spec(pm["w1"].shape), _full_spec(pm["b1"].shape),
                _full_spec(pm["w2"].shape), _full_spec(pm["b2"].shape),
                act_spec, act_spec,
            ],
            out_specs=(act_spec, act_spec),
        ),
        compiler_params=pltpu.CompilerParams(dimension_semantics=("parallel",)),
    )(mask_rep, params["wpre"], params["bpre"],
      px["w1"], px["b1"], px["w2"], px["b2"],
      pm["w1"], pm["b1"], pm["w2"], pm["b2"],
      xin, min_lane)


def _stage_call(params, new_lane, state, mask_rep, grid_g, row_w):
    cp, t_blk = params["CP"], params["T"]
    L = state.shape[1]
    lg = L // grid_g
    px = params["proxX"]
    kernel = functools.partial(_stage_kernel, lg=lg, row_w=row_w,
                               num_blocks=t_blk)
    act_spec = pl.BlockSpec((cp, lg), lambda i: (0, i))
    return pl.pallas_call(
        kernel,
        out_shape=jax.ShapeDtypeStruct((cp, L), jnp.float32),
        grid_spec=pltpu.PrefetchScalarGridSpec(
            num_scalar_prefetch=0,
            grid=(grid_g,),
            in_specs=[
                _full_spec(mask_rep.shape),
                _full_spec(px["w1"].shape), _full_spec(px["b1"].shape),
                _full_spec(px["w2"].shape), _full_spec(px["b2"].shape),
                act_spec, act_spec,
            ],
            out_specs=act_spec,
        ),
        compiler_params=pltpu.CompilerParams(dimension_semantics=("parallel",)),
    )(mask_rep, px["w1"], px["b1"], px["w2"], px["b2"], new_lane, state)


# --------------------------------------------------------------------------
# Constants / layout plumbing (XLA side)
# --------------------------------------------------------------------------
def _make_mask_rep(h, w, imgs_per_group, cp):
    """(9*cp, imgs_per_group*h*w) border masks, row layout t*cp + cin."""
    p = jnp.arange(h * w)
    row = p // w
    col = p % w
    ms = []
    for dy in range(3):
        for dx in range(3):
            valid = ((row + dy - 1) >= 0) & ((row + dy - 1) < h) & \
                    ((col + dx - 1) >= 0) & ((col + dx - 1) < w)
            ms.append(valid.astype(jnp.float32))
    tap = jnp.stack(ms, axis=0)                       # (9, HW)
    tap = jnp.tile(tap, (1, imgs_per_group))          # (9, Lg), periodic per image
    return jnp.repeat(tap, cp, axis=0)                # (9*cp, Lg)


def _w_to_im2col(w, cout_p, cin_p):
    """(Cout, Cin, 3, 3) -> (Cout_p, 9*Cin_p), index (dy*3+dx)*Cin_p + cin."""
    cout, cin = w.shape[0], w.shape[1]
    wp = jnp.zeros((cout_p, cin_p, 3, 3), jnp.float32).at[:cout, :cin].set(w)
    return jnp.transpose(wp, (0, 2, 3, 1)).reshape(cout_p, 9 * cin_p)


def _pad_bias(b, cout_p):
    return jnp.zeros((cout_p, 1), jnp.float32).at[:b.shape[0], 0].set(b)


def nchw_to_lane(x, cp):
    """(B, C, H, W) -> (cp, B*H*W), channels zero-padded to cp."""
    b, c, h, w = x.shape
    xl = jnp.transpose(x.reshape(b, c, h * w), (1, 0, 2)).reshape(c, b * h * w)
    xl = xl.astype(jnp.float32)
    if cp > c:
        xl = jnp.pad(xl, ((0, cp - c), (0, 0)))
    return xl


def lane_to_nchw(xl, b, c, h, w):
    """(cp, B*H*W) -> (B, C, H, W) (drops padded channels)."""
    x = xl[:c].reshape(c, b, h * w)
    return jnp.transpose(x, (1, 0, 2)).reshape(b, c, h, w)


# --------------------------------------------------------------------------
# fastmri-style centered orthonormal 2D FFT on (..., H, W, 2) tensors.
# TODO(synk): FFT has no Pallas TPU primitive; done with jnp.fft (XLA FFT).
# --------------------------------------------------------------------------
def fft2c(x):
    c = jax.lax.complex(x[..., 0], x[..., 1])
    c = jnp.fft.ifftshift(c, axes=(-2, -1))
    c = jnp.fft.fft2(c, axes=(-2, -1), norm="ortho")
    c = jnp.fft.fftshift(c, axes=(-2, -1))
    return jnp.stack([jnp.real(c), jnp.imag(c)], axis=-1)


def ifft2c(x):
    c = jax.lax.complex(x[..., 0], x[..., 1])
    c = jnp.fft.ifftshift(c, axes=(-2, -1))
    c = jnp.fft.ifft2(c, axes=(-2, -1), norm="ortho")
    c = jnp.fft.fftshift(c, axes=(-2, -1))
    return jnp.stack([jnp.real(c), jnp.imag(c)], axis=-1)


def complex_to_chan_dim(x):  # (b, c, h, w, 2) -> (b, 2c, h, w)
    b, c, h, w, two = x.shape
    assert two == 2
    return jnp.transpose(x, (0, 4, 1, 2, 3)).reshape(b, 2 * c, h, w)


def chan_complex_to_last_dim(x):  # (b, 2c, h, w) -> (b, c, h, w, 2)
    b, c2, h, w = x.shape
    assert c2 % 2 == 0
    c = c2 // 2
    return jnp.transpose(x.reshape(b, 2, c, h, w), (0, 2, 3, 4, 1))


# --------------------------------------------------------------------------
# Parameter construction (only parameters used in forward: fai2, CX,
# proxNet_Xall[0], proxNet_Mall[0]).  Weights stored pre-reshaped to the
# im2col layout and cast to the MXU dtype wrapper-side.
# --------------------------------------------------------------------------
def _init_projnet(key, c, cp, t_blk, mxu_dtype):
    w1s, b1s, w2s, b2s = [], [], [], []
    for k in jax.random.split(key, t_blk):
        k1, k2, k3, k4 = jax.random.split(k, 4)
        w1 = 0.1 * jax.random.normal(k1, (c, c, 3, 3), jnp.float32)
        b1 = 0.01 * jax.random.normal(k2, (c,), jnp.float32)
        w2 = 0.1 * jax.random.normal(k3, (c, c, 3, 3), jnp.float32)
        b2 = 0.01 * jax.random.normal(k4, (c,), jnp.float32)
        w1s.append(_w_to_im2col(w1, cp, cp))
        b1s.append(_pad_bias(b1, cp))
        w2s.append(_w_to_im2col(w2, cp, cp))
        b2s.append(_pad_bias(b2, cp))
    return {"w1": jnp.stack(w1s).astype(mxu_dtype), "b1": jnp.stack(b1s),
            "w2": jnp.stack(w2s).astype(mxu_dtype), "b2": jnp.stack(b2s)}


def init_params(key, num_channel, num_mask_channel, S, T, fai,
                mxu_dtype=_MXU_DTYPE):
    cp = _CP
    cx_chan = num_channel + 2       # ProjnetX channels (6)
    cm_chan = num_mask_channel + 1  # ProjnetM channels (2)
    assert cx_chan <= cp and cm_chan <= cp
    # `filter` is external in the original script; deterministic 3x3 blur.
    filt = jnp.array([[1.0, 2.0, 1.0],
                      [2.0, 4.0, 2.0],
                      [1.0, 2.0, 1.0]], jnp.float32) / 16.0
    CX = jnp.broadcast_to(filt, (num_channel, 2, 3, 3)).astype(jnp.float32)
    # Combined pre-conv: rows 2:2+num_channel hold CX (inputs = channels 0-1);
    # rows 0-1 / 6-7 are zero, the kernel adds the input back for passthrough.
    wpre_full = jnp.zeros((cp, cp, 3, 3), jnp.float32)
    wpre_full = wpre_full.at[2:2 + num_channel, 0:2].set(CX)
    kx, km = jax.random.split(key)
    return {
        "wpre": _w_to_im2col(wpre_full, cp, cp).astype(mxu_dtype),
        "bpre": jnp.zeros((cp, 1), jnp.float32),      # F.conv2d(X, CX): no bias
        "fai2": jnp.ones((S,), jnp.float32) * fai,
        "proxX": _init_projnet(kx, cx_chan, cp, T, mxu_dtype),
        "proxM": _init_projnet(km, cm_chan, cp, T, mxu_dtype),
        "S": S, "T": T, "CP": cp,
    }


# --------------------------------------------------------------------------
# ablationnet.forward (X, Z, LI, epoch are unused by the reference forward).
# TODO(synk): ML.imwrite / write_to_h5 file-I/O side effects are skipped.
# --------------------------------------------------------------------------
def ablationnet_forward(params, X, Z, LI, Y, epoch=0):
    del X, Z, LI, epoch
    S, cp = params["S"], params["CP"]
    fai_last = params["fai2"][-1]      # reference uses self.fai2[-1] each iter
    B, _, H, W, _ = Y.shape
    HW = H * W
    L = B * HW
    G = _num_lane_groups(B)
    Lg = L // G
    mask_rep = _make_mask_rep(H, W, Lg // HW, cp)

    # Initial inputs for both branches (lane-dense, channel-padded).
    XZi0 = complex_to_chan_dim(ifft2c(Y))                 # (B, 2, H, W)
    xin = nchw_to_lane(XZi0, cp)                          # (cp, L)
    Y2 = complex_to_chan_dim(Y)
    # torch.norm(Y2) == whole-tensor Frobenius norm (across the batch).
    maskini = jnp.abs(Y2) / jnp.sqrt(jnp.sum(Y2 * Y2))
    min_lane = nchw_to_lane(maskini, cp)

    # One fused kernel: CX conv + concat + ProjnetX chain, and ProjnetM chain.
    state, mstate = _init_stage_call(params, xin, min_lane, mask_rep, G, W)

    # Mask branch is loop-invariant in the reference forward; hoisted.
    mask = lane_to_nchw(mstate, B, 1, H, W)               # channel 0
    mask_c = mask[..., None]                               # == stack((mask,mask),-1)
    MaskY = fai_last * mask_c * Y
    inv_denom = 1.0 / (1.0 + fai_last * mask_c)            # reciprocal hoisted

    Xc = chan_complex_to_last_dim(lane_to_nchw(state, B, 2, H, W))

    ListX, ListZ = [], []
    for _ in range(S - 1):
        Z2 = fft2c(Xc)
        # Elementwise stays XLA: it sits between the two FFTs, which have no
        # Pallas primitive; XLA fuses it with the FFT output.
        Zc = (Z2 + MaskY) * inv_denom
        IFdim = complex_to_chan_dim(ifft2c(Zc))            # (B, 2, H, W)
        new_lane = nchw_to_lane(IFdim, cp)
        # One fused kernel per stage: channel merge + ProjnetX chain.
        state = _stage_call(params, new_lane, state, mask_rep, G, W)
        Xc = chan_complex_to_last_dim(lane_to_nchw(state, B, 2, H, W))
        ListX.append(Xc)
        ListZ.append(Zc)

    OutMask = jnp.where(mask > 0.5, jnp.ones_like(mask), jnp.zeros_like(mask))
    return ListX, ListZ, OutMask


if __name__ == "__main__":
    # Small deterministic configuration consistent with the module:
    # args.S=3, args.T=2, args.fai=0.5, args.num_channel=4,
    # args.num_mask_channel=1, args.batchSize=2, spatial 16x16.
    B, H, W = 2, 16, 16
    num_channel, num_mask_channel, S, T, fai = 4, 1, 3, 2, 0.5

    key = jax.random.PRNGKey(0)
    kp, kY, kX, kZ, kL = jax.random.split(key, 5)
    params = init_params(kp, num_channel, num_mask_channel, S, T, fai)

    Y = jax.random.normal(kY, (B, 1, H, W, 2), jnp.float32)    # k-space input
    Xin = jax.random.normal(kX, (B, 1, H, W, 2), jnp.float32)  # unused by forward
    Zin = jax.random.normal(kZ, (B, 1, H, W, 2), jnp.float32)  # unused by forward
    LI = jax.random.normal(kL, (B, 1, H, W), jnp.float32)      # unused by forward

    fwd = jax.jit(lambda x, z, li, y: ablationnet_forward(params, x, z, li, y,
                                                          epoch=0))
    ListX, ListZ, OutMask = fwd(Xin, Zin, LI, Y)
    jax.block_until_ready((ListX, ListZ, OutMask))
    print("KERNEL_OK")
</pallas_src>

<mosaic_0001>
module attributes {stable_mosaic.version = 11 : i64} {
  func.func @_init_kernel(%arg0: i32, %arg1: memref<72x512xf32, #tpu.memory_space<vmem>>, %arg2: memref<8x72xbf16, #tpu.memory_space<vmem>>, %arg3: memref<8x1xf32, #tpu.memory_space<vmem>>, %arg4: memref<2x8x72xbf16, #tpu.memory_space<vmem>>, %arg5: memref<2x8x1xf32, #tpu.memory_space<vmem>>, %arg6: memref<2x8x72xbf16, #tpu.memory_space<vmem>>, %arg7: memref<2x8x1xf32, #tpu.memory_space<vmem>>, %arg8: memref<2x8x72xbf16, #tpu.memory_space<vmem>>, %arg9: memref<2x8x1xf32, #tpu.memory_space<vmem>>, %arg10: memref<2x8x72xbf16, #tpu.memory_space<vmem>>, %arg11: memref<2x8x1xf32, #tpu.memory_space<vmem>>, %arg12: memref<8x512xf32, #tpu.memory_space<vmem>>, %arg13: memref<8x512xf32, #tpu.memory_space<vmem>>, %arg14: memref<8x512xf32, #tpu.memory_space<vmem>>, %arg15: memref<8x512xf32, #tpu.memory_space<vmem>>) attributes {dimension_semantics = [#tpu.dimension_semantics<parallel>], iteration_bounds = array<i64: 1>, scalar_prefetch = 0 : i64, scratch_operands = 0 : i64, tpu.core_type = #tpu.core_type<tc>, window_params = [{pipeline_mode = #tpu.pipeline_mode<synchronous>, transform_indices = @transform_0, window_bounds = array<i64: 72, 512>}, {pipeline_mode = #tpu.pipeline_mode<synchronous>, transform_indices = @transform_1, window_bounds = array<i64: 8, 72>}, {pipeline_mode = #tpu.pipeline_mode<synchronous>, transform_indices = @transform_2, window_bounds = array<i64: 8, 1>}, {pipeline_mode = #tpu.pipeline_mode<synchronous>, transform_indices = @transform_3, window_bounds = array<i64: 2, 8, 72>}, {pipeline_mode = #tpu.pipeline_mode<synchronous>, transform_indices = @transform_4, window_bounds = array<i64: 2, 8, 1>}, {pipeline_mode = #tpu.pipeline_mode<synchronous>, transform_indices = @transform_5, window_bounds = array<i64: 2, 8, 72>}, {pipeline_mode = #tpu.pipeline_mode<synchronous>, transform_indices = @transform_6, window_bounds = array<i64: 2, 8, 1>}, {pipeline_mode = #tpu.pipeline_mode<synchronous>, transform_indices = @transform_7, window_bounds = array<i64: 2, 8, 72>}, {pipeline_mode = #tpu.pipeline_mode<synchronous>, transform_indices = @transform_8, window_bounds = array<i64: 2, 8, 1>}, {pipeline_mode = #tpu.pipeline_mode<synchronous>, transform_indices = @transform_9, window_bounds = array<i64: 2, 8, 72>}, {pipeline_mode = #tpu.pipeline_mode<synchronous>, transform_indices = @transform_10, window_bounds = array<i64: 2, 8, 1>}, {transform_indices = @transform_11, window_bounds = array<i64: 8, 512>}, {transform_indices = @transform_12, window_bounds = array<i64: 8, 512>}, {transform_indices = @transform_13, window_bounds = array<i64: 8, 512>}, {transform_indices = @transform_14, window_bounds = array<i64: 8, 512>}]} {
    %c0 = arith.constant 0 : index
    %c0_0 = arith.constant 0 : index
    %0 = vector.load %arg1[%c0, %c0_0] : memref<72x512xf32, #tpu.memory_space<vmem>>, vector<72x512xf32>
    %c0_1 = arith.constant 0 : index
    %c0_2 = arith.constant 0 : index
    %1 = vector.load %arg12[%c0_1, %c0_2] : memref<8x512xf32, #tpu.memory_space<vmem>>, vector<8x512xf32>
    %c0_3 = arith.constant 0 : index
    %c0_4 = arith.constant 0 : index
    %2 = vector.load %arg2[%c0_3, %c0_4] : memref<8x72xbf16, #tpu.memory_space<vmem>>, vector<8x72xbf16>
    %c0_5 = arith.constant 0 : index
    %c0_6 = arith.constant 0 : index
    %3 = vector.load %arg3[%c0_5, %c0_6] : memref<8x1xf32, #tpu.memory_space<vmem>>, vector<8x1xf32>
    %c17_i32 = arith.constant 17 : i32
    %4 = tpu.dynamic_rotate %1 by %c17_i32 dim 1 : vector<8x512xf32>, i32 -> vector<8x512xf32>
    %c16_i32 = arith.constant 16 : i32
    %5 = tpu.dynamic_rotate %1 by %c16_i32 dim 1 : vector<8x512xf32>, i32 -> vector<8x512xf32>
    %c15_i32 = arith.constant 15 : i32
    %6 = tpu.dynamic_rotate %1 by %c15_i32 dim 1 : vector<8x512xf32>, i32 -> vector<8x512xf32>
    %c1_i32 = arith.constant 1 : i32
    %7 = tpu.dynamic_rotate %1 by %c1_i32 dim 1 : vector<8x512xf32>, i32 -> vector<8x512xf32>
    %c511_i32 = arith.constant 511 : i32
    %8 = tpu.dynamic_rotate %1 by %c511_i32 dim 1 : vector<8x512xf32>, i32 -> vector<8x512xf32>
    %c497_i32 = arith.constant 497 : i32
    %9 = tpu.dynamic_rotate %1 by %c497_i32 dim 1 : vector<8x512xf32>, i32 -> vector<8x512xf32>
    %c496_i32 = arith.constant 496 : i32
    %10 = tpu.dynamic_rotate %1 by %c496_i32 dim 1 : vector<8x512xf32>, i32 -> vector<8x512xf32>
    %c495_i32 = arith.constant 495 : i32
    %11 = tpu.dynamic_rotate %1 by %c495_i32 dim 1 : vector<8x512xf32>, i32 -> vector<8x512xf32>
    %12 = tpu.concatenate %4, %5, %6, %7, %1, %8, %9, %10, %11 in 0 : vector<8x512xf32>, vector<8x512xf32>, vector<8x512xf32>, vector<8x512xf32>, vector<8x512xf32>, vector<8x512xf32>, vector<8x512xf32>, vector<8x512xf32>, vector<8x512xf32> -> vector<72x512xf32>
    %13 = arith.mulf %12, %0 : vector<72x512xf32>
    %14 = arith.truncf %13 : vector<72x512xf32> to vector<72x512xbf16>
    %cst = arith.constant dense<0.000000e+00> : vector<8x512xf32>
    %15 = tpu.matmul %2, %14, %cst {dimension_numbers = #tpu.dot_dimension_numbers<[1], [0], [0], [1], [0, 0, 1, 1], [], []>} : vector<8x72xbf16>, vector<72x512xbf16>, vector<8x512xf32> -> vector<8x512xf32>
    %16 = vector.broadcast %3 : vector<8x1xf32> to vector<8x512xf32>
    %17 = arith.addf %15, %16 : vector<8x512xf32>
    %18 = arith.addf %17, %1 : vector<8x512xf32>
    %c0_7 = arith.constant 0 : index
    %c0_8 = arith.constant 0 : index
    %c0_9 = arith.constant 0 : index
    %19 = vector.load %arg4[%c0_7, %c0_8, %c0_9] : memref<2x8x72xbf16, #tpu.memory_space<vmem>>, vector<1x8x72xbf16>
    %20 = vector.shape_cast %19 : vector<1x8x72xbf16> to vector<8x72xbf16>
    %c0_10 = arith.constant 0 : index
    %c0_11 = arith.constant 0 : index
    %c0_12 = arith.constant 0 : index
    %21 = vector.load %arg5[%c0_10, %c0_11, %c0_12] : memref<2x8x1xf32, #tpu.memory_space<vmem>>, vector<1x8x1xf32>
    %22 = vector.shape_cast %21 : vector<1x8x1xf32> to vector<8x1xf32>
    %c17_i32_13 = arith.constant 17 : i32
    %23 = tpu.dynamic_rotate %18 by %c17_i32_13 dim 1 : vector<8x512xf32>, i32 -> vector<8x512xf32>
    %c16_i32_14 = arith.constant 16 : i32
    %24 = tpu.dynamic_rotate %18 by %c16_i32_14 dim 1 : vector<8x512xf32>, i32 -> vector<8x512xf32>
    %c15_i32_15 = arith.constant 15 : i32
    %25 = tpu.dynamic_rotate %18 by %c15_i32_15 dim 1 : vector<8x512xf32>, i32 -> vector<8x512xf32>
    %c1_i32_16 = arith.constant 1 : i32
    %26 = tpu.dynamic_rotate %18 by %c1_i32_16 dim 1 : vector<8x512xf32>, i32 -> vector<8x512xf32>
    %c511_i32_17 = arith.constant 511 : i32
    %27 = tpu.dynamic_rotate %18 by %c511_i32_17 dim 1 : vector<8x512xf32>, i32 -> vector<8x512xf32>
    %c497_i32_18 = arith.constant 497 : i32
    %28 = tpu.dynamic_rotate %18 by %c497_i32_18 dim 1 : vector<8x512xf32>, i32 -> vector<8x512xf32>
    %c496_i32_19 = arith.constant 496 : i32
    %29 = tpu.dynamic_rotate %18 by %c496_i32_19 dim 1 : vector<8x512xf32>, i32 -> vector<8x512xf32>
    %c495_i32_20 = arith.constant 495 : i32
    %30 = tpu.dynamic_rotate %18 by %c495_i32_20 dim 1 : vector<8x512xf32>, i32 -> vector<8x512xf32>
    %31 = tpu.concatenate %23, %24, %25, %26, %18, %27, %28, %29, %30 in 0 : vector<8x512xf32>, vector<8x512xf32>, vector<8x512xf32>, vector<8x512xf32>, vector<8x512xf32>, vector<8x512xf32>, vector<8x512xf32>, vector<8x512xf32>, vector<8x512xf32> -> vector<72x512xf32>
    %32 = arith.mulf %31, %0 : vector<72x512xf32>
    %33 = arith.truncf %32 : vector<72x512xf32> to vector<72x512xbf16>
    %cst_21 = arith.constant dense<0.000000e+00> : vector<8x512xf32>
    %34 = tpu.matmul %20, %33, %cst_21 {dimension_numbers = #tpu.dot_dimension_numbers<[1], [0], [0], [1], [0, 0, 1, 1], [], []>} : vector<8x72xbf16>, vector<72x512xbf16>, vector<8x512xf32> -> vector<8x512xf32>
    %35 = vector.broadcast %22 : vector<8x1xf32> to vector<8x512xf32>
    %36 = arith.addf %34, %35 : vector<8x512xf32>
    %cst_22 = arith.constant 0.000000e+00 : f32
    %37 = vector.broadcast %cst_22 : f32 to vector<8x512xf32>
    %38 = arith.maximumf %36, %37 : vector<8x512xf32>
    %c0_23 = arith.constant 0 : index
    %c0_24 = arith.constant 0 : index
    %c0_25 = arith.constant 0 : index
    %39 = vector.load %arg6[%c0_23, %c0_24, %c0_25] : memref<2x8x72xbf16, #tpu.memory_space<vmem>>, vector<1x8x72xbf16>
    %40 = vector.shape_cast %39 : vector<1x8x72xbf16> to vector<8x72xbf16>
    %c0_26 = arith.constant 0 : index
    %c0_27 = arith.constant 0 : index
    %c0_28 = arith.constant 0 : index
    %41 = vector.load %arg7[%c0_26, %c0_27, %c0_28] : memref<2x8x1xf32, #tpu.memory_space<vmem>>, vector<1x8x1xf32>
    %42 = vector.shape_cast %41 : vector<1x8x1xf32> to vector<8x1xf32>
    %c17_i32_29 = arith.constant 17 : i32
    %43 = tpu.dynamic_rotate %38 by %c17_i32_29 dim 1 : vector<8x512xf32>, i32 -> vector<8x512xf32>
    %c16_i32_30 = arith.constant 16 : i32
    %44 = tpu.dynamic_rotate %38 by %c16_i32_30 dim 1 : vector<8x512xf32>, i32 -> vector<8x512xf32>
    %c15_i32_31 = arith.constant 15 : i32
    %45 = tpu.dynamic_rotate %38 by %c15_i32_31 dim 1 : vector<8x512xf32>, i32 -> vector<8x512xf32>
    %c1_i32_32 = arith.constant 1 : i32
    %46 = tpu.dynamic_rotate %38 by %c1_i32_32 dim 1 : vector<8x512xf32>, i32 -> vector<8x512xf32>
    %c511_i32_33 = arith.constant 511 : i32
    %47 = tpu.dynamic_rotate %38 by %c511_i32_33 dim 1 : vector<8x512xf32>, i32 -> vector<8x512xf32>
    %c497_i32_34 = arith.constant 497 : i32
    %48 = tpu.dynamic_rotate %38 by %c497_i32_34 dim 1 : vector<8x512xf32>, i32 -> vector<8x512xf32>
    %c496_i32_35 = arith.constant 496 : i32
    %49 = tpu.dynamic_rotate %38 by %c496_i32_35 dim 1 : vector<8x512xf32>, i32 -> vector<8x512xf32>
    %c495_i32_36 = arith.constant 495 : i32
    %50 = tpu.dynamic_rotate %38 by %c495_i32_36 dim 1 : vector<8x512xf32>, i32 -> vector<8x512xf32>
    %51 = tpu.concatenate %43, %44, %45, %46, %38, %47, %48, %49, %50 in 0 : vector<8x512xf32>, vector<8x512xf32>, vector<8x512xf32>, vector<8x512xf32>, vector<8x512xf32>, vector<8x512xf32>, vector<8x512xf32>, vector<8x512xf32>, vector<8x512xf32> -> vector<72x512xf32>
    %52 = arith.mulf %51, %0 : vector<72x512xf32>
    %53 = arith.truncf %52 : vector<72x512xf32> to vector<72x512xbf16>
    %cst_37 = arith.constant dense<0.000000e+00> : vector<8x512xf32>
    %54 = tpu.matmul %40, %53, %cst_37 {dimension_numbers = #tpu.dot_dimension_numbers<[1], [0], [0], [1], [0, 0, 1, 1], [], []>} : vector<8x72xbf16>, vector<72x512xbf16>, vector<8x512xf32> -> vector<8x512xf32>
    %55 = vector.broadcast %42 : vector<8x1xf32> to vector<8x512xf32>
    %56 = arith.addf %54, %55 : vector<8x512xf32>
    %57 = arith.addf %18, %56 : vector<8x512xf32>
    %c1 = arith.constant 1 : index
    %c0_38 = arith.constant 0 : index
    %c0_39 = arith.constant 0 : index
    %58 = vector.load %arg4[%c1, %c0_38, %c0_39] : memref<2x8x72xbf16, #tpu.memory_space<vmem>>, vector<1x8x72xbf16>
    %59 = vector.shape_cast %58 : vector<1x8x72xbf16> to vector<8x72xbf16>
    %c1_40 = arith.constant 1 : index
    %c0_41 = arith.constant 0 : index
    %c0_42 = arith.constant 0 : index
    %60 = vector.load %arg5[%c1_40, %c0_41, %c0_42] : memref<2x8x1xf32, #tpu.memory_space<vmem>>, vector<1x8x1xf32>
    %61 = vector.shape_cast %60 : vector<1x8x1xf32> to vector<8x1xf32>
    %c17_i32_43 = arith.constant 17 : i32
    %62 = tpu.dynamic_rotate %57 by %c17_i32_43 dim 1 : vector<8x512xf32>, i32 -> vector<8x512xf32>
    %c16_i32_44 = arith.constant 16 : i32
    %63 = tpu.dynamic_rotate %57 by %c16_i32_44 dim 1 : vector<8x512xf32>, i32 -> vector<8x512xf32>
    %c15_i32_45 = arith.constant 15 : i32
    %64 = tpu.dynamic_rotate %57 by %c15_i32_45 dim 1 : vector<8x512xf32>, i32 -> vector<8x512xf32>
    %c1_i32_46 = arith.constant 1 : i32
    %65 = tpu.dynamic_rotate %57 by %c1_i32_46 dim 1 : vector<8x512xf32>, i32 -> vector<8x512xf32>
    %c511_i32_47 = arith.constant 511 : i32
    %66 = tpu.dynamic_rotate %57 by %c511_i32_47 dim 1 : vector<8x512xf32>, i32 -> vector<8x512xf32>
    %c497_i32_48 = arith.constant 497 : i32
    %67 = tpu.dynamic_rotate %57 by %c497_i32_48 dim 1 : vector<8x512xf32>, i32 -> vector<8x512xf32>
    %c496_i32_49 = arith.constant 496 : i32
    %68 = tpu.dynamic_rotate %57 by %c496_i32_49 dim 1 : vector<8x512xf32>, i32 -> vector<8x512xf32>
    %c495_i32_50 = arith.constant 495 : i32
    %69 = tpu.dynamic_rotate %57 by %c495_i32_50 dim 1 : vector<8x512xf32>, i32 -> vector<8x512xf32>
    %70 = tpu.concatenate %62, %63, %64, %65, %57, %66, %67, %68, %69 in 0 : vector<8x512xf32>, vector<8x512xf32>, vector<8x512xf32>, vector<8x512xf32>, vector<8x512xf32>, vector<8x512xf32>, vector<8x512xf32>, vector<8x512xf32>, vector<8x512xf32> -> vector<72x512xf32>
    %71 = arith.mulf %70, %0 : vector<72x512xf32>
    %72 = arith.truncf %71 : vector<72x512xf32> to vector<72x512xbf16>
    %cst_51 = arith.constant dense<0.000000e+00> : vector<8x512xf32>
    %73 = tpu.matmul %59, %72, %cst_51 {dimension_numbers = #tpu.dot_dimension_numbers<[1], [0], [0], [1], [0, 0, 1, 1], [], []>} : vector<8x72xbf16>, vector<72x512xbf16>, vector<8x512xf32> -> vector<8x512xf32>
    %74 = vector.broadcast %61 : vector<8x1xf32> to vector<8x512xf32>
    %75 = arith.addf %73, %74 : vector<8x512xf32>
    %cst_52 = arith.constant 0.000000e+00 : f32
    %76 = vector.broadcast %cst_52 : f32 to vector<8x512xf32>
    %77 = arith.maximumf %75, %76 : vector<8x512xf32>
    %c1_53 = arith.constant 1 : index
    %c0_54 = arith.constant 0 : index
    %c0_55 = arith.constant 0 : index
    %78 = vector.load %arg6[%c1_53, %c0_54, %c0_55] : memref<2x8x72xbf16, #tpu.memory_space<vmem>>, vector<1x8x72xbf16>
    %79 = vector.shape_cast %78 : vector<1x8x72xbf16> to vector<8x72xbf16>
    %c1_56 = arith.constant 1 : index
    %c0_57 = arith.constant 0 : index
    %c0_58 = arith.constant 0 : index
    %80 = vector.load %arg7[%c1_56, %c0_57, %c0_58] : memref<2x8x1xf32, #tpu.memory_space<vmem>>, vector<1x8x1xf32>
    %81 = vector.shape_cast %80 : vector<1x8x1xf32> to vector<8x1xf32>
    %c17_i32_59 = arith.constant 17 : i32
    %82 = tpu.dynamic_rotate %77 by %c17_i32_59 dim 1 : vector<8x512xf32>, i32 -> vector<8x512xf32>
    %c16_i32_60 = arith.constant 16 : i32
    %83 = tpu.dynamic_rotate %77 by %c16_i32_60 dim 1 : vector<8x512xf32>, i32 -> vector<8x512xf32>
    %c15_i32_61 = arith.constant 15 : i32
    %84 = tpu.dynamic_rotate %77 by %c15_i32_61 dim 1 : vector<8x512xf32>, i32 -> vector<8x512xf32>
    %c1_i32_62 = arith.constant 1 : i32
    %85 = tpu.dynamic_rotate %77 by %c1_i32_62 dim 1 : vector<8x512xf32>, i32 -> vector<8x512xf32>
    %c511_i32_63 = arith.constant 511 : i32
    %86 = tpu.dynamic_rotate %77 by %c511_i32_63 dim 1 : vector<8x512xf32>, i32 -> vector<8x512xf32>
    %c497_i32_64 = arith.constant 497 : i32
    %87 = tpu.dynamic_rotate %77 by %c497_i32_64 dim 1 : vector<8x512xf32>, i32 -> vector<8x512xf32>
    %c496_i32_65 = arith.constant 496 : i32
    %88 = tpu.dynamic_rotate %77 by %c496_i32_65 dim 1 : vector<8x512xf32>, i32 -> vector<8x512xf32>
    %c495_i32_66 = arith.constant 495 : i32
    %89 = tpu.dynamic_rotate %77 by %c495_i32_66 dim 1 : vector<8x512xf32>, i32 -> vector<8x512xf32>
    %90 = tpu.concatenate %82, %83, %84, %85, %77, %86, %87, %88, %89 in 0 : vector<8x512xf32>, vector<8x512xf32>, vector<8x512xf32>, vector<8x512xf32>, vector<8x512xf32>, vector<8x512xf32>, vector<8x512xf32>, vector<8x512xf32>, vector<8x512xf32> -> vector<72x512xf32>
    %91 = arith.mulf %90, %0 : vector<72x512xf32>
    %92 = arith.truncf %91 : vector<72x512xf32> to vector<72x512xbf16>
    %cst_67 = arith.constant dense<0.000000e+00> : vector<8x512xf32>
    %93 = tpu.matmul %79, %92, %cst_67 {dimension_numbers = #tpu.dot_dimension_numbers<[1], [0], [0], [1], [0, 0, 1, 1], [], []>} : vector<8x72xbf16>, vector<72x512xbf16>, vector<8x512xf32> -> vector<8x512xf32>
    %94 = vector.broadcast %81 : vector<8x1xf32> to vector<8x512xf32>
    %95 = arith.addf %93, %94 : vector<8x512xf32>
    %96 = arith.addf %57, %95 : vector<8x512xf32>
    %c0_68 = arith.constant 0 : index
    %c0_69 = arith.constant 0 : index
    %97 = vector.load %arg14[%c0_68, %c0_69] : memref<8x512xf32, #tpu.memory_space<vmem>>, vector<8x512xf32>
    tpu.vector_store %arg14[%c0_68, %c0_69], %96 {strides = array<i32>} : memref<8x512xf32, #tpu.memory_space<vmem>>, vector<8x512xf32>,
    %c0_70 = arith.constant 0 : index
    %c0_71 = arith.constant 0 : index
    %98 = vector.load %arg13[%c0_70, %c0_71] : memref<8x512xf32, #tpu.memory_space<vmem>>, vector<8x512xf32>
    %c0_72 = arith.constant 0 : index
    %c0_73 = arith.constant 0 : index
    %c0_74 = arith.constant 0 : index
    %99 = vector.load %arg8[%c0_72, %c0_73, %c0_74] : memref<2x8x72xbf16, #tpu.memory_space<vmem>>, vector<1x8x72xbf16>
    %100 = vector.shape_cast %99 : vector<1x8x72xbf16> to vector<8x72xbf16>
    %c0_75 = arith.constant 0 : index
    %c0_76 = arith.constant 0 : index
    %c0_77 = arith.constant 0 : index
    %101 = vector.load %arg9[%c0_75, %c0_76, %c0_77] : memref<2x8x1xf32, #tpu.memory_space<vmem>>, vector<1x8x1xf32>
    %102 = vector.shape_cast %101 : vector<1x8x1xf32> to vector<8x1xf32>
    %c17_i32_78 = arith.constant 17 : i32
    %103 = tpu.dynamic_rotate %98 by %c17_i32_78 dim 1 : vector<8x512xf32>, i32 -> vector<8x512xf32>
    %c16_i32_79 = arith.constant 16 : i32
    %104 = tpu.dynamic_rotate %98 by %c16_i32_79 dim 1 : vector<8x512xf32>, i32 -> vector<8x512xf32>
    %c15_i32_80 = arith.constant 15 : i32
    %105 = tpu.dynamic_rotate %98 by %c15_i32_80 dim 1 : vector<8x512xf32>, i32 -> vector<8x512xf32>
    %c1_i32_81 = arith.constant 1 : i32
    %106 = tpu.dynamic_rotate %98 by %c1_i32_81 dim 1 : vector<8x512xf32>, i32 -> vector<8x512xf32>
    %c511_i32_82 = arith.constant 511 : i32
    %107 = tpu.dynamic_rotate %98 by %c511_i32_82 dim 1 : vector<8x512xf32>, i32 -> vector<8x512xf32>
    %c497_i32_83 = arith.constant 497 : i32
    %108 = tpu.dynamic_rotate %98 by %c497_i32_83 dim 1 : vector<8x512xf32>, i32 -> vector<8x512xf32>
    %c496_i32_84 = arith.constant 496 : i32
    %109 = tpu.dynamic_rotate %98 by %c496_i32_84 dim 1 : vector<8x512xf32>, i32 -> vector<8x512xf32>
    %c495_i32_85 = arith.constant 495 : i32
    %110 = tpu.dynamic_rotate %98 by %c495_i32_85 dim 1 : vector<8x512xf32>, i32 -> vector<8x512xf32>
    %111 = tpu.concatenate %103, %104, %105, %106, %98, %107, %108, %109, %110 in 0 : vector<8x512xf32>, vector<8x512xf32>, vector<8x512xf32>, vector<8x512xf32>, vector<8x512xf32>, vector<8x512xf32>, vector<8x512xf32>, vector<8x512xf32>, vector<8x512xf32> -> vector<72x512xf32>
    %112 = arith.mulf %111, %0 : vector<72x512xf32>
    %113 = arith.truncf %112 : vector<72x512xf32> to vector<72x512xbf16>
    %cst_86 = arith.constant dense<0.000000e+00> : vector<8x512xf32>
    %114 = tpu.matmul %100, %113, %cst_86 {dimension_numbers = #tpu.dot_dimension_numbers<[1], [0], [0], [1], [0, 0, 1, 1], [], []>} : vector<8x72xbf16>, vector<72x512xbf16>, vector<8x512xf32> -> vector<8x512xf32>
    %115 = vector.broadcast %102 : vector<8x1xf32> to vector<8x512xf32>
    %116 = arith.addf %114, %115 : vector<8x512xf32>
    %cst_87 = arith.constant 0.000000e+00 : f32
    %117 = vector.broadcast %cst_87 : f32 to vector<8x512xf32>
    %118 = arith.maximumf %116, %117 : vector<8x512xf32>
    %c0_88 = arith.constant 0 : index
    %c0_89 = arith.constant 0 : index
    %c0_90 = arith.constant 0 : index
    %119 = vector.load %arg10[%c0_88, %c0_89, %c0_90] : memref<2x8x72xbf16, #tpu.memory_space<vmem>>, vector<1x8x72xbf16>
    %120 = vector.shape_cast %119 : vector<1x8x72xbf16> to vector<8x72xbf16>
    %c0_91 = arith.constant 0 : index
    %c0_92 = arith.constant 0 : index
    %c0_93 = arith.constant 0 : index
    %121 = vector.load %arg11[%c0_91, %c0_92, %c0_93] : memref<2x8x1xf32, #tpu.memory_space<vmem>>, vector<1x8x1xf32>
    %122 = vector.shape_cast %121 : vector<1x8x1xf32> to vector<8x1xf32>
    %c17_i32_94 = arith.constant 17 : i32
    %123 = tpu.dynamic_rotate %118 by %c17_i32_94 dim 1 : vector<8x512xf32>, i32 -> vector<8x512xf32>
    %c16_i32_95 = arith.constant 16 : i32
    %124 = tpu.dynamic_rotate %118 by %c16_i32_95 dim 1 : vector<8x512xf32>, i32 -> vector<8x512xf32>
    %c15_i32_96 = arith.constant 15 : i32
    %125 = tpu.dynamic_rotate %118 by %c15_i32_96 dim 1 : vector<8x512xf32>, i32 -> vector<8x512xf32>
    %c1_i32_97 = arith.constant 1 : i32
    %126 = tpu.dynamic_rotate %118 by %c1_i32_97 dim 1 : vector<8x512xf32>, i32 -> vector<8x512xf32>
    %c511_i32_98 = arith.constant 511 : i32
    %127 = tpu.dynamic_rotate %118 by %c511_i32_98 dim 1 : vector<8x512xf32>, i32 -> vector<8x512xf32>
    %c497_i32_99 = arith.constant 497 : i32
    %128 = tpu.dynamic_rotate %118 by %c497_i32_99 dim 1 : vector<8x512xf32>, i32 -> vector<8x512xf32>
    %c496_i32_100 = arith.constant 496 : i32
    %129 = tpu.dynamic_rotate %118 by %c496_i32_100 dim 1 : vector<8x512xf32>, i32 -> vector<8x512xf32>
    %c495_i32_101 = arith.constant 495 : i32
    %130 = tpu.dynamic_rotate %118 by %c495_i32_101 dim 1 : vector<8x512xf32>, i32 -> vector<8x512xf32>
    %131 = tpu.concatenate %123, %124, %125, %126, %118, %127, %128, %129, %130 in 0 : vector<8x512xf32>, vector<8x512xf32>, vector<8x512xf32>, vector<8x512xf32>, vector<8x512xf32>, vector<8x512xf32>, vector<8x512xf32>, vector<8x512xf32>, vector<8x512xf32> -> vector<72x512xf32>
    %132 = arith.mulf %131, %0 : vector<72x512xf32>
    %133 = arith.truncf %132 : vector<72x512xf32> to vector<72x512xbf16>
    %cst_102 = arith.constant dense<0.000000e+00> : vector<8x512xf32>
    %134 = tpu.matmul %120, %133, %cst_102 {dimension_numbers = #tpu.dot_dimension_numbers<[1], [0], [0], [1], [0, 0, 1, 1], [], []>} : vector<8x72xbf16>, vector<72x512xbf16>, vector<8x512xf32> -> vector<8x512xf32>
    %135 = vector.broadcast %122 : vector<8x1xf32> to vector<8x512xf32>
    %136 = arith.addf %134, %135 : vector<8x512xf32>
    %137 = arith.addf %98, %136 : vector<8x512xf32>
    %c1_103 = arith.constant 1 : index
    %c0_104 = arith.constant 0 : index
    %c0_105 = arith.constant 0 : index
    %138 = vector.load %arg8[%c1_103, %c0_104, %c0_105] : memref<2x8x72xbf16, #tpu.memory_space<vmem>>, vector<1x8x72xbf16>
    %139 = vector.shape_cast %138 : vector<1x8x72xbf16> to vector<8x72xbf16>
    %c1_106 = arith.constant 1 : index
    %c0_107 = arith.constant 0 : index
    %c0_108 = arith.constant 0 : index
    %140 = vector.load %arg9[%c1_106, %c0_107, %c0_108] : memref<2x8x1xf32, #tpu.memory_space<vmem>>, vector<1x8x1xf32>
    %141 = vector.shape_cast %140 : vector<1x8x1xf32> to vector<8x1xf32>
    %c17_i32_109 = arith.constant 17 : i32
    %142 = tpu.dynamic_rotate %137 by %c17_i32_109 dim 1 : vector<8x512xf32>, i32 -> vector<8x512xf32>
    %c16_i32_110 = arith.constant 16 : i32
    %143 = tpu.dynamic_rotate %137 by %c16_i32_110 dim 1 : vector<8x512xf32>, i32 -> vector<8x512xf32>
    %c15_i32_111 = arith.constant 15 : i32
    %144 = tpu.dynamic_rotate %137 by %c15_i32_111 dim 1 : vector<8x512xf32>, i32 -> vector<8x512xf32>
    %c1_i32_112 = arith.constant 1 : i32
    %145 = tpu.dynamic_rotate %137 by %c1_i32_112 dim 1 : vector<8x512xf32>, i32 -> vector<8x512xf32>
    %c511_i32_113 = arith.constant 511 : i32
    %146 = tpu.dynamic_rotate %137 by %c511_i32_113 dim 1 : vector<8x512xf32>, i32 -> vector<8x512xf32>
    %c497_i32_114 = arith.constant 497 : i32
    %147 = tpu.dynamic_rotate %137 by %c497_i32_114 dim 1 : vector<8x512xf32>, i32 -> vector<8x512xf32>
    %c496_i32_115 = arith.constant 496 : i32
    %148 = tpu.dynamic_rotate %137 by %c496_i32_115 dim 1 : vector<8x512xf32>, i32 -> vector<8x512xf32>
    %c495_i32_116 = arith.constant 495 : i32
    %149 = tpu.dynamic_rotate %137 by %c495_i32_116 dim 1 : vector<8x512xf32>, i32 -> vector<8x512xf32>
    %150 = tpu.concatenate %142, %143, %144, %145, %137, %146, %147, %148, %149 in 0 : vector<8x512xf32>, vector<8x512xf32>, vector<8x512xf32>, vector<8x512xf32>, vector<8x512xf32>, vector<8x512xf32>, vector<8x512xf32>, vector<8x512xf32>, vector<8x512xf32> -> vector<72x512xf32>
    %151 = arith.mulf %150, %0 : vector<72x512xf32>
    %152 = arith.truncf %151 : vector<72x512xf32> to vector<72x512xbf16>
    %cst_117 = arith.constant dense<0.000000e+00> : vector<8x512xf32>
    %153 = tpu.matmul %139, %152, %cst_117 {dimension_numbers = #tpu.dot_dimension_numbers<[1], [0], [0], [1], [0, 0, 1, 1], [], []>} : vector<8x72xbf16>, vector<72x512xbf16>, vector<8x512xf32> -> vector<8x512xf32>
    %154 = vector.broadcast %141 : vector<8x1xf32> to vector<8x512xf32>
    %155 = arith.addf %153, %154 : vector<8x512xf32>
    %cst_118 = arith.constant 0.000000e+00 : f32
    %156 = vector.broadcast %cst_118 : f32 to vector<8x512xf32>
    %157 = arith.maximumf %155, %156 : vector<8x512xf32>
    %c1_119 = arith.constant 1 : index
    %c0_120 = arith.constant 0 : index
    %c0_121 = arith.constant 0 : index
    %158 = vector.load %arg10[%c1_119, %c0_120, %c0_121] : memref<2x8x72xbf16, #tpu.memory_space<vmem>>, vector<1x8x72xbf16>
    %159 = vector.shape_cast %158 : vector<1x8x72xbf16> to vector<8x72xbf16>
    %c1_122 = arith.constant 1 : index
    %c0_123 = arith.constant 0 : index
    %c0_124 = arith.constant 0 : index
    %160 = vector.load %arg11[%c1_122, %c0_123, %c0_124] : memref<2x8x1xf32, #tpu.memory_space<vmem>>, vector<1x8x1xf32>
    %161 = vector.shape_cast %160 : vector<1x8x1xf32> to vector<8x1xf32>
    %c17_i32_125 = arith.constant 17 : i32
    %162 = tpu.dynamic_rotate %157 by %c17_i32_125 dim 1 : vector<8x512xf32>, i32 -> vector<8x512xf32>
    %c16_i32_126 = arith.constant 16 : i32
    %163 = tpu.dynamic_rotate %157 by %c16_i32_126 dim 1 : vector<8x512xf32>, i32 -> vector<8x512xf32>
    %c15_i32_127 = arith.constant 15 : i32
    %164 = tpu.dynamic_rotate %157 by %c15_i32_127 dim 1 : vector<8x512xf32>, i32 -> vector<8x512xf32>
    %c1_i32_128 = arith.constant 1 : i32
    %165 = tpu.dynamic_rotate %157 by %c1_i32_128 dim 1 : vector<8x512xf32>, i32 -> vector<8x512xf32>
    %c511_i32_129 = arith.constant 511 : i32
    %166 = tpu.dynamic_rotate %157 by %c511_i32_129 dim 1 : vector<8x512xf32>, i32 -> vector<8x512xf32>
    %c497_i32_130 = arith.constant 497 : i32
    %167 = tpu.dynamic_rotate %157 by %c497_i32_130 dim 1 : vector<8x512xf32>, i32 -> vector<8x512xf32>
    %c496_i32_131 = arith.constant 496 : i32
    %168 = tpu.dynamic_rotate %157 by %c496_i32_131 dim 1 : vector<8x512xf32>, i32 -> vector<8x512xf32>
    %c495_i32_132 = arith.constant 495 : i32
    %169 = tpu.dynamic_rotate %157 by %c495_i32_132 dim 1 : vector<8x512xf32>, i32 -> vector<8x512xf32>
    %170 = tpu.concatenate %162, %163, %164, %165, %157, %166, %167, %168, %169 in 0 : vector<8x512xf32>, vector<8x512xf32>, vector<8x512xf32>, vector<8x512xf32>, vector<8x512xf32>, vector<8x512xf32>, vector<8x512xf32>, vector<8x512xf32>, vector<8x512xf32> -> vector<72x512xf32>
    %171 = arith.mulf %170, %0 : vector<72x512xf32>
    %172 = arith.truncf %171 : vector<72x512xf32> to vector<72x512xbf16>
    %cst_133 = arith.constant dense<0.000000e+00> : vector<8x512xf32>
    %173 = tpu.matmul %159, %172, %cst_133 {dimension_numbers = #tpu.dot_dimension_numbers<[1], [0], [0], [1], [0, 0, 1, 1], [], []>} : vector<8x72xbf16>, vector<72x512xbf16>, vector<8x512xf32> -> vector<8x512xf32>
    %174 = vector.broadcast %161 : vector<8x1xf32> to vector<8x512xf32>
    %175 = arith.addf %173, %174 : vector<8x512xf32>
    %176 = arith.addf %137, %175 : vector<8x512xf32>
    %c0_134 = arith.constant 0 : index
    %c0_135 = arith.constant 0 : index
    %177 = vector.load %arg15[%c0_134, %c0_135] : memref<8x512xf32, #tpu.memory_space<vmem>>, vector<8x512xf32>
    tpu.vector_store %arg15[%c0_134, %c0_135], %176 {strides = array<i32>} : memref<8x512xf32, #tpu.memory_space<vmem>>, vector<8x512xf32>,
    return
  }
  func.func @transform_0(%arg0: i32) -> (i32, i32) {
    %c0_i32 = arith.constant 0 : i32
    %c0_i32_0 = arith.constant 0 : i32
    %c0_i32_1 = arith.constant 0 : i32
    return %c0_i32, %c0_i32_0 : i32, i32
  }
  func.func @transform_1(%arg0: i32) -> (i32, i32) {
    %c0_i32 = arith.constant 0 : i32
    %c0_i32_0 = arith.constant 0 : i32
    %c0_i32_1 = arith.constant 0 : i32
    return %c0_i32, %c0_i32_0 : i32, i32
  }
  func.func @transform_2(%arg0: i32) -> (i32, i32) {
    %c0_i32 = arith.constant 0 : i32
    %c0_i32_0 = arith.constant 0 : i32
    %c0_i32_1 = arith.constant 0 : i32
    return %c0_i32, %c0_i32_0 : i32, i32
  }
  func.func @transform_3(%arg0: i32) -> (i32, i32, i32) {
    %c0_i32 = arith.constant 0 : i32
    %c0_i32_0 = arith.constant 0 : i32
    %c0_i32_1 = arith.constant 0 : i32
    %c0_i32_2 = arith.constant 0 : i32
    return %c0_i32, %c0_i32_0, %c0_i32_1 : i32, i32, i32
  }
  func.func @transform_4(%arg0: i32) -> (i32, i32, i32) {
    %c0_i32 = arith.constant 0 : i32
    %c0_i32_0 = arith.constant 0 : i32
    %c0_i32_1 = arith.constant 0 : i32
    %c0_i32_2 = arith.constant 0 : i32
    return %c0_i32, %c0_i32_0, %c0_i32_1 : i32, i32, i32
  }
  func.func @transform_5(%arg0: i32) -> (i32, i32, i32) {
    %c0_i32 = arith.constant 0 : i32
    %c0_i32_0 = arith.constant 0 : i32
    %c0_i32_1 = arith.constant 0 : i32
    %c0_i32_2 = arith.constant 0 : i32
    return %c0_i32, %c0_i32_0, %c0_i32_1 : i32, i32, i32
  }
  func.func @transform_6(%arg0: i32) -> (i32, i32, i32) {
    %c0_i32 = arith.constant 0 : i32
    %c0_i32_0 = arith.constant 0 : i32
    %c0_i32_1 = arith.constant 0 : i32
    %c0_i32_2 = arith.constant 0 : i32
    return %c0_i32, %c0_i32_0, %c0_i32_1 : i32, i32, i32
  }
  func.func @transform_7(%arg0: i32) -> (i32, i32, i32) {
    %c0_i32 = arith.constant 0 : i32
    %c0_i32_0 = arith.constant 0 : i32
    %c0_i32_1 = arith.constant 0 : i32
    %c0_i32_2 = arith.constant 0 : i32
    return %c0_i32, %c0_i32_0, %c0_i32_1 : i32, i32, i32
  }
  func.func @transform_8(%arg0: i32) -> (i32, i32, i32) {
    %c0_i32 = arith.constant 0 : i32
    %c0_i32_0 = arith.constant 0 : i32
    %c0_i32_1 = arith.constant 0 : i32
    %c0_i32_2 = arith.constant 0 : i32
    return %c0_i32, %c0_i32_0, %c0_i32_1 : i32, i32, i32
  }
  func.func @transform_9(%arg0: i32) -> (i32, i32, i32) {
    %c0_i32 = arith.constant 0 : i32
    %c0_i32_0 = arith.constant 0 : i32
    %c0_i32_1 = arith.constant 0 : i32
    %c0_i32_2 = arith.constant 0 : i32
    return %c0_i32, %c0_i32_0, %c0_i32_1 : i32, i32, i32
  }
  func.func @transform_10(%arg0: i32) -> (i32, i32, i32) {
    %c0_i32 = arith.constant 0 : i32
    %c0_i32_0 = arith.constant 0 : i32
    %c0_i32_1 = arith.constant 0 : i32
    %c0_i32_2 = arith.constant 0 : i32
    return %c0_i32, %c0_i32_0, %c0_i32_1 : i32, i32, i32
  }
  func.func @transform_11(%arg0: i32) -> (i32, i32) {
    %c0_i32 = arith.constant 0 : i32
    %c0_i32_0 = arith.constant 0 : i32
    return %c0_i32, %arg0 : i32, i32
  }
  func.func @transform_12(%arg0: i32) -> (i32, i32) {
    %c0_i32 = arith.constant 0 : i32
    %c0_i32_0 = arith.constant 0 : i32
    return %c0_i32, %arg0 : i32, i32
  }
  func.func @transform_13(%arg0: i32) -> (i32, i32) {
    %c0_i32 = arith.constant 0 : i32
    %c0_i32_0 = arith.constant 0 : i32
    return %c0_i32, %arg0 : i32, i32
  }
  func.func @transform_14(%arg0: i32) -> (i32, i32) {
    %c0_i32 = arith.constant 0 : i32
    %c0_i32_0 = arith.constant 0 : i32
    return %c0_i32, %arg0 : i32, i32
  }
}

module attributes {stable_mosaic.version = 11 : i64} {
  func.func @_stage_kernel(%arg0: i32, %arg1: memref<72x512xf32, #tpu.memory_space<vmem>>, %arg2: memref<2x8x72xbf16, #tpu.memory_space<vmem>>, %arg3: memref<2x8x1xf32, #tpu.memory_space<vmem>>, %arg4: memref<2x8x72xbf16, #tpu.memory_space<vmem>>, %arg5: memref<2x8x1xf32, #tpu.memory_space<vmem>>, %arg6: memref<8x512xf32, #tpu.memory_space<vmem>>, %arg7: memref<8x512xf32, #tpu.memory_space<vmem>>, %arg8: memref<8x512xf32, #tpu.memory_space<vmem>>) attributes {dimension_semantics = [#tpu.dimension_semantics<parallel>], iteration_bounds = array<i64: 1>, scalar_prefetch = 0 : i64, scratch_operands = 0 : i64, tpu.core_type = #tpu.core_type<tc>, window_params = [{pipeline_mode = #tpu.pipeline_mode<synchronous>, transform_indices = @transform_0, window_bounds = array<i64: 72, 512>}, {pipeline_mode = #tpu.pipeline_mode<synchronous>, transform_indices = @transform_1, window_bounds = array<i64: 2, 8, 72>}, {pipeline_mode = #tpu.pipeline_mode<synchronous>, transform_indices = @transform_2, window_bounds = array<i64: 2, 8, 1>}, {pipeline_mode = #tpu.pipeline_mode<synchronous>, transform_indices = @transform_3, window_bounds = array<i64: 2, 8, 72>}, {pipeline_mode = #tpu.pipeline_mode<synchronous>, transform_indices = @transform_4, window_bounds = array<i64: 2, 8, 1>}, {transform_indices = @transform_5, window_bounds = array<i64: 8, 512>}, {transform_indices = @transform_6, window_bounds = array<i64: 8, 512>}, {transform_indices = @transform_7, window_bounds = array<i64: 8, 512>}]} {
    %c0 = arith.constant 0 : index
    %c0_0 = arith.constant 0 : index
    %0 = vector.load %arg1[%c0, %c0_0] : memref<72x512xf32, #tpu.memory_space<vmem>>, vector<72x512xf32>
    %c0_1 = arith.constant 0 : index
    %c0_2 = arith.constant 0 : index
    %1 = vector.load %arg7[%c0_1, %c0_2] : memref<8x512xf32, #tpu.memory_space<vmem>>, vector<8x512xf32>
    %2 = tpu.iota {dimensions = array<i32: 0>} : vector<8x512xi32>
    %c2_i32 = arith.constant 2 : i32
    %3 = vector.broadcast %c2_i32 : i32 to vector<8x512xi32>
    %4 = arith.cmpi slt, %2, %3 : vector<8x512xi32>
    %c0_3 = arith.constant 0 : index
    %c0_4 = arith.constant 0 : index
    %5 = vector.load %arg6[%c0_3, %c0_4] : memref<8x512xf32, #tpu.memory_space<vmem>>, vector<8x512xf32>
    %6 = arith.select %4, %5, %1 : vector<8x512xi1>, vector<8x512xf32>
    %c0_5 = arith.constant 0 : index
    %c0_6 = arith.constant 0 : index
    %c0_7 = arith.constant 0 : index
    %7 = vector.load %arg2[%c0_5, %c0_6, %c0_7] : memref<2x8x72xbf16, #tpu.memory_space<vmem>>, vector<1x8x72xbf16>
    %8 = vector.shape_cast %7 : vector<1x8x72xbf16> to vector<8x72xbf16>
    %c0_8 = arith.constant 0 : index
    %c0_9 = arith.constant 0 : index
    %c0_10 = arith.constant 0 : index
    %9 = vector.load %arg3[%c0_8, %c0_9, %c0_10] : memref<2x8x1xf32, #tpu.memory_space<vmem>>, vector<1x8x1xf32>
    %10 = vector.shape_cast %9 : vector<1x8x1xf32> to vector<8x1xf32>
    %c17_i32 = arith.constant 17 : i32
    %11 = tpu.dynamic_rotate %6 by %c17_i32 dim 1 : vector<8x512xf32>, i32 -> vector<8x512xf32>
    %c16_i32 = arith.constant 16 : i32
    %12 = tpu.dynamic_rotate %6 by %c16_i32 dim 1 : vector<8x512xf32>, i32 -> vector<8x512xf32>
    %c15_i32 = arith.constant 15 : i32
    %13 = tpu.dynamic_rotate %6 by %c15_i32 dim 1 : vector<8x512xf32>, i32 -> vector<8x512xf32>
    %c1_i32 = arith.constant 1 : i32
    %14 = tpu.dynamic_rotate %6 by %c1_i32 dim 1 : vector<8x512xf32>, i32 -> vector<8x512xf32>
    %c511_i32 = arith.constant 511 : i32
    %15 = tpu.dynamic_rotate %6 by %c511_i32 dim 1 : vector<8x512xf32>, i32 -> vector<8x512xf32>
    %c497_i32 = arith.constant 497 : i32
    %16 = tpu.dynamic_rotate %6 by %c497_i32 dim 1 : vector<8x512xf32>, i32 -> vector<8x512xf32>
    %c496_i32 = arith.constant 496 : i32
    %17 = tpu.dynamic_rotate %6 by %c496_i32 dim 1 : vector<8x512xf32>, i32 -> vector<8x512xf32>
    %c495_i32 = arith.constant 495 : i32
    %18 = tpu.dynamic_rotate %6 by %c495_i32 dim 1 : vector<8x512xf32>, i32 -> vector<8x512xf32>
    %19 = tpu.concatenate %11, %12, %13, %14, %6, %15, %16, %17, %18 in 0 : vector<8x512xf32>, vector<8x512xf32>, vector<8x512xf32>, vector<8x512xf32>, vector<8x512xf32>, vector<8x512xf32>, vector<8x512xf32>, vector<8x512xf32>, vector<8x512xf32> -> vector<72x512xf32>
    %20 = arith.mulf %19, %0 : vector<72x512xf32>
    %21 = arith.truncf %20 : vector<72x512xf32> to vector<72x512xbf16>
    %cst = arith.constant dense<0.000000e+00> : vector<8x512xf32>
    %22 = tpu.matmul %8, %21, %cst {dimension_numbers = #tpu.dot_dimension_numbers<[1], [0], [0], [1], [0, 0, 1, 1], [], []>} : vector<8x72xbf16>, vector<72x512xbf16>, vector<8x512xf32> -> vector<8x512xf32>
    %23 = vector.broadcast %10 : vector<8x1xf32> to vector<8x512xf32>
    %24 = arith.addf %22, %23 : vector<8x512xf32>
    %cst_11 = arith.constant 0.000000e+00 : f32
    %25 = vector.broadcast %cst_11 : f32 to vector<8x512xf32>
    %26 = arith.maximumf %24, %25 : vector<8x512xf32>
    %c0_12 = arith.constant 0 : index
    %c0_13 = arith.constant 0 : index
    %c0_14 = arith.constant 0 : index
    %27 = vector.load %arg4[%c0_12, %c0_13, %c0_14] : memref<2x8x72xbf16, #tpu.memory_space<vmem>>, vector<1x8x72xbf16>
    %28 = vector.shape_cast %27 : vector<1x8x72xbf16> to vector<8x72xbf16>
    %c0_15 = arith.constant 0 : index
    %c0_16 = arith.constant 0 : index
    %c0_17 = arith.constant 0 : index
    %29 = vector.load %arg5[%c0_15, %c0_16, %c0_17] : memref<2x8x1xf32, #tpu.memory_space<vmem>>, vector<1x8x1xf32>
    %30 = vector.shape_cast %29 : vector<1x8x1xf32> to vector<8x1xf32>
    %c17_i32_18 = arith.constant 17 : i32
    %31 = tpu.dynamic_rotate %26 by %c17_i32_18 dim 1 : vector<8x512xf32>, i32 -> vector<8x512xf32>
    %c16_i32_19 = arith.constant 16 : i32
    %32 = tpu.dynamic_rotate %26 by %c16_i32_19 dim 1 : vector<8x512xf32>, i32 -> vector<8x512xf32>
    %c15_i32_20 = arith.constant 15 : i32
    %33 = tpu.dynamic_rotate %26 by %c15_i32_20 dim 1 : vector<8x512xf32>, i32 -> vector<8x512xf32>
    %c1_i32_21 = arith.constant 1 : i32
    %34 = tpu.dynamic_rotate %26 by %c1_i32_21 dim 1 : vector<8x512xf32>, i32 -> vector<8x512xf32>
    %c511_i32_22 = arith.constant 511 : i32
    %35 = tpu.dynamic_rotate %26 by %c511_i32_22 dim 1 : vector<8x512xf32>, i32 -> vector<8x512xf32>
    %c497_i32_23 = arith.constant 497 : i32
    %36 = tpu.dynamic_rotate %26 by %c497_i32_23 dim 1 : vector<8x512xf32>, i32 -> vector<8x512xf32>
    %c496_i32_24 = arith.constant 496 : i32
    %37 = tpu.dynamic_rotate %26 by %c496_i32_24 dim 1 : vector<8x512xf32>, i32 -> vector<8x512xf32>
    %c495_i32_25 = arith.constant 495 : i32
    %38 = tpu.dynamic_rotate %26 by %c495_i32_25 dim 1 : vector<8x512xf32>, i32 -> vector<8x512xf32>
    %39 = tpu.concatenate %31, %32, %33, %34, %26, %35, %36, %37, %38 in 0 : vector<8x512xf32>, vector<8x512xf32>, vector<8x512xf32>, vector<8x512xf32>, vector<8x512xf32>, vector<8x512xf32>, vector<8x512xf32>, vector<8x512xf32>, vector<8x512xf32> -> vector<72x512xf32>
    %40 = arith.mulf %39, %0 : vector<72x512xf32>
    %41 = arith.truncf %40 : vector<72x512xf32> to vector<72x512xbf16>
    %cst_26 = arith.constant dense<0.000000e+00> : vector<8x512xf32>
    %42 = tpu.matmul %28, %41, %cst_26 {dimension_numbers = #tpu.dot_dimension_numbers<[1], [0], [0], [1], [0, 0, 1, 1], [], []>} : vector<8x72xbf16>, vector<72x512xbf16>, vector<8x512xf32> -> vector<8x512xf32>
    %43 = vector.broadcast %30 : vector<8x1xf32> to vector<8x512xf32>
    %44 = arith.addf %42, %43 : vector<8x512xf32>
    %45 = arith.addf %6, %44 : vector<8x512xf32>
    %c1 = arith.constant 1 : index
    %c0_27 = arith.constant 0 : index
    %c0_28 = arith.constant 0 : index
    %46 = vector.load %arg2[%c1, %c0_27, %c0_28] : memref<2x8x72xbf16, #tpu.memory_space<vmem>>, vector<1x8x72xbf16>
    %47 = vector.shape_cast %46 : vector<1x8x72xbf16> to vector<8x72xbf16>
    %c1_29 = arith.constant 1 : index
    %c0_30 = arith.constant 0 : index
    %c0_31 = arith.constant 0 : index
    %48 = vector.load %arg3[%c1_29, %c0_30, %c0_31] : memref<2x8x1xf32, #tpu.memory_space<vmem>>, vector<1x8x1xf32>
    %49 = vector.shape_cast %48 : vector<1x8x1xf32> to vector<8x1xf32>
    %c17_i32_32 = arith.constant 17 : i32
    %50 = tpu.dynamic_rotate %45 by %c17_i32_32 dim 1 : vector<8x512xf32>, i32 -> vector<8x512xf32>
    %c16_i32_33 = arith.constant 16 : i32
    %51 = tpu.dynamic_rotate %45 by %c16_i32_33 dim 1 : vector<8x512xf32>, i32 -> vector<8x512xf32>
    %c15_i32_34 = arith.constant 15 : i32
    %52 = tpu.dynamic_rotate %45 by %c15_i32_34 dim 1 : vector<8x512xf32>, i32 -> vector<8x512xf32>
    %c1_i32_35 = arith.constant 1 : i32
    %53 = tpu.dynamic_rotate %45 by %c1_i32_35 dim 1 : vector<8x512xf32>, i32 -> vector<8x512xf32>
    %c511_i32_36 = arith.constant 511 : i32
    %54 = tpu.dynamic_rotate %45 by %c511_i32_36 dim 1 : vector<8x512xf32>, i32 -> vector<8x512xf32>
    %c497_i32_37 = arith.constant 497 : i32
    %55 = tpu.dynamic_rotate %45 by %c497_i32_37 dim 1 : vector<8x512xf32>, i32 -> vector<8x512xf32>
    %c496_i32_38 = arith.constant 496 : i32
    %56 = tpu.dynamic_rotate %45 by %c496_i32_38 dim 1 : vector<8x512xf32>, i32 -> vector<8x512xf32>
    %c495_i32_39 = arith.constant 495 : i32
    %57 = tpu.dynamic_rotate %45 by %c495_i32_39 dim 1 : vector<8x512xf32>, i32 -> vector<8x512xf32>
    %58 = tpu.concatenate %50, %51, %52, %53, %45, %54, %55, %56, %57 in 0 : vector<8x512xf32>, vector<8x512xf32>, vector<8x512xf32>, vector<8x512xf32>, vector<8x512xf32>, vector<8x512xf32>, vector<8x512xf32>, vector<8x512xf32>, vector<8x512xf32> -> vector<72x512xf32>
    %59 = arith.mulf %58, %0 : vector<72x512xf32>
    %60 = arith.truncf %59 : vector<72x512xf32> to vector<72x512xbf16>
    %cst_40 = arith.constant dense<0.000000e+00> : vector<8x512xf32>
    %61 = tpu.matmul %47, %60, %cst_40 {dimension_numbers = #tpu.dot_dimension_numbers<[1], [0], [0], [1], [0, 0, 1, 1], [], []>} : vector<8x72xbf16>, vector<72x512xbf16>, vector<8x512xf32> -> vector<8x512xf32>
    %62 = vector.broadcast %49 : vector<8x1xf32> to vector<8x512xf32>
    %63 = arith.addf %61, %62 : vector<8x512xf32>
    %cst_41 = arith.constant 0.000000e+00 : f32
    %64 = vector.broadcast %cst_41 : f32 to vector<8x512xf32>
    %65 = arith.maximumf %63, %64 : vector<8x512xf32>
    %c1_42 = arith.constant 1 : index
    %c0_43 = arith.constant 0 : index
    %c0_44 = arith.constant 0 : index
    %66 = vector.load %arg4[%c1_42, %c0_43, %c0_44] : memref<2x8x72xbf16, #tpu.memory_space<vmem>>, vector<1x8x72xbf16>
    %67 = vector.shape_cast %66 : vector<1x8x72xbf16> to vector<8x72xbf16>
    %c1_45 = arith.constant 1 : index
    %c0_46 = arith.constant 0 : index
    %c0_47 = arith.constant 0 : index
    %68 = vector.load %arg5[%c1_45, %c0_46, %c0_47] : memref<2x8x1xf32, #tpu.memory_space<vmem>>, vector<1x8x1xf32>
    %69 = vector.shape_cast %68 : vector<1x8x1xf32> to vector<8x1xf32>
    %c17_i32_48 = arith.constant 17 : i32
    %70 = tpu.dynamic_rotate %65 by %c17_i32_48 dim 1 : vector<8x512xf32>, i32 -> vector<8x512xf32>
    %c16_i32_49 = arith.constant 16 : i32
    %71 = tpu.dynamic_rotate %65 by %c16_i32_49 dim 1 : vector<8x512xf32>, i32 -> vector<8x512xf32>
    %c15_i32_50 = arith.constant 15 : i32
    %72 = tpu.dynamic_rotate %65 by %c15_i32_50 dim 1 : vector<8x512xf32>, i32 -> vector<8x512xf32>
    %c1_i32_51 = arith.constant 1 : i32
    %73 = tpu.dynamic_rotate %65 by %c1_i32_51 dim 1 : vector<8x512xf32>, i32 -> vector<8x512xf32>
    %c511_i32_52 = arith.constant 511 : i32
    %74 = tpu.dynamic_rotate %65 by %c511_i32_52 dim 1 : vector<8x512xf32>, i32 -> vector<8x512xf32>
    %c497_i32_53 = arith.constant 497 : i32
    %75 = tpu.dynamic_rotate %65 by %c497_i32_53 dim 1 : vector<8x512xf32>, i32 -> vector<8x512xf32>
    %c496_i32_54 = arith.constant 496 : i32
    %76 = tpu.dynamic_rotate %65 by %c496_i32_54 dim 1 : vector<8x512xf32>, i32 -> vector<8x512xf32>
    %c495_i32_55 = arith.constant 495 : i32
    %77 = tpu.dynamic_rotate %65 by %c495_i32_55 dim 1 : vector<8x512xf32>, i32 -> vector<8x512xf32>
    %78 = tpu.concatenate %70, %71, %72, %73, %65, %74, %75, %76, %77 in 0 : vector<8x512xf32>, vector<8x512xf32>, vector<8x512xf32>, vector<8x512xf32>, vector<8x512xf32>, vector<8x512xf32>, vector<8x512xf32>, vector<8x512xf32>, vector<8x512xf32> -> vector<72x512xf32>
    %79 = arith.mulf %78, %0 : vector<72x512xf32>
    %80 = arith.truncf %79 : vector<72x512xf32> to vector<72x512xbf16>
    %cst_56 = arith.constant dense<0.000000e+00> : vector<8x512xf32>
    %81 = tpu.matmul %67, %80, %cst_56 {dimension_numbers = #tpu.dot_dimension_numbers<[1], [0], [0], [1], [0, 0, 1, 1], [], []>} : vector<8x72xbf16>, vector<72x512xbf16>, vector<8x512xf32> -> vector<8x512xf32>
    %82 = vector.broadcast %69 : vector<8x1xf32> to vector<8x512xf32>
    %83 = arith.addf %81, %82 : vector<8x512xf32>
    %84 = arith.addf %45, %83 : vector<8x512xf32>
    %c0_57 = arith.constant 0 : index
    %c0_58 = arith.constant 0 : index
    %85 = vector.load %arg8[%c0_57, %c0_58] : memref<8x512xf32, #tpu.memory_space<vmem>>, vector<8x512xf32>
    tpu.vector_store %arg8[%c0_57, %c0_58], %84 {strides = array<i32>} : memref<8x512xf32, #tpu.memory_space<vmem>>, vector<8x512xf32>,
    return
  }
  func.func @transform_0(%arg0: i32) -> (i32, i32) {
    %c0_i32 = arith.constant 0 : i32
    %c0_i32_0 = arith.constant 0 : i32
    %c0_i32_1 = arith.constant 0 : i32
    return %c0_i32, %c0_i32_0 : i32, i32
  }
  func.func @transform_1(%arg0: i32) -> (i32, i32, i32) {
    %c0_i32 = arith.constant 0 : i32
    %c0_i32_0 = arith.constant 0 : i32
    %c0_i32_1 = arith.constant 0 : i32
    %c0_i32_2 = arith.constant 0 : i32
    return %c0_i32, %c0_i32_0, %c0_i32_1 : i32, i32, i32
  }
  func.func @transform_2(%arg0: i32) -> (i32, i32, i32) {
    %c0_i32 = arith.constant 0 : i32
    %c0_i32_0 = arith.constant 0 : i32
    %c0_i32_1 = arith.constant 0 : i32
    %c0_i32_2 = arith.constant 0 : i32
    return %c0_i32, %c0_i32_0, %c0_i32_1 : i32, i32, i32
  }
  func.func @transform_3(%arg0: i32) -> (i32, i32, i32) {
    %c0_i32 = arith.constant 0 : i32
    %c0_i32_0 = arith.constant 0 : i32
    %c0_i32_1 = arith.constant 0 : i32
    %c0_i32_2 = arith.constant 0 : i32
    return %c0_i32, %c0_i32_0, %c0_i32_1 : i32, i32, i32
  }
  func.func @transform_4(%arg0: i32) -> (i32, i32, i32) {
    %c0_i32 = arith.constant 0 : i32
    %c0_i32_0 = arith.constant 0 : i32
    %c0_i32_1 = arith.constant 0 : i32
    %c0_i32_2 = arith.constant 0 : i32
    return %c0_i32, %c0_i32_0, %c0_i32_1 : i32, i32, i32
  }
  func.func @transform_5(%arg0: i32) -> (i32, i32) {
    %c0_i32 = arith.constant 0 : i32
    %c0_i32_0 = arith.constant 0 : i32
    return %c0_i32, %arg0 : i32, i32
  }
  func.func @transform_6(%arg0: i32) -> (i32, i32) {
    %c0_i32 = arith.constant 0 : i32
    %c0_i32_0 = arith.constant 0 : i32
    return %c0_i32, %arg0 : i32, i32
  }
  func.func @transform_7(%arg0: i32) -> (i32, i32) {
    %c0_i32 = arith.constant 0 : i32
    %c0_i32_0 = arith.constant 0 : i32
    return %c0_i32, %arg0 : i32, i32
  }
}

</mosaic_0001>

<llo_original>
// kernel: _lambda_.3
$region0: #{_lambda_.3}
  #allocation0 [shape = 'u32[]', space=smem, size = 0x4, offset = 0x4, fixed_abs, tag = 'smem constant byte address 0x4 - core index']
  #allocation1 [shape = 'u32[72,128]{1,0:T(1,128)}', space=vmem, size = 0x9000, scoped, tag = 'internal scratch']
  %s0 = inlined_call_operand.vmem [shape: f32[72,512], index: 0, kind: input, shape index: {}]
  %s1 = inlined_call_operand.vmem [shape: bf16[8,72], index: 1, kind: input, shape index: {}]
  %s2 = inlined_call_operand.vmem [shape: f32[8,1], index: 2, kind: input, shape index: {}]
  %s3 = inlined_call_operand.vmem [shape: bf16[2,8,72], index: 3, kind: input, shape index: {}]
  %s4 = inlined_call_operand.vmem [shape: f32[2,8,1], index: 4, kind: input, shape index: {}]
  %s5 = inlined_call_operand.vmem [shape: bf16[2,8,72], index: 5, kind: input, shape index: {}]
  %s6 = inlined_call_operand.vmem [shape: f32[2,8,1], index: 6, kind: input, shape index: {}]
  %s7 = inlined_call_operand.vmem [shape: bf16[2,8,72], index: 7, kind: input, shape index: {}]
  %s8 = inlined_call_operand.vmem [shape: f32[2,8,1], index: 8, kind: input, shape index: {}]
  %s9 = inlined_call_operand.vmem [shape: bf16[2,8,72], index: 9, kind: input, shape index: {}]
  %s10 = inlined_call_operand.vmem [shape: f32[2,8,1], index: 10, kind: input, shape index: {}]
  %s11 = inlined_call_operand.vmem [shape: f32[8,512], index: 11, kind: input, shape index: {}]
  %s12 = inlined_call_operand.vmem [shape: f32[8,512], index: 12, kind: input, shape index: {}]
  %s13 = inlined_call_operand.vmem [shape: f32[8,512], index: 13, kind: output, shape index: {0}]
  %s14 = inlined_call_operand.vmem [shape: f32[8,512], index: 14, kind: output, shape index: {1}]
  %15 = xla_tuple %s13, %s14
  %s16 = sld [smem:[#allocation0]]
  $region70: #{_lambda_.3} parent=0
    _
  %s18 = ssub.s32 1, %s16
  %s19 = scalar_select 0, %s18, %s16
  // Predicated region
  $region2: #{_lambda_.3} parent=0 // pred_check
    _
  $region3: #{_lambda_.3} parent=0 // pred_check_branch
    %21 = sbr.rel (0) target = $region5
  $region4: #{_lambda_.3} parent=0 // pred_region
    _
  $region5: #{_lambda_.3} parent=0 // pred_fallthru
    _
  // Predicated region
  $region6: #{_lambda_.3} parent=0 // pred_check
    _
  $region7: #{_lambda_.3} parent=0 // pred_check_branch
    %23 = sbr.rel (0) target = $region9
  $region8: #{_lambda_.3} parent=0 // pred_region
    _
  $region9: #{_lambda_.3} parent=0 // pred_fallthru
    _
  // Predicated region
  $region10: #{_lambda_.3} parent=0 // pred_check
    _
  $region11: #{_lambda_.3} parent=0 // pred_check_branch
    %25 = sbr.rel (0) target = $region13
  $region12: #{_lambda_.3} parent=0 // pred_region
    _
  $region13: #{_lambda_.3} parent=0 // pred_fallthru
    _
  // Predicated region
  $region14: #{_lambda_.3} parent=0 // pred_check
    _
  $region15: #{_lambda_.3} parent=0 // pred_check_branch
    %27 = sbr.rel (0) target = $region17
  $region16: #{_lambda_.3} parent=0 // pred_region
    _
  $region17: #{_lambda_.3} parent=0 // pred_fallthru
    _
  // Predicated region
  $region18: #{_lambda_.3} parent=0 // pred_check
    _
  $region19: #{_lambda_.3} parent=0 // pred_check_branch
    %29 = sbr.rel (0) target = $region21
  $region20: #{_lambda_.3} parent=0 // pred_region
    _
  $region21: #{_lambda_.3} parent=0 // pred_fallthru
    _
  // Predicated region
  $region22: #{_lambda_.3} parent=0 // pred_check
    _
  $region23: #{_lambda_.3} parent=0 // pred_check_branch
    %31 = sbr.rel (0) target = $region25
  $region24: #{_lambda_.3} parent=0 // pred_region
    _
  $region25: #{_lambda_.3} parent=0 // pred_fallthru
    _
  // Predicated region
  $region26: #{_lambda_.3} parent=0 // pred_check
    _
  $region27: #{_lambda_.3} parent=0 // pred_check_branch
    %33 = sbr.rel (0) target = $region29
  $region28: #{_lambda_.3} parent=0 // pred_region
    _
  $region29: #{_lambda_.3} parent=0 // pred_fallthru
    _
  // Predicated region
  $region30: #{_lambda_.3} parent=0 // pred_check
    _
  $region31: #{_lambda_.3} parent=0 // pred_check_branch
    %35 = sbr.rel (0) target = $region33
  $region32: #{_lambda_.3} parent=0 // pred_region
    _
  $region33: #{_lambda_.3} parent=0 // pred_fallthru
    _
  // Predicated region
  $region34: #{_lambda_.3} parent=0 // pred_check
    _
  $region35: #{_lambda_.3} parent=0 // pred_check_branch
    %37 = sbr.rel (0) target = $region37
  $region36: #{_lambda_.3} parent=0 // pred_region
    _
  $region37: #{_lambda_.3} parent=0 // pred_fallthru
    _
  // Predicated region
  $region38: #{_lambda_.3} parent=0 // pred_check
    _
  $region39: #{_lambda_.3} parent=0 // pred_check_branch
    %39 = sbr.rel (0) target = $region41
  $region40: #{_lambda_.3} parent=0 // pred_region
    _
  $region41: #{_lambda_.3} parent=0 // pred_fallthru
    _
  // Predicated region
  $region42: #{_lambda_.3} parent=0 // pred_check
    _
  $region43: #{_lambda_.3} parent=0 // pred_check_branch
    %41 = sbr.rel (0) target = $region45
  $region44: #{_lambda_.3} parent=0 // pred_region
    _
  $region45: #{_lambda_.3} parent=0 // pred_fallthru
    _
  // Predicated region
  $region46: #{_lambda_.3} parent=0 // pred_check
    _
  $region47: #{_lambda_.3} parent=0 // pred_check_branch
    %43 = sbr.rel (0) target = $region49
  $region48: #{_lambda_.3} parent=0 // pred_region
    _
  $region49: #{_lambda_.3} parent=0 // pred_fallthru
    _
  // Predicated region
  $region50: #{_lambda_.3} parent=0 // pred_check
    _
  $region51: #{_lambda_.3} parent=0 // pred_check_branch
    %45 = sbr.rel (0) target = $region53
  $region52: #{_lambda_.3} parent=0 // pred_region
    _
  $region53: #{_lambda_.3} parent=0 // pred_fallthru
    _
  %v47 = vld [vmem:[%s0] sm:$0xff]
  %v48 = vld [vmem:[%s0 + $0x8] sm:$0xff]
  %v49 = vld [vmem:[%s0 + $0x10] sm:$0xff]
  %v50 = vld [vmem:[%s0 + $0x18] sm:$0xff]
  %v51 = vld [vmem:[%s0 + $0x20] sm:$0xff]
  %v52 = vld [vmem:[%s0 + $0x28] sm:$0xff]
  %v53 = vld [vmem:[%s0 + $0x30] sm:$0xff]
  %v54 = vld [vmem:[%s0 + $0x38] sm:$0xff]
  %v55 = vld [vmem:[%s0 + $0x40] sm:$0xff]
  %v56 = vld [vmem:[%s0 + $0x48] sm:$0xff]
  %v57 = vld [vmem:[%s0 + $0x50] sm:$0xff]
  %v58 = vld [vmem:[%s0 + $0x58] sm:$0xff]
  %v59 = vld [vmem:[%s0 + $0x60] sm:$0xff]
  %v60 = vld [vmem:[%s0 + $0x68] sm:$0xff]
  %v61 = vld [vmem:[%s0 + $0x70] sm:$0xff]
  %v62 = vld [vmem:[%s0 + $0x78] sm:$0xff]
  %v63 = vld [vmem:[%s0 + $0x80] sm:$0xff]
  %v64 = vld [vmem:[%s0 + $0x88] sm:$0xff]
  %v65 = vld [vmem:[%s0 + $0x90] sm:$0xff]
  %v66 = vld [vmem:[%s0 + $0x98] sm:$0xff]
  %v67 = vld [vmem:[%s0 + $0xa0] sm:$0xff]
  %v68 = vld [vmem:[%s0 + $0xa8] sm:$0xff]
  %v69 = vld [vmem:[%s0 + $0xb0] sm:$0xff]
  %v70 = vld [vmem:[%s0 + $0xb8] sm:$0xff]
  %v71 = vld [vmem:[%s0 + $0xc0] sm:$0xff]
  %v72 = vld [vmem:[%s0 + $0xc8] sm:$0xff]
  %v73 = vld [vmem:[%s0 + $0xd0] sm:$0xff]
  %v74 = vld [vmem:[%s0 + $0xd8] sm:$0xff]
  %v75 = vld [vmem:[%s0 + $0xe0] sm:$0xff]
  %v76 = vld [vmem:[%s0 + $0xe8] sm:$0xff]
  %v77 = vld [vmem:[%s0 + $0xf0] sm:$0xff]
  %v78 = vld [vmem:[%s0 + $0xf8] sm:$0xff]
  %v79 = vld [vmem:[%s0 + $0x100] sm:$0xff]
  %v80 = vld [vmem:[%s0 + $0x108] sm:$0xff]
  %v81 = vld [vmem:[%s0 + $0x110] sm:$0xff]
  %v82 = vld [vmem:[%s0 + $0x118] sm:$0xff]
  %v83 = vld [vmem:[%s11] sm:$0xff]
  %v84 = vld [vmem:[%s11 + $0x8] sm:$0xff]
  %v85 = vld [vmem:[%s11 + $0x10] sm:$0xff]
  %v86 = vld [vmem:[%s11 + $0x18] sm:$0xff]
  %v87 = vld [vmem:[%s1] sm:$0xf]
  %v88 = vld [vmem:[%s2] sm:$0xff]
  %89 = vrot.lane.b32.xlu0 %v83, 17
  %v90 = vpop.permute.xlu0 %89
  %91 = vrot.lane.b32.xlu0 %v84, 17
  %v92 = vpop.permute.xlu0 %91
  %93 = vrot.lane.b32.xlu0 %v85, 17
  %v94 = vpop.permute.xlu0 %93
  %95 = vrot.lane.b32.xlu0 %v86, 17
  %v96 = vpop.permute.xlu0 %95
  %v97 = vlaneseq
  %v98 = vand.u32 %v97, 127
  %vm99 = vcmp.lt.s32.totalorder %v98, 17
  %v100 = vsel %vm99, %v94, %v96
  %v101 = vsel %vm99, %v92, %v94
  %v102 = vsel %vm99, %v90, %v92
  %v103 = vsel %vm99, %v96, %v90
  %104 = vrot.lane.b32.xlu0 %v83, 16
  %v105 = vpop.permute.xlu0 %104
  %106 = vrot.lane.b32.xlu0 %v84, 16
  %v107 = vpop.permute.xlu0 %106
  %108 = vrot.lane.b32.xlu0 %v85, 16
  %v109 = vpop.permute.xlu0 %108
  %110 = vrot.lane.b32.xlu0 %v86, 16
  %v111 = vpop.permute.xlu0 %110
  %vm112 = vcmp.lt.s32.totalorder %v98, 16
  %v113 = vsel %vm112, %v109, %v111
  %v114 = vsel %vm112, %v107, %v109
  %v115 = vsel %vm112, %v105, %v107
  %v116 = vsel %vm112, %v111, %v105
  %117 = vrot.lane.b32.xlu0 %v83, 15
  %v118 = vpop.permute.xlu0 %117
  %119 = vrot.lane.b32.xlu0 %v84, 15
  %v120 = vpop.permute.xlu0 %119
  %121 = vrot.lane.b32.xlu0 %v85, 15
  %v122 = vpop.permute.xlu0 %121
  %123 = vrot.lane.b32.xlu0 %v86, 15
  %v124 = vpop.permute.xlu0 %123
  %vm125 = vcmp.lt.s32.totalorder %v98, 15
  %v126 = vsel %vm125, %v122, %v124
  %v127 = vsel %vm125, %v120, %v122
  %v128 = vsel %vm125, %v118, %v120
  %v129 = vsel %vm125, %v124, %v118
  %130 = vrot.lane.b32.xlu0 %v83, 1
  %v131 = vpop.permute.xlu0 %130
  %132 = vrot.lane.b32.xlu0 %v84, 1
  %v133 = vpop.permute.xlu0 %132
  %134 = vrot.lane.b32.xlu0 %v85, 1
  %v135 = vpop.permute.xlu0 %134
  %136 = vrot.lane.b32.xlu0 %v86, 1
  %v137 = vpop.permute.xlu0 %136
  %vm138 = vcmp.lt.s32.totalorder %v98, 1
  %v139 = vsel %vm138, %v135, %v137
  %v140 = vsel %vm138, %v133, %v135
  %v141 = vsel %vm138, %v131, %v133
  %v142 = vsel %vm138, %v137, %v131
  %143 = vrot.lane.b32.xlu0 %v83, 127
  %v144 = vpop.permute.xlu0 %143
  %145 = vrot.lane.b32.xlu0 %v84, 127
  %v146 = vpop.permute.xlu0 %145
  %147 = vrot.lane.b32.xlu0 %v85, 127
  %v148 = vpop.permute.xlu0 %147
  %149 = vrot.lane.b32.xlu0 %v86, 127
  %v150 = vpop.permute.xlu0 %149
  %vm151 = vcmp.lt.s32.totalorder %v98, 127
  %v152 = vsel %vm151, %v148, %v150
  %v153 = vsel %vm151, %v146, %v148
  %v154 = vsel %vm151, %v144, %v146
  %v155 = vsel %vm151, %v150, %v144
  %156 = vrot.lane.b32.xlu0 %v83, 113
  %v157 = vpop.permute.xlu0 %156
  %158 = vrot.lane.b32.xlu0 %v84, 113
  %v159 = vpop.permute.xlu0 %158
  %160 = vrot.lane.b32.xlu0 %v85, 113
  %v161 = vpop.permute.xlu0 %160
  %162 = vrot.lane.b32.xlu0 %v86, 113
  %v163 = vpop.permute.xlu0 %162
  %vm164 = vcmp.lt.s32.totalorder %v98, 113
  %v165 = vsel %vm164, %v161, %v163
  %v166 = vsel %vm164, %v159, %v161
  %v167 = vsel %vm164, %v157, %v159
  %v168 = vsel %vm164, %v163, %v157
  %169 = vrot.lane.b32.xlu0 %v83, 112
  %v170 = vpop.permute.xlu0 %169
  %171 = vrot.lane.b32.xlu0 %v84, 112
  %v172 = vpop.permute.xlu0 %171
  %173 = vrot.lane.b32.xlu0 %v85, 112
  %v174 = vpop.permute.xlu0 %173
  %175 = vrot.lane.b32.xlu0 %v86, 112
  %v176 = vpop.permute.xlu0 %175
  %vm177 = vcmp.lt.s32.totalorder %v98, 112
  %v178 = vsel %vm177, %v174, %v176
  %v179 = vsel %vm177, %v172, %v174
  %v180 = vsel %vm177, %v170, %v172
  %v181 = vsel %vm177, %v176, %v170
  %182 = vrot.lane.b32.xlu0 %v83, 111
  %v183 = vpop.permute.xlu0 %182
  %184 = vrot.lane.b32.xlu0 %v84, 111
  %v185 = vpop.permute.xlu0 %184
  %186 = vrot.lane.b32.xlu0 %v85, 111
  %v187 = vpop.permute.xlu0 %186
  %188 = vrot.lane.b32.xlu0 %v86, 111
  %v189 = vpop.permute.xlu0 %188
  %vm190 = vcmp.lt.s32.totalorder %v98, 111
  %v191 = vsel %vm190, %v187, %v189
  %v192 = vsel %vm190, %v185, %v187
  %v193 = vsel %vm190, %v183, %v185
  %v194 = vsel %vm190, %v189, %v183
  %v195 = vmul.f32 %v103, %v47
  %v196 = vmul.f32 %v102, %v48
  %v197 = vmul.f32 %v101, %v49
  %v198 = vmul.f32 %v100, %v50
  %v199 = vmul.f32 %v116, %v51
  %v200 = vmul.f32 %v115, %v52
  %v201 = vmul.f32 %v114, %v53
  %v202 = vmul.f32 %v113, %v54
  %v203 = vmul.f32 %v129, %v55
  %v204 = vmul.f32 %v128, %v56
  %v205 = vmul.f32 %v127, %v57
  %v206 = vmul.f32 %v126, %v58
  %v207 = vmul.f32 %v142, %v59
  %v208 = vmul.f32 %v141, %v60
  %v209 = vmul.f32 %v140, %v61
  %v210 = vmul.f32 %v139, %v62
  %v211 = vmul.f32 %v83, %v63
  %v212 = vmul.f32 %v84, %v64
  %v213 = vmul.f32 %v85, %v65
  %v214 = vmul.f32 %v86, %v66
  %v215 = vmul.f32 %v154, %v67
  %v216 = vmul.f32 %v153, %v68
  %v217 = vmul.f32 %v152, %v69
  %v218 = vmul.f32 %v155, %v70
  %v219 = vmul.f32 %v167, %v71
  %v220 = vmul.f32 %v166, %v72
  %v221 = vmul.f32 %v165, %v73
  %v222 = vmul.f32 %v168, %v74
  %v223 = vmul.f32 %v180, %v75
  %v224 = vmul.f32 %v179, %v76
  %v225 = vmul.f32 %v178, %v77
  %v226 = vmul.f32 %v181, %v78
  %v227 = vmul.f32 %v193, %v79
  %v228 = vmul.f32 %v192, %v80
  %v229 = vmul.f32 %v191, %v81
  %v230 = vmul.f32 %v194, %v82
  %v231 = vpack.c.bf16 %v199, %v195
  %v232 = vpack.c.bf16 %v200, %v196
  %v233 = vpack.c.bf16 %v201, %v197
  %v234 = vpack.c.bf16 %v202, %v198
  %v235 = vpack.c.bf16 %v207, %v203
  %v236 = vpack.c.bf16 %v208, %v204
  %v237 = vpack.c.bf16 %v209, %v205
  %v238 = vpack.c.bf16 %v210, %v206
  %v239 = vpack.c.bf16 %v215, %v211
  %v240 = vpack.c.bf16 %v216, %v212
  %v241 = vpack.c.bf16 %v217, %v213
  %v242 = vpack.c.bf16 %v218, %v214
  %v243 = vpack.c.bf16 %v223, %v219
  %v244 = vpack.c.bf16 %v224, %v220
  %v245 = vpack.c.bf16 %v225, %v221
  %v246 = vpack.c.bf16 %v226, %v222
  %v247 = vpack.c.bf16 %v227, %v227
  %v248 = vpack.c.bf16 %v228, %v228
  %v249 = vpack.c.bf16 %v229, %v229
  %v250 = vpack.c.bf16 %v230, %v230
  %252 = vset.pattern.permute.xlu0 0
  %253 = vperm.xlu0 %252, %v88
  %v254 = vpop.permute.xlu0 %253
  %vm256 = vcmask 588800
  %v258 = vsel %vm256, %v87, 0
  %vm260 = vcmask 1043456
  %v262 = vsel %vm260, %v247, 0
  %v265 = vsel %vm260, %v248, 0
  %v268 = vsel %vm260, %v249, 0
  %v271 = vsel %vm260, %v250, 0
  %273 = vmatpush.bf16.msra.mxu0 0
  %274 = vmatpush.bf16.msra.mxu0 0
  %275 = vmatpush.bf16.msra.mxu0 0
  %276 = vmatpush.bf16.msra.mxu0 %v262
  %277 = vmatpush.bf16.msra.mxu0 %v243
  %278 = vmatpush.bf16.msra.mxu0 %v239
  %279 = vmatpush.bf16.msra.mxu0 %v235
  %280 = vmatpush.bf16.msra.mxu0 %v231
  %281 = vmatmul.bf16.gmra.mxu0 %v258
  %v282 = vpop.f32.mrf.mxu0
  %v283 = vadd.f32 %v254, %v282
  %v284 = vpop.f32.mrf.mxu0
  %285 = vdwg.mxu0
  %286 = vmatpush.bf16.msra.mxu0 0
  %287 = vmatpush.bf16.msra.mxu0 0
  %288 = vmatpush.bf16.msra.mxu0 0
  %289 = vmatpush.bf16.msra.mxu0 %v265
  %290 = vmatpush.bf16.msra.mxu0 %v244
  %291 = vmatpush.bf16.msra.mxu0 %v240
  %292 = vmatpush.bf16.msra.mxu0 %v236
  %293 = vmatpush.bf16.msra.mxu0 %v232
  %294 = vmatmul.bf16.gmra.mxu0 %v258
  %v295 = vpop.f32.mrf.mxu0
  %v296 = vadd.f32 %v254, %v295
  %v297 = vpop.f32.mrf.mxu0
  %298 = vdwg.mxu0
  %299 = vmatpush.bf16.msra.mxu0 0
  %300 = vmatpush.bf16.msra.mxu0 0
  %301 = vmatpush.bf16.msra.mxu0 0
  %302 = vmatpush.bf16.msra.mxu0 %v268
  %303 = vmatpush.bf16.msra.mxu0 %v245
  %304 = vmatpush.bf16.msra.mxu0 %v241
  %305 = vmatpush.bf16.msra.mxu0 %v237
  %306 = vmatpush.bf16.msra.mxu0 %v233
  %307 = vmatmul.bf16.gmra.mxu0 %v258
  %v308 = vpop.f32.mrf.mxu0
  %v309 = vadd.f32 %v254, %v308
  %v310 = vpop.f32.mrf.mxu0
  %311 = vdwg.mxu0
  %312 = vmatpush.bf16.msra.mxu0 0
  %313 = vmatpush.bf16.msra.mxu0 0
  %314 = vmatpush.bf16.msra.mxu0 0
  %315 = vmatpush.bf16.msra.mxu0 %v271
  %316 = vmatpush.bf16.msra.mxu0 %v246
  %317 = vmatpush.bf16.msra.mxu0 %v242
  %318 = vmatpush.bf16.msra.mxu0 %v238
  %319 = vmatpush.bf16.msra.mxu0 %v234
  %320 = vmatmul.bf16.gmra.mxu0 %v258
  %v321 = vpop.f32.mrf.mxu0
  %v322 = vadd.f32 %v254, %v321
  %v323 = vpop.f32.mrf.mxu0
  %324 = vdwg.mxu0
  %v325 = vadd.f32 %v283, %v83
  %v326 = vadd.f32 %v296, %v84
  %v327 = vadd.f32 %v309, %v85
  %v328 = vadd.f32 %v322, %v86
  %v329 = vld [vmem:[%s3] sm:$0xf]
  %v330 = vld [vmem:[%s4] sm:$0xff]
  %331 = vrot.lane.b32.xlu0 %v325, 17
  %v332 = vpop.permute.xlu0 %331
  %333 = vrot.lane.b32.xlu0 %v326, 17
  %v334 = vpop.permute.xlu0 %333
  %335 = vrot.lane.b32.xlu0 %v327, 17
  %v336 = vpop.permute.xlu0 %335
  %337 = vrot.lane.b32.xlu0 %v328, 17
  %v338 = vpop.permute.xlu0 %337
  %v339 = vsel %vm99, %v336, %v338
  %v340 = vsel %vm99, %v334, %v336
  %v341 = vsel %vm99, %v332, %v334
  %v342 = vsel %vm99, %v338, %v332
  %343 = vrot.lane.b32.xlu0 %v325, 16
  %v344 = vpop.permute.xlu0 %343
  %345 = vrot.lane.b32.xlu0 %v326, 16
  %v346 = vpop.permute.xlu0 %345
  %347 = vrot.lane.b32.xlu0 %v327, 16
  %v348 = vpop.permute.xlu0 %347
  %349 = vrot.lane.b32.xlu0 %v328, 16
  %v350 = vpop.permute.xlu0 %349
  %v351 = vsel %vm112, %v348, %v350
  %v352 = vsel %vm112, %v346, %v348
  %v353 = vsel %vm112, %v344, %v346
  %v354 = vsel %vm112, %v350, %v344
  %355 = vrot.lane.b32.xlu0 %v325, 15
  %v356 = vpop.permute.xlu0 %355
  %357 = vrot.lane.b32.xlu0 %v326, 15
  %v358 = vpop.permute.xlu0 %357
  %359 = vrot.lane.b32.xlu0 %v327, 15
  %v360 = vpop.permute.xlu0 %359
  %361 = vrot.lane.b32.xlu0 %v328, 15
  %v362 = vpop.permute.xlu0 %361
  %v363 = vsel %vm125, %v360, %v362
  %v364 = vsel %vm125, %v358, %v360
  %v365 = vsel %vm125, %v356, %v358
  %v366 = vsel %vm125, %v362, %v356
  %367 = vrot.lane.b32.xlu0 %v325, 1
  %v368 = vpop.permute.xlu0 %367
  %369 = vrot.lane.b32.xlu0 %v326, 1
  %v370 = vpop.permute.xlu0 %369
  %371 = vrot.lane.b32.xlu0 %v327, 1
  %v372 = vpop.permute.xlu0 %371
  %373 = vrot.lane.b32.xlu0 %v328, 1
  %v374 = vpop.permute.xlu0 %373
  %v375 = vsel %vm138, %v372, %v374
  %v376 = vsel %vm138, %v370, %v372
  %v377 = vsel %vm138, %v368, %v370
  %v378 = vsel %vm138, %v374, %v368
  %379 = vrot.lane.b32.xlu0 %v325, 127
  %v380 = vpop.permute.xlu0 %379
  %381 = vrot.lane.b32.xlu0 %v326, 127
  %v382 = vpop.permute.xlu0 %381
  %383 = vrot.lane.b32.xlu0 %v327, 127
  %v384 = vpop.permute.xlu0 %383
  %385 = vrot.lane.b32.xlu0 %v328, 127
  %v386 = vpop.permute.xlu0 %385
  %v387 = vsel %vm151, %v384, %v386
  %v388 = vsel %vm151, %v382, %v384
  %v389 = vsel %vm151, %v380, %v382
  %v390 = vsel %vm151, %v386, %v380
  %391 = vrot.lane.b32.xlu0 %v325, 113
  %v392 = vpop.permute.xlu0 %391
  %393 = vrot.lane.b32.xlu0 %v326, 113
  %v394 = vpop.permute.xlu0 %393
  %395 = vrot.lane.b32.xlu0 %v327, 113
  %v396 = vpop.permute.xlu0 %395
  %397 = vrot.lane.b32.xlu0 %v328, 113
  %v398 = vpop.permute.xlu0 %397
  %v399 = vsel %vm164, %v396, %v398
  %v400 = vsel %vm164, %v394, %v396
  %v401 = vsel %vm164, %v392, %v394
  %v402 = vsel %vm164, %v398, %v392
  %403 = vrot.lane.b32.xlu0 %v325, 112
  %v404 = vpop.permute.xlu0 %403
  %405 = vrot.lane.b32.xlu0 %v326, 112
  %v406 = vpop.permute.xlu0 %405
  %407 = vrot.lane.b32.xlu0 %v327, 112
  %v408 = vpop.permute.xlu0 %407
  %409 = vrot.lane.b32.xlu0 %v328, 112
  %v410 = vpop.permute.xlu0 %409
  %v411 = vsel %vm177, %v408, %v410
  %v412 = vsel %vm177, %v406, %v408
  %v413 = vsel %vm177, %v404, %v406
  %v414 = vsel %vm177, %v410, %v404
  %415 = vrot.lane.b32.xlu0 %v325, 111
  %v416 = vpop.permute.xlu0 %415
  %417 = vrot.lane.b32.xlu0 %v326, 111
  %v418 = vpop.permute.xlu0 %417
  %419 = vrot.lane.b32.xlu0 %v327, 111
  %v420 = vpop.permute.xlu0 %419
  %421 = vrot.lane.b32.xlu0 %v328, 111
  %v422 = vpop.permute.xlu0 %421
  %v423 = vsel %vm190, %v420, %v422
  %v424 = vsel %vm190, %v418, %v420
  %v425 = vsel %vm190, %v416, %v418
  %v426 = vsel %vm190, %v422, %v416
  %v427 = vmul.f32 %v342, %v47
  %v428 = vmul.f32 %v341, %v48
  %v429 = vmul.f32 %v340, %v49
  %v430 = vmul.f32 %v339, %v50
  %v431 = vmul.f32 %v354, %v51
  %v432 = vmul.f32 %v353, %v52
  %v433 = vmul.f32 %v352, %v53
  %v434 = vmul.f32 %v351, %v54
  %v435 = vmul.f32 %v366, %v55
  %v436 = vmul.f32 %v365, %v56
  %v437 = vmul.f32 %v364, %v57
  %v438 = vmul.f32 %v363, %v58
  %v439 = vmul.f32 %v378, %v59
  %v440 = vmul.f32 %v377, %v60
  %v441 = vmul.f32 %v376, %v61
  %v442 = vmul.f32 %v375, %v62
  %v443 = vmul.f32 %v325, %v63
  %v444 = vmul.f32 %v326, %v64
  %v445 = vmul.f32 %v327, %v65
  %v446 = vmul.f32 %v328, %v66
  %v447 = vmul.f32 %v389, %v67
  %v448 = vmul.f32 %v388, %v68
  %v449 = vmul.f32 %v387, %v69
  %v450 = vmul.f32 %v390, %v70
  %v451 = vmul.f32 %v401, %v71
  %v452 = vmul.f32 %v400, %v72
  %v453 = vmul.f32 %v399, %v73
  %v454 = vmul.f32 %v402, %v74
  %v455 = vmul.f32 %v413, %v75
  %v456 = vmul.f32 %v412, %v76
  %v457 = vmul.f32 %v411, %v77
  %v458 = vmul.f32 %v414, %v78
  %v459 = vmul.f32 %v425, %v79
  %v460 = vmul.f32 %v424, %v80
  %v461 = vmul.f32 %v423, %v81
  %v462 = vmul.f32 %v426, %v82
  %v463 = vpack.c.bf16 %v431, %v427
  %v464 = vpack.c.bf16 %v432, %v428
  %v465 = vpack.c.bf16 %v433, %v429
  %v466 = vpack.c.bf16 %v434, %v430
  %v467 = vpack.c.bf16 %v439, %v435
  %v468 = vpack.c.bf16 %v440, %v436
  %v469 = vpack.c.bf16 %v441, %v437
  %v470 = vpack.c.bf16 %v442, %v438
  %v471 = vpack.c.bf16 %v447, %v443
  %v472 = vpack.c.bf16 %v448, %v444
  %v473 = vpack.c.bf16 %v449, %v445
  %v474 = vpack.c.bf16 %v450, %v446
  %v475 = vpack.c.bf16 %v455, %v451
  %v476 = vpack.c.bf16 %v456, %v452
  %v477 = vpack.c.bf16 %v457, %v453
  %v478 = vpack.c.bf16 %v458, %v454
  %v479 = vpack.c.bf16 %v459, %v459
  %v480 = vpack.c.bf16 %v460, %v460
  %v481 = vpack.c.bf16 %v461, %v461
  %v482 = vpack.c.bf16 %v462, %v462
  %484 = vset.pattern.permute.xlu0 0
  %485 = vperm.xlu0 %484, %v330
  %v486 = vpop.permute.xlu0 %485
  %v489 = vsel %vm256, %v329, 0
  %v492 = vsel %vm260, %v479, 0
  %v495 = vsel %vm260, %v480, 0
  %v498 = vsel %vm260, %v481, 0
  %v501 = vsel %vm260, %v482, 0
  %503 = vmatpush.bf16.msra.mxu0 0
  %504 = vmatpush.bf16.msra.mxu0 0
  %505 = vmatpush.bf16.msra.mxu0 0
  %506 = vmatpush.bf16.msra.mxu0 %v492
  %507 = vmatpush.bf16.msra.mxu0 %v475
  %508 = vmatpush.bf16.msra.mxu0 %v471
  %509 = vmatpush.bf16.msra.mxu0 %v467
  %510 = vmatpush.bf16.msra.mxu0 %v463
  %511 = vmatmul.bf16.gmra.mxu0 %v489
  %v512 = vpop.f32.mrf.mxu0
  %v513 = vadd.f32 %v486, %v512
  %v514 = vpop.f32.mrf.mxu0
  %515 = vdwg.mxu0
  %516 = vmatpush.bf16.msra.mxu0 0
  %517 = vmatpush.bf16.msra.mxu0 0
  %518 = vmatpush.bf16.msra.mxu0 0
  %519 = vmatpush.bf16.msra.mxu0 %v495
  %520 = vmatpush.bf16.msra.mxu0 %v476
  %521 = vmatpush.bf16.msra.mxu0 %v472
  %522 = vmatpush.bf16.msra.mxu0 %v468
  %523 = vmatpush.bf16.msra.mxu0 %v464
  %524 = vmatmul.bf16.gmra.mxu0 %v489
  %v525 = vpop.f32.mrf.mxu0
  %v526 = vadd.f32 %v486, %v525
  %v527 = vpop.f32.mrf.mxu0
  %528 = vdwg.mxu0
  %529 = vmatpush.bf16.msra.mxu0 0
  %530 = vmatpush.bf16.msra.mxu0 0
  %531 = vmatpush.bf16.msra.mxu0 0
  %532 = vmatpush.bf16.msra.mxu0 %v498
  %533 = vmatpush.bf16.msra.mxu0 %v477
  %534 = vmatpush.bf16.msra.mxu0 %v473
  %535 = vmatpush.bf16.msra.mxu0 %v469
  %536 = vmatpush.bf16.msra.mxu0 %v465
  %537 = vmatmul.bf16.gmra.mxu0 %v489
  %v538 = vpop.f32.mrf.mxu0
  %v539 = vadd.f32 %v486, %v538
  %v540 = vpop.f32.mrf.mxu0
  %541 = vdwg.mxu0
  %542 = vmatpush.bf16.msra.mxu0 0
  %543 = vmatpush.bf16.msra.mxu0 0
  %544 = vmatpush.bf16.msra.mxu0 0
  %545 = vmatpush.bf16.msra.mxu0 %v501
  %546 = vmatpush.bf16.msra.mxu0 %v478
  %547 = vmatpush.bf16.msra.mxu0 %v474
  %548 = vmatpush.bf16.msra.mxu0 %v470
  %549 = vmatpush.bf16.msra.mxu0 %v466
  %550 = vmatmul.bf16.gmra.mxu0 %v489
  %v551 = vpop.f32.mrf.mxu0
  %v552 = vadd.f32 %v486, %v551
  %v553 = vpop.f32.mrf.mxu0
  %554 = vdwg.mxu0
  %v555 = vmax.f32 %v513, 0.0
  %v556 = vmax.f32 %v526, 0.0
  %v557 = vmax.f32 %v539, 0.0
  %v558 = vmax.f32 %v552, 0.0
  %v559 = vld [vmem:[%s5] sm:$0xf]
  %v560 = vld [vmem:[%s6] sm:$0xff]
  %561 = vrot.lane.b32.xlu0 %v555, 17
  %v562 = vpop.permute.xlu0 %561
  %563 = vrot.lane.b32.xlu0 %v556, 17
  %v564 = vpop.permute.xlu0 %563
  %565 = vrot.lane.b32.xlu0 %v557, 17
  %v566 = vpop.permute.xlu0 %565
  %567 = vrot.lane.b32.xlu0 %v558, 17
  %v568 = vpop.permute.xlu0 %567
  %v569 = vsel %vm99, %v566, %v568
  %v570 = vsel %vm99, %v564, %v566
  %v571 = vsel %vm99, %v562, %v564
  %v572 = vsel %vm99, %v568, %v562
  %573 = vrot.lane.b32.xlu0 %v555, 16
  %v574 = vpop.permute.xlu0 %573
  %575 = vrot.lane.b32.xlu0 %v556, 16
  %v576 = vpop.permute.xlu0 %575
  %577 = vrot.lane.b32.xlu0 %v557, 16
  %v578 = vpop.permute.xlu0 %577
  %579 = vrot.lane.b32.xlu0 %v558, 16
  %v580 = vpop.permute.xlu0 %579
  %v581 = vsel %vm112, %v578, %v580
  %v582 = vsel %vm112, %v576, %v578
  %v583 = vsel %vm112, %v574, %v576
  %v584 = vsel %vm112, %v580, %v574
  %585 = vrot.lane.b32.xlu0 %v555, 15
  %v586 = vpop.permute.xlu0 %585
  %587 = vrot.lane.b32.xlu0 %v556, 15
  %v588 = vpop.permute.xlu0 %587
  %589 = vrot.lane.b32.xlu0 %v557, 15
  %v590 = vpop.permute.xlu0 %589
  %591 = vrot.lane.b32.xlu0 %v558, 15
  %v592 = vpop.permute.xlu0 %591
  %v593 = vsel %vm125, %v590, %v592
  %v594 = vsel %vm125, %v588, %v590
  %v595 = vsel %vm125, %v586, %v588
  %v596 = vsel %vm125, %v592, %v586
  %597 = vrot.lane.b32.xlu0 %v555, 1
  %v598 = vpop.permute.xlu0 %597
  %599 = vrot.lane.b32.xlu0 %v556, 1
  %v600 = vpop.permute.xlu0 %599
  %601 = vrot.lane.b32.xlu0 %v557, 1
  %v602 = vpop.permute.xlu0 %601
  %603 = vrot.lane.b32.xlu0 %v558, 1
  %v604 = vpop.permute.xlu0 %603
  %v605 = vsel %vm138, %v602, %v604
  %v606 = vsel %vm138, %v600, %v602
  %v607 = vsel %vm138, %v598, %v600
  %v608 = vsel %vm138, %v604, %v598
  %609 = vrot.lane.b32.xlu0 %v555, 127
  %v610 = vpop.permute.xlu0 %609
  %611 = vrot.lane.b32.xlu0 %v556, 127
  %v612 = vpop.permute.xlu0 %611
  %613 = vrot.lane.b32.xlu0 %v557, 127
  %v614 = vpop.permute.xlu0 %613
  %615 = vrot.lane.b32.xlu0 %v558, 127
  %v616 = vpop.permute.xlu0 %615
  %v617 = vsel %vm151, %v614, %v616
  %v618 = vsel %vm151, %v612, %v614
  %v619 = vsel %vm151, %v610, %v612
  %v620 = vsel %vm151, %v616, %v610
  %621 = vrot.lane.b32.xlu0 %v555, 113
  %v622 = vpop.permute.xlu0 %621
  %623 = vrot.lane.b32.xlu0 %v556, 113
  %v624 = vpop.permute.xlu0 %623
  %625 = vrot.lane.b32.xlu0 %v557, 113
  %v626 = vpop.permute.xlu0 %625
  %627 = vrot.lane.b32.xlu0 %v558, 113
  %v628 = vpop.permute.xlu0 %627
  %v629 = vsel %vm164, %v626, %v628
  %v630 = vsel %vm164, %v624, %v626
  %v631 = vsel %vm164, %v622, %v624
  %v632 = vsel %vm164, %v628, %v622
  %633 = vrot.lane.b32.xlu0 %v555, 112
  %v634 = vpop.permute.xlu0 %633
  %635 = vrot.lane.b32.xlu0 %v556, 112
  %v636 = vpop.permute.xlu0 %635
  %637 = vrot.lane.b32.xlu0 %v557, 112
  %v638 = vpop.permute.xlu0 %637
  %639 = vrot.lane.b32.xlu0 %v558, 112
  %v640 = vpop.permute.xlu0 %639
  %v641 = vsel %vm177, %v638, %v640
  %v642 = vsel %vm177, %v636, %v638
  %v643 = vsel %vm177, %v634, %v636
  %v644 = vsel %vm177, %v640, %v634
  %645 = vrot.lane.b32.xlu0 %v555, 111
  %v646 = vpop.permute.xlu0 %645
  %647 = vrot.lane.b32.xlu0 %v556, 111
  %v648 = vpop.permute.xlu0 %647
  %649 = vrot.lane.b32.xlu0 %v557, 111
  %v650 = vpop.permute.xlu0 %649
  %651 = vrot.lane.b32.xlu0 %v558, 111
  %v652 = vpop.permute.xlu0 %651
  %v653 = vsel %vm190, %v650, %v652
  %v654 = vsel %vm190, %v648, %v650
  %v655 = vsel %vm190, %v646, %v648
  %v656 = vsel %vm190, %v652, %v646
  %v657 = vmul.f32 %v572, %v47
  %v658 = vmul.f32 %v571, %v48
  %v659 = vmul.f32 %v570, %v49
  %v660 = vmul.f32 %v569, %v50
  %v661 = vmul.f32 %v584, %v51
  %v662 = vmul.f32 %v583, %v52
  %v663 = vmul.f32 %v582, %v53
  %v664 = vmul.f32 %v581, %v54
  %v665 = vmul.f32 %v596, %v55
  %v666 = vmul.f32 %v595, %v56
  %v667 = vmul.f32 %v594, %v57
  %v668 = vmul.f32 %v593, %v58
  %v669 = vmul.f32 %v608, %v59
  %v670 = vmul.f32 %v607, %v60
  %v671 = vmul.f32 %v606, %v61
  %v672 = vmul.f32 %v605, %v62
  %v673 = vmul.f32 %v555, %v63
  %v674 = vmul.f32 %v556, %v64
  %v675 = vmul.f32 %v557, %v65
  %v676 = vmul.f32 %v558, %v66
  %v677 = vmul.f32 %v619, %v67
  %v678 = vmul.f32 %v618, %v68
  %v679 = vmul.f32 %v617, %v69
  %v680 = vmul.f32 %v620, %v70
  %v681 = vmul.f32 %v631, %v71
  %v682 = vmul.f32 %v630, %v72
  %v683 = vmul.f32 %v629, %v73
  %v684 = vmul.f32 %v632, %v74
  %v685 = vmul.f32 %v643, %v75
  %v686 = vmul.f32 %v642, %v76
  %v687 = vmul.f32 %v641, %v77
  %v688 = vmul.f32 %v644, %v78
  %v689 = vmul.f32 %v655, %v79
  %v690 = vmul.f32 %v654, %v80
  %v691 = vmul.f32 %v653, %v81
  %v692 = vmul.f32 %v656, %v82
  %v693 = vpack.c.bf16 %v661, %v657
  %v694 = vpack.c.bf16 %v662, %v658
  %v695 = vpack.c.bf16 %v663, %v659
  %v696 = vpack.c.bf16 %v664, %v660
  %v697 = vpack.c.bf16 %v669, %v665
  %v698 = vpack.c.bf16 %v670, %v666
  %v699 = vpack.c.bf16 %v671, %v667
  %v700 = vpack.c.bf16 %v672, %v668
  %v701 = vpack.c.bf16 %v677, %v673
  %v702 = vpack.c.bf16 %v678, %v674
  %v703 = vpack.c.bf16 %v679, %v675
  %v704 = vpack.c.bf16 %v680, %v676
  %v705 = vpack.c.bf16 %v685, %v681
  %v706 = vpack.c.bf16 %v686, %v682
  %v707 = vpack.c.bf16 %v687, %v683
  %v708 = vpack.c.bf16 %v688, %v684
  %v709 = vpack.c.bf16 %v689, %v689
  %v710 = vpack.c.bf16 %v690, %v690
  %v711 = vpack.c.bf16 %v691, %v691
  %v712 = vpack.c.bf16 %v692, %v692
  %714 = vset.pattern.permute.xlu0 0
  %715 = vperm.xlu0 %714, %v560
  %v716 = vpop.permute.xlu0 %715
  %v719 = vsel %vm256, %v559, 0
  %v722 = vsel %vm260, %v709, 0
  %v725 = vsel %vm260, %v710, 0
  %v728 = vsel %vm260, %v711, 0
  %v731 = vsel %vm260, %v712, 0
  %733 = vmatpush.bf16.msra.mxu0 0
  %734 = vmatpush.bf16.msra.mxu0 0
  %735 = vmatpush.bf16.msra.mxu0 0
  %736 = vmatpush.bf16.msra.mxu0 %v722
  %737 = vmatpush.bf16.msra.mxu0 %v705
  %738 = vmatpush.bf16.msra.mxu0 %v701
  %739 = vmatpush.bf16.msra.mxu0 %v697
  %740 = vmatpush.bf16.msra.mxu0 %v693
  %741 = vmatmul.bf16.gmra.mxu0 %v719
  %v742 = vpop.f32.mrf.mxu0
  %v743 = vadd.f32 %v716, %v742
  %v744 = vpop.f32.mrf.mxu0
  %745 = vdwg.mxu0
  %746 = vmatpush.bf16.msra.mxu0 0
  %747 = vmatpush.bf16.msra.mxu0 0
  %748 = vmatpush.bf16.msra.mxu0 0
  %749 = vmatpush.bf16.msra.mxu0 %v725
  %750 = vmatpush.bf16.msra.mxu0 %v706
  %751 = vmatpush.bf16.msra.mxu0 %v702
  %752 = vmatpush.bf16.msra.mxu0 %v698
  %753 = vmatpush.bf16.msra.mxu0 %v694
  %754 = vmatmul.bf16.gmra.mxu0 %v719
  %v755 = vpop.f32.mrf.mxu0
  %v756 = vadd.f32 %v716, %v755
  %v757 = vpop.f32.mrf.mxu0
  %758 = vdwg.mxu0
  %759 = vmatpush.bf16.msra.mxu0 0
  %760 = vmatpush.bf16.msra.mxu0 0
  %761 = vmatpush.bf16.msra.mxu0 0
  %762 = vmatpush.bf16.msra.mxu0 %v728
  %763 = vmatpush.bf16.msra.mxu0 %v707
  %764 = vmatpush.bf16.msra.mxu0 %v703
  %765 = vmatpush.bf16.msra.mxu0 %v699
  %766 = vmatpush.bf16.msra.mxu0 %v695
  %767 = vmatmul.bf16.gmra.mxu0 %v719
  %v768 = vpop.f32.mrf.mxu0
  %v769 = vadd.f32 %v716, %v768
  %v770 = vpop.f32.mrf.mxu0
  %771 = vdwg.mxu0
  %772 = vmatpush.bf16.msra.mxu0 0
  %773 = vmatpush.bf16.msra.mxu0 0
  %774 = vmatpush.bf16.msra.mxu0 0
  %775 = vmatpush.bf16.msra.mxu0 %v731
  %776 = vmatpush.bf16.msra.mxu0 %v708
  %777 = vmatpush.bf16.msra.mxu0 %v704
  %778 = vmatpush.bf16.msra.mxu0 %v700
  %779 = vmatpush.bf16.msra.mxu0 %v696
  %780 = vmatmul.bf16.gmra.mxu0 %v719
  %v781 = vpop.f32.mrf.mxu0
  %v782 = vadd.f32 %v716, %v781
  %v783 = vpop.f32.mrf.mxu0
  %784 = vdwg.mxu0
  %v785 = vadd.f32 %v325, %v743
  %v786 = vadd.f32 %v326, %v756
  %v787 = vadd.f32 %v327, %v769
  %v788 = vadd.f32 %v328, %v782
  %s789 = scalar_lea.vmem %s3, 4
  %v790 = vld [vmem:[%s789] sm:$0xf]
  %s791 = scalar_lea.vmem %s4, 8
  %v792 = vld [vmem:[%s791] sm:$0xff]
  %793 = vrot.lane.b32.xlu0 %v785, 17
  %v794 = vpop.permute.xlu0 %793
  %795 = vrot.lane.b32.xlu0 %v786, 17
  %v796 = vpop.permute.xlu0 %795
  %797 = vrot.lane.b32.xlu0 %v787, 17
  %v798 = vpop.permute.xlu0 %797
  %799 = vrot.lane.b32.xlu0 %v788, 17
  %v800 = vpop.permute.xlu0 %799
  %v801 = vsel %vm99, %v798, %v800
  %v802 = vsel %vm99, %v796, %v798
  %v803 = vsel %vm99, %v794, %v796
  %v804 = vsel %vm99, %v800, %v794
  %805 = vrot.lane.b32.xlu0 %v785, 16
  %v806 = vpop.permute.xlu0 %805
  %807 = vrot.lane.b32.xlu0 %v786, 16
  %v808 = vpop.permute.xlu0 %807
  %809 = vrot.lane.b32.xlu0 %v787, 16
  %v810 = vpop.permute.xlu0 %809
  %811 = vrot.lane.b32.xlu0 %v788, 16
  %v812 = vpop.permute.xlu0 %811
  %v813 = vsel %vm112, %v810, %v812
  %v814 = vsel %vm112, %v808, %v810
  %v815 = vsel %vm112, %v806, %v808
  %v816 = vsel %vm112, %v812, %v806
  %817 = vrot.lane.b32.xlu0 %v785, 15
  %v818 = vpop.permute.xlu0 %817
  %819 = vrot.lane.b32.xlu0 %v786, 15
  %v820 = vpop.permute.xlu0 %819
  %821 = vrot.lane.b32.xlu0 %v787, 15
  %v822 = vpop.permute.xlu0 %821
  %823 = vrot.lane.b32.xlu0 %v788, 15
  %v824 = vpop.permute.xlu0 %823
  %v825 = vsel %vm125, %v822, %v824
  %v826 = vsel %vm125, %v820, %v822
  %v827 = vsel %vm125, %v818, %v820
  %v828 = vsel %vm125, %v824, %v818
  %829 = vrot.lane.b32.xlu0 %v785, 1
  %v830 = vpop.permute.xlu0 %829
  %831 = vrot.lane.b32.xlu0 %v786, 1
  %v832 = vpop.permute.xlu0 %831
  %833 = vrot.lane.b32.xlu0 %v787, 1
  %v834 = vpop.permute.xlu0 %833
  %835 = vrot.lane.b32.xlu0 %v788, 1
  %v836 = vpop.permute.xlu0 %835
  %v837 = vsel %vm138, %v834, %v836
  %v838 = vsel %vm138, %v832, %v834
  %v839 = vsel %vm138, %v830, %v832
  %v840 = vsel %vm138, %v836, %v830
  %841 = vrot.lane.b32.xlu0 %v785, 127
  %v842 = vpop.permute.xlu0 %841
  %843 = vrot.lane.b32.xlu0 %v786, 127
  %v844 = vpop.permute.xlu0 %843
  %845 = vrot.lane.b32.xlu0 %v787, 127
  %v846 = vpop.permute.xlu0 %845
  %847 = vrot.lane.b32.xlu0 %v788, 127
  %v848 = vpop.permute.xlu0 %847
  %v849 = vsel %vm151, %v846, %v848
  %v850 = vsel %vm151, %v844, %v846
  %v851 = vsel %vm151, %v842, %v844
  %v852 = vsel %vm151, %v848, %v842
  %853 = vrot.lane.b32.xlu0 %v785, 113
  %v854 = vpop.permute.xlu0 %853
  %855 = vrot.lane.b32.xlu0 %v786, 113
  %v856 = vpop.permute.xlu0 %855
  %857 = vrot.lane.b32.xlu0 %v787, 113
  %v858 = vpop.permute.xlu0 %857
  %859 = vrot.lane.b32.xlu0 %v788, 113
  %v860 = vpop.permute.xlu0 %859
  %v861 = vsel %vm164, %v858, %v860
  %v862 = vsel %vm164, %v856, %v858
  %v863 = vsel %vm164, %v854, %v856
  %v864 = vsel %vm164, %v860, %v854
  %865 = vrot.lane.b32.xlu0 %v785, 112
  %v866 = vpop.permute.xlu0 %865
  %867 = vrot.lane.b32.xlu0 %v786, 112
  %v868 = vpop.permute.xlu0 %867
  %869 = vrot.lane.b32.xlu0 %v787, 112
  %v870 = vpop.permute.xlu0 %869
  %871 = vrot.lane.b32.xlu0 %v788, 112
  %v872 = vpop.permute.xlu0 %871
  %v873 = vsel %vm177, %v870, %v872
  %v874 = vsel %vm177, %v868, %v870
  %v875 = vsel %vm177, %v866, %v868
  %v876 = vsel %vm177, %v872, %v866
  %877 = vrot.lane.b32.xlu0 %v785, 111
  %v878 = vpop.permute.xlu0 %877
  %879 = vrot.lane.b32.xlu0 %v786, 111
  %v880 = vpop.permute.xlu0 %879
  %881 = vrot.lane.b32.xlu0 %v787, 111
  %v882 = vpop.permute.xlu0 %881
  %883 = vrot.lane.b32.xlu0 %v788, 111
  %v884 = vpop.permute.xlu0 %883
  %v885 = vsel %vm190, %v882, %v884
  %v886 = vsel %vm190, %v880, %v882
  %v887 = vsel %vm190, %v878, %v880
  %v888 = vsel %vm190, %v884, %v878
  %v889 = vmul.f32 %v804, %v47
  %v890 = vmul.f32 %v803, %v48
  %v891 = vmul.f32 %v802, %v49
  %v892 = vmul.f32 %v801, %v50
  %v893 = vmul.f32 %v816, %v51
  %v894 = vmul.f32 %v815, %v52
  %v895 = vmul.f32 %v814, %v53
  %v896 = vmul.f32 %v813, %v54
  %v897 = vmul.f32 %v828, %v55
  %v898 = vmul.f32 %v827, %v56
  %v899 = vmul.f32 %v826, %v57
  %v900 = vmul.f32 %v825, %v58
  %v901 = vmul.f32 %v840, %v59
  %v902 = vmul.f32 %v839, %v60
  %v903 = vmul.f32 %v838, %v61
  %v904 = vmul.f32 %v837, %v62
  %v905 = vmul.f32 %v785, %v63
  %v906 = vmul.f32 %v786, %v64
  %v907 = vmul.f32 %v787, %v65
  %v908 = vmul.f32 %v788, %v66
  %v909 = vmul.f32 %v851, %v67
  %v910 = vmul.f32 %v850, %v68
  %v911 = vmul.f32 %v849, %v69
  %v912 = vmul.f32 %v852, %v70
  %v913 = vmul.f32 %v863, %v71
  %v914 = vmul.f32 %v862, %v72
  %v915 = vmul.f32 %v861, %v73
  %v916 = vmul.f32 %v864, %v74
  %v917 = vmul.f32 %v875, %v75
  %v918 = vmul.f32 %v874, %v76
  %v919 = vmul.f32 %v873, %v77
  %v920 = vmul.f32 %v876, %v78
  %v921 = vmul.f32 %v887, %v79
  %v922 = vmul.f32 %v886, %v80
  %v923 = vmul.f32 %v885, %v81
  %v924 = vmul.f32 %v888, %v82
  %v925 = vpack.c.bf16 %v893, %v889
  %v926 = vpack.c.bf16 %v894, %v890
  %v927 = vpack.c.bf16 %v895, %v891
  %v928 = vpack.c.bf16 %v896, %v892
  %v929 = vpack.c.bf16 %v901, %v897
  %v930 = vpack.c.bf16 %v902, %v898
  %v931 = vpack.c.bf16 %v903, %v899
  %v932 = vpack.c.bf16 %v904, %v900
  %v933 = vpack.c.bf16 %v909, %v905
  %v934 = vpack.c.bf16 %v910, %v906
  %v935 = vpack.c.bf16 %v911, %v907
  %v936 = vpack.c.bf16 %v912, %v908
  %v937 = vpack.c.bf16 %v917, %v913
  %v938 = vpack.c.bf16 %v918, %v914
  %v939 = vpack.c.bf16 %v919, %v915
  %v940 = vpack.c.bf16 %v920, %v916
  %v941 = vpack.c.bf16 %v921, %v921
  %v942 = vpack.c.bf16 %v922, %v922
  %v943 = vpack.c.bf16 %v923, %v923
  %v944 = vpack.c.bf16 %v924, %v924
  %946 = vset.pattern.permute.xlu0 0
  %947 = vperm.xlu0 %946, %v792
  %v948 = vpop.permute.xlu0 %947
  %v951 = vsel %vm256, %v790, 0
  %v954 = vsel %vm260, %v941, 0
  %v957 = vsel %vm260, %v942, 0
  %v960 = vsel %vm260, %v943, 0
  %v963 = vsel %vm260, %v944, 0
  %965 = vmatpush.bf16.msra.mxu0 0
  %966 = vmatpush.bf16.msra.mxu0 0
  %967 = vmatpush.bf16.msra.mxu0 0
  %968 = vmatpush.bf16.msra.mxu0 %v954
  %969 = vmatpush.bf16.msra.mxu0 %v937
  %970 = vmatpush.bf16.msra.mxu0 %v933
  %971 = vmatpush.bf16.msra.mxu0 %v929
  %972 = vmatpush.bf16.msra.mxu0 %v925
  %973 = vmatmul.bf16.gmra.mxu0 %v951
  %v974 = vpop.f32.mrf.mxu0
  %v975 = vadd.f32 %v948, %v974
  %v976 = vpop.f32.mrf.mxu0
  %977 = vdwg.mxu0
  %978 = vmatpush.bf16.msra.mxu0 0
  %979 = vmatpush.bf16.msra.mxu0 0
  %980 = vmatpush.bf16.msra.mxu0 0
  %981 = vmatpush.bf16.msra.mxu0 %v957
  %982 = vmatpush.bf16.msra.mxu0 %v938
  %983 = vmatpush.bf16.msra.mxu0 %v934
  %984 = vmatpush.bf16.msra.mxu0 %v930
  %985 = vmatpush.bf16.msra.mxu0 %v926
  %986 = vmatmul.bf16.gmra.mxu0 %v951
  %v987 = vpop.f32.mrf.mxu0
  %v988 = vadd.f32 %v948, %v987
  %v989 = vpop.f32.mrf.mxu0
  %990 = vdwg.mxu0
  %991 = vmatpush.bf16.msra.mxu0 0
  %992 = vmatpush.bf16.msra.mxu0 0
  %993 = vmatpush.bf16.msra.mxu0 0
  %994 = vmatpush.bf16.msra.mxu0 %v960
  %995 = vmatpush.bf16.msra.mxu0 %v939
  %996 = vmatpush.bf16.msra.mxu0 %v935
  %997 = vmatpush.bf16.msra.mxu0 %v931
  %998 = vmatpush.bf16.msra.mxu0 %v927
  %999 = vmatmul.bf16.gmra.mxu0 %v951
  %v1000 = vpop.f32.mrf.mxu0
  %v1001 = vadd.f32 %v948, %v1000
  %v1002 = vpop.f32.mrf.mxu0
  %1003 = vdwg.mxu0
  %1004 = vmatpush.bf16.msra.mxu0 0
  %1005 = vmatpush.bf16.msra.mxu0 0
  %1006 = vmatpush.bf16.msra.mxu0 0
  %1007 = vmatpush.bf16.msra.mxu0 %v963
  %1008 = vmatpush.bf16.msra.mxu0 %v940
  %1009 = vmatpush.bf16.msra.mxu0 %v936
  %1010 = vmatpush.bf16.msra.mxu0 %v932
  %1011 = vmatpush.bf16.msra.mxu0 %v928
  %1012 = vmatmul.bf16.gmra.mxu0 %v951
  %v1013 = vpop.f32.mrf.mxu0
  %v1014 = vadd.f32 %v948, %v1013
  %v1015 = vpop.f32.mrf.mxu0
  %1016 = vdwg.mxu0
  %v1017 = vmax.f32 %v975, 0.0
  %v1018 = vmax.f32 %v988, 0.0
  %v1019 = vmax.f32 %v1001, 0.0
  %v1020 = vmax.f32 %v1014, 0.0
  %s1021 = scalar_lea.vmem %s5, 4
  %v1022 = vld [vmem:[%s1021] sm:$0xf]
  %s1023 = scalar_lea.vmem %s6, 8
  %v1024 = vld [vmem:[%s1023] sm:$0xff]
  %1025 = vrot.lane.b32.xlu0 %v1017, 17
  %v1026 = vpop.permute.xlu0 %1025
  %1027 = vrot.lane.b32.xlu0 %v1018, 17
  %v1028 = vpop.permute.xlu0 %1027
  %1029 = vrot.lane.b32.xlu0 %v1019, 17
  %v1030 = vpop.permute.xlu0 %1029
  %1031 = vrot.lane.b32.xlu0 %v1020, 17
  %v1032 = vpop.permute.xlu0 %1031
  %v1033 = vsel %vm99, %v1030, %v1032
  %v1034 = vsel %vm99, %v1028, %v1030
  %v1035 = vsel %vm99, %v1026, %v1028
  %v1036 = vsel %vm99, %v1032, %v1026
  %1037 = vrot.lane.b32.xlu0 %v1017, 16
  %v1038 = vpop.permute.xlu0 %1037
  %1039 = vrot.lane.b32.xlu0 %v1018, 16
  %v1040 = vpop.permute.xlu0 %1039
  %1041 = vrot.lane.b32.xlu0 %v1019, 16
  %v1042 = vpop.permute.xlu0 %1041
  %1043 = vrot.lane.b32.xlu0 %v1020, 16
  %v1044 = vpop.permute.xlu0 %1043
  %v1045 = vsel %vm112, %v1042, %v1044
  %v1046 = vsel %vm112, %v1040, %v1042
  %v1047 = vsel %vm112, %v1038, %v1040
  %v1048 = vsel %vm112, %v1044, %v1038
  %1049 = vrot.lane.b32.xlu0 %v1017, 15
  %v1050 = vpop.permute.xlu0 %1049
  %1051 = vrot.lane.b32.xlu0 %v1018, 15
  %v1052 = vpop.permute.xlu0 %1051
  %1053 = vrot.lane.b32.xlu0 %v1019, 15
  %v1054 = vpop.permute.xlu0 %1053
  %1055 = vrot.lane.b32.xlu0 %v1020, 15
  %v1056 = vpop.permute.xlu0 %1055
  %v1057 = vsel %vm125, %v1054, %v1056
  %v1058 = vsel %vm125, %v1052, %v1054
  %v1059 = vsel %vm125, %v1050, %v1052
  %v1060 = vsel %vm125, %v1056, %v1050
  %1061 = vrot.lane.b32.xlu0 %v1017, 1
  %v1062 = vpop.permute.xlu0 %1061
  %1063 = vrot.lane.b32.xlu0 %v1018, 1
  %v1064 = vpop.permute.xlu0 %1063
  %1065 = vrot.lane.b32.xlu0 %v1019, 1
  %v1066 = vpop.permute.xlu0 %1065
  %1067 = vrot.lane.b32.xlu0 %v1020, 1
  %v1068 = vpop.permute.xlu0 %1067
  %v1069 = vsel %vm138, %v1066, %v1068
  %v1070 = vsel %vm138, %v1064, %v1066
  %v1071 = vsel %vm138, %v1062, %v1064
  %v1072 = vsel %vm138, %v1068, %v1062
  %1073 = vrot.lane.b32.xlu0 %v1017, 127
  %v1074 = vpop.permute.xlu0 %1073
  %1075 = vrot.lane.b32.xlu0 %v1018, 127
  %v1076 = vpop.permute.xlu0 %1075
  %1077 = vrot.lane.b32.xlu0 %v1019, 127
  %v1078 = vpop.permute.xlu0 %1077
  %1079 = vrot.lane.b32.xlu0 %v1020, 127
  %v1080 = vpop.permute.xlu0 %1079
  %v1081 = vsel %vm151, %v1078, %v1080
  %v1082 = vsel %vm151, %v1076, %v1078
  %v1083 = vsel %vm151, %v1074, %v1076
  %v1084 = vsel %vm151, %v1080, %v1074
  %1085 = vrot.lane.b32.xlu0 %v1017, 113
  %v1086 = vpop.permute.xlu0 %1085
  %1087 = vrot.lane.b32.xlu0 %v1018, 113
  %v1088 = vpop.permute.xlu0 %1087
  %1089 = vrot.lane.b32.xlu0 %v1019, 113
  %v1090 = vpop.permute.xlu0 %1089
  %1091 = vrot.lane.b32.xlu0 %v1020, 113
  %v1092 = vpop.permute.xlu0 %1091
  %v1093 = vsel %vm164, %v1090, %v1092
  %v1094 = vsel %vm164, %v1088, %v1090
  %v1095 = vsel %vm164, %v1086, %v1088
  %v1096 = vsel %vm164, %v1092, %v1086
  %1097 = vrot.lane.b32.xlu0 %v1017, 112
  %v1098 = vpop.permute.xlu0 %1097
  %1099 = vrot.lane.b32.xlu0 %v1018, 112
  %v1100 = vpop.permute.xlu0 %1099
  %1101 = vrot.lane.b32.xlu0 %v1019, 112
  %v1102 = vpop.permute.xlu0 %1101
  %1103 = vrot.lane.b32.xlu0 %v1020, 112
  %v1104 = vpop.permute.xlu0 %1103
  %v1105 = vsel %vm177, %v1102, %v1104
  %v1106 = vsel %vm177, %v1100, %v1102
  %v1107 = vsel %vm177, %v1098, %v1100
  %v1108 = vsel %vm177, %v1104, %v1098
  %1109 = vrot.lane.b32.xlu0 %v1017, 111
  %v1110 = vpop.permute.xlu0 %1109
  %1111 = vrot.lane.b32.xlu0 %v1018, 111
  %v1112 = vpop.permute.xlu0 %1111
  %1113 = vrot.lane.b32.xlu0 %v1019, 111
  %v1114 = vpop.permute.xlu0 %1113
  %1115 = vrot.lane.b32.xlu0 %v1020, 111
  %v1116 = vpop.permute.xlu0 %1115
  %v1117 = vsel %vm190, %v1114, %v1116
  %v1118 = vsel %vm190, %v1112, %v1114
  %v1119 = vsel %vm190, %v1110, %v1112
  %v1120 = vsel %vm190, %v1116, %v1110
  %v1121 = vmul.f32 %v1036, %v47
  %v1122 = vmul.f32 %v1035, %v48
  %v1123 = vmul.f32 %v1034, %v49
  %v1124 = vmul.f32 %v1033, %v50
  %v1125 = vmul.f32 %v1048, %v51
  %v1126 = vmul.f32 %v1047, %v52
  %v1127 = vmul.f32 %v1046, %v53
  %v1128 = vmul.f32 %v1045, %v54
  %v1129 = vmul.f32 %v1060, %v55
  %v1130 = vmul.f32 %v1059, %v56
  %v1131 = vmul.f32 %v1058, %v57
  %v1132 = vmul.f32 %v1057, %v58
  %v1133 = vmul.f32 %v1072, %v59
  %v1134 = vmul.f32 %v1071, %v60
  %v1135 = vmul.f32 %v1070, %v61
  %v1136 = vmul.f32 %v1069, %v62
  %v1137 = vmul.f32 %v1017, %v63
  %v1138 = vmul.f32 %v1018, %v64
  %v1139 = vmul.f32 %v1019, %v65
  %v1140 = vmul.f32 %v1020, %v66
  %v1141 = vmul.f32 %v1083, %v67
  %v1142 = vmul.f32 %v1082, %v68
  %v1143 = vmul.f32 %v1081, %v69
  %v1144 = vmul.f32 %v1084, %v70
  %v1145 = vmul.f32 %v1095, %v71
  %v1146 = vmul.f32 %v1094, %v72
  %v1147 = vmul.f32 %v1093, %v73
  %v1148 = vmul.f32 %v1096, %v74
  %v1149 = vmul.f32 %v1107, %v75
  %v1150 = vmul.f32 %v1106, %v76
  %v1151 = vmul.f32 %v1105, %v77
  %v1152 = vmul.f32 %v1108, %v78
  %v1153 = vmul.f32 %v1119, %v79
  %v1154 = vmul.f32 %v1118, %v80
  %v1155 = vmul.f32 %v1117, %v81
  %v1156 = vmul.f32 %v1120, %v82
  %v1157 = vpack.c.bf16 %v1125, %v1121
  %v1158 = vpack.c.bf16 %v1126, %v1122
  %v1159 = vpack.c.bf16 %v1127, %v1123
  %v1160 = vpack.c.bf16 %v1128, %v1124
  %v1161 = vpack.c.bf16 %v1133, %v1129
  %v1162 = vpack.c.bf16 %v1134, %v1130
  %v1163 = vpack.c.bf16 %v1135, %v1131
  %v1164 = vpack.c.bf16 %v1136, %v1132
  %v1165 = vpack.c.bf16 %v1141, %v1137
  %v1166 = vpack.c.bf16 %v1142, %v1138
  %v1167 = vpack.c.bf16 %v1143, %v1139
  %v1168 = vpack.c.bf16 %v1144, %v1140
  %v1169 = vpack.c.bf16 %v1149, %v1145
  %v1170 = vpack.c.bf16 %v1150, %v1146
  %v1171 = vpack.c.bf16 %v1151, %v1147
  %v1172 = vpack.c.bf16 %v1152, %v1148
  %v1173 = vpack.c.bf16 %v1153, %v1153
  %v1174 = vpack.c.bf16 %v1154, %v1154
  %v1175 = vpack.c.bf16 %v1155, %v1155
  %v1176 = vpack.c.bf16 %v1156, %v1156
  %1178 = vset.pattern.permute.xlu0 0
  %1179 = vperm.xlu0 %1178, %v1024
  %v1180 = vpop.permute.xlu0 %1179
  %v1183 = vsel %vm256, %v1022, 0
  %v1186 = vsel %vm260, %v1173, 0
  %v1189 = vsel %vm260, %v1174, 0
  %v1192 = vsel %vm260, %v1175, 0
  %v1195 = vsel %vm260, %v1176, 0
  %1197 = vmatpush.bf16.msra.mxu0 0
  %1198 = vmatpush.bf16.msra.mxu0 0
  %1199 = vmatpush.bf16.msra.mxu0 0
  %1200 = vmatpush.bf16.msra.mxu0 %v1186
  %1201 = vmatpush.bf16.msra.mxu0 %v1169
  %1202 = vmatpush.bf16.msra.mxu0 %v1165
  %1203 = vmatpush.bf16.msra.mxu0 %v1161
  %1204 = vmatpush.bf16.msra.mxu0 %v1157
  %1205 = vmatmul.bf16.gmra.mxu0 %v1183
  %v1206 = vpop.f32.mrf.mxu0
  %v1207 = vadd.f32 %v1180, %v1206
  %v1208 = vpop.f32.mrf.mxu0
  %1209 = vdwg.mxu0
  %1210 = vmatpush.bf16.msra.mxu0 0
  %1211 = vmatpush.bf16.msra.mxu0 0
  %1212 = vmatpush.bf16.msra.mxu0 0
  %1213 = vmatpush.bf16.msra.mxu0 %v1189
  %1214 = vmatpush.bf16.msra.mxu0 %v1170
  %1215 = vmatpush.bf16.msra.mxu0 %v1166
  %1216 = vmatpush.bf16.msra.mxu0 %v1162
  %1217 = vmatpush.bf16.msra.mxu0 %v1158
  %1218 = vmatmul.bf16.gmra.mxu0 %v1183
  %v1219 = vpop.f32.mrf.mxu0
  %v1220 = vadd.f32 %v1180, %v1219
  %v1221 = vpop.f32.mrf.mxu0
  %1222 = vdwg.mxu0
  %1223 = vmatpush.bf16.msra.mxu0 0
  %1224 = vmatpush.bf16.msra.mxu0 0
  %1225 = vmatpush.bf16.msra.mxu0 0
  %1226 = vmatpush.bf16.msra.mxu0 %v1192
  %1227 = vmatpush.bf16.msra.mxu0 %v1171
  %1228 = vmatpush.bf16.msra.mxu0 %v1167
  %1229 = vmatpush.bf16.msra.mxu0 %v1163
  %1230 = vmatpush.bf16.msra.mxu0 %v1159
  %1231 = vmatmul.bf16.gmra.mxu0 %v1183
  %v1232 = vpop.f32.mrf.mxu0
  %v1233 = vadd.f32 %v1180, %v1232
  %v1234 = vpop.f32.mrf.mxu0
  %1235 = vdwg.mxu0
  %1236 = vmatpush.bf16.msra.mxu0 0
  %1237 = vmatpush.bf16.msra.mxu0 0
  %1238 = vmatpush.bf16.msra.mxu0 0
  %1239 = vmatpush.bf16.msra.mxu0 %v1195
  %1240 = vmatpush.bf16.msra.mxu0 %v1172
  %1241 = vmatpush.bf16.msra.mxu0 %v1168
  %1242 = vmatpush.bf16.msra.mxu0 %v1164
  %1243 = vmatpush.bf16.msra.mxu0 %v1160
  %1244 = vmatmul.bf16.gmra.mxu0 %v1183
  %v1245 = vpop.f32.mrf.mxu0
  %v1246 = vadd.f32 %v1180, %v1245
  %v1247 = vpop.f32.mrf.mxu0
  %1248 = vdwg.mxu0
  %v1249 = vadd.f32 %v785, %v1207
  %v1250 = vadd.f32 %v786, %v1220
  %v1251 = vadd.f32 %v787, %v1233
  %v1252 = vadd.f32 %v788, %v1246
  %1253 = vst [vmem:[%s13] sm:$0xff] %v1249
  %1254 = vst [vmem:[%s13 + $0x8] sm:$0xff] %v1250
  %1255 = vst [vmem:[%s13 + $0x10] sm:$0xff] %v1251
  %1256 = vst [vmem:[%s13 + $0x18] sm:$0xff] %v1252
  %v1257 = vld [vmem:[%s12] sm:$0xff]
  %v1258 = vld [vmem:[%s12 + $0x8] sm:$0xff]
  %v1259 = vld [vmem:[%s12 + $0x10] sm:$0xff]
  %v1260 = vld [vmem:[%s12 + $0x18] sm:$0xff]
  %v1261 = vld [vmem:[%s7] sm:$0xf]
  %v1262 = vld [vmem:[%s8] sm:$0xff]
  %1263 = vrot.lane.b32.xlu0 %v1257, 17
  %v1264 = vpop.permute.xlu0 %1263
  %1265 = vrot.lane.b32.xlu0 %v1258, 17
  %v1266 = vpop.permute.xlu0 %1265
  %1267 = vrot.lane.b32.xlu0 %v1259, 17
  %v1268 = vpop.permute.xlu0 %1267
  %1269 = vrot.lane.b32.xlu0 %v1260, 17
  %v1270 = vpop.permute.xlu0 %1269
  %v1271 = vsel %vm99, %v1268, %v1270
  %v1272 = vsel %vm99, %v1266, %v1268
  %v1273 = vsel %vm99, %v1264, %v1266
  %v1274 = vsel %vm99, %v1270, %v1264
  %1275 = vrot.lane.b32.xlu0 %v1257, 16
  %v1276 = vpop.permute.xlu0 %1275
  %1277 = vrot.lane.b32.xlu0 %v1258, 16
  %v1278 = vpop.permute.xlu0 %1277
  %1279 = vrot.lane.b32.xlu0 %v1259, 16
  %v1280 = vpop.permute.xlu0 %1279
  %1281 = vrot.lane.b32.xlu0 %v1260, 16
  %v1282 = vpop.permute.xlu0 %1281
  %v1283 = vsel %vm112, %v1280, %v1282
  %v1284 = vsel %vm112, %v1278, %v1280
  %v1285 = vsel %vm112, %v1276, %v1278
  %v1286 = vsel %vm112, %v1282, %v1276
  %1287 = vrot.lane.b32.xlu0 %v1257, 15
  %v1288 = vpop.permute.xlu0 %1287
  %1289 = vrot.lane.b32.xlu0 %v1258, 15
  %v1290 = vpop.permute.xlu0 %1289
  %1291 = vrot.lane.b32.xlu0 %v1259, 15
  %v1292 = vpop.permute.xlu0 %1291
  %1293 = vrot.lane.b32.xlu0 %v1260, 15
  %v1294 = vpop.permute.xlu0 %1293
  %v1295 = vsel %vm125, %v1292, %v1294
  %v1296 = vsel %vm125, %v1290, %v1292
  %v1297 = vsel %vm125, %v1288, %v1290
  %v1298 = vsel %vm125, %v1294, %v1288
  %1299 = vrot.lane.b32.xlu0 %v1257, 1
  %v1300 = vpop.permute.xlu0 %1299
  %1301 = vrot.lane.b32.xlu0 %v1258, 1
  %v1302 = vpop.permute.xlu0 %1301
  %1303 = vrot.lane.b32.xlu0 %v1259, 1
  %v1304 = vpop.permute.xlu0 %1303
  %1305 = vrot.lane.b32.xlu0 %v1260, 1
  %v1306 = vpop.permute.xlu0 %1305
  %v1307 = vsel %vm138, %v1304, %v1306
  %v1308 = vsel %vm138, %v1302, %v1304
  %v1309 = vsel %vm138, %v1300, %v1302
  %v1310 = vsel %vm138, %v1306, %v1300
  %1311 = vrot.lane.b32.xlu0 %v1257, 127
  %v1312 = vpop.permute.xlu0 %1311
  %1313 = vrot.lane.b32.xlu0 %v1258, 127
  %v1314 = vpop.permute.xlu0 %1313
  %1315 = vrot.lane.b32.xlu0 %v1259, 127
  %v1316 = vpop.permute.xlu0 %1315
  %1317 = vrot.lane.b32.xlu0 %v1260, 127
  %v1318 = vpop.permute.xlu0 %1317
  %v1319 = vsel %vm151, %v1316, %v1318
  %v1320 = vsel %vm151, %v1314, %v1316
  %v1321 = vsel %vm151, %v1312, %v1314
  %v1322 = vsel %vm151, %v1318, %v1312
  %1323 = vrot.lane.b32.xlu0 %v1257, 113
  %v1324 = vpop.permute.xlu0 %1323
  %1325 = vrot.lane.b32.xlu0 %v1258, 113
  %v1326 = vpop.permute.xlu0 %1325
  %1327 = vrot.lane.b32.xlu0 %v1259, 113
  %v1328 = vpop.permute.xlu0 %1327
  %1329 = vrot.lane.b32.xlu0 %v1260, 113
  %v1330 = vpop.permute.xlu0 %1329
  %v1331 = vsel %vm164, %v1328, %v1330
  %v1332 = vsel %vm164, %v1326, %v1328
  %v1333 = vsel %vm164, %v1324, %v1326
  %v1334 = vsel %vm164, %v1330, %v1324
  %1335 = vrot.lane.b32.xlu0 %v1257, 112
  %v1336 = vpop.permute.xlu0 %1335
  %1337 = vrot.lane.b32.xlu0 %v1258, 112
  %v1338 = vpop.permute.xlu0 %1337
  %1339 = vrot.lane.b32.xlu0 %v1259, 112
  %v1340 = vpop.permute.xlu0 %1339
  %1341 = vrot.lane.b32.xlu0 %v1260, 112
  %v1342 = vpop.permute.xlu0 %1341
  %v1343 = vsel %vm177, %v1340, %v1342
  %v1344 = vsel %vm177, %v1338, %v1340
  %v1345 = vsel %vm177, %v1336, %v1338
  %v1346 = vsel %vm177, %v1342, %v1336
  %1347 = vrot.lane.b32.xlu0 %v1257, 111
  %v1348 = vpop.permute.xlu0 %1347
  %1349 = vrot.lane.b32.xlu0 %v1258, 111
  %v1350 = vpop.permute.xlu0 %1349
  %1351 = vrot.lane.b32.xlu0 %v1259, 111
  %v1352 = vpop.permute.xlu0 %1351
  %1353 = vrot.lane.b32.xlu0 %v1260, 111
  %v1354 = vpop.permute.xlu0 %1353
  %v1355 = vsel %vm190, %v1352, %v1354
  %v1356 = vsel %vm190, %v1350, %v1352
  %v1357 = vsel %vm190, %v1348, %v1350
  %v1358 = vsel %vm190, %v1354, %v1348
  %v1359 = vmul.f32 %v1274, %v47
  %v1360 = vmul.f32 %v1273, %v48
  %v1361 = vmul.f32 %v1272, %v49
  %v1362 = vmul.f32 %v1271, %v50
  %v1363 = vmul.f32 %v1286, %v51
  %v1364 = vmul.f32 %v1285, %v52
  %v1365 = vmul.f32 %v1284, %v53
  %v1366 = vmul.f32 %v1283, %v54
  %v1367 = vmul.f32 %v1298, %v55
  %v1368 = vmul.f32 %v1297, %v56
  %v1369 = vmul.f32 %v1296, %v57
  %v1370 = vmul.f32 %v1295, %v58
  %v1371 = vmul.f32 %v1310, %v59
  %v1372 = vmul.f32 %v1309, %v60
  %v1373 = vmul.f32 %v1308, %v61
  %v1374 = vmul.f32 %v1307, %v62
  %v1375 = vmul.f32 %v1257, %v63
  %v1376 = vmul.f32 %v1258, %v64
  %v1377 = vmul.f32 %v1259, %v65
  %v1378 = vmul.f32 %v1260, %v66
  %v1379 = vmul.f32 %v1321, %v67
  %v1380 = vmul.f32 %v1320, %v68
  %v1381 = vmul.f32 %v1319, %v69
  %v1382 = vmul.f32 %v1322, %v70
  %v1383 = vmul.f32 %v1333, %v71
  %v1384 = vmul.f32 %v1332, %v72
  %v1385 = vmul.f32 %v1331, %v73
  %v1386 = vmul.f32 %v1334, %v74
  %v1387 = vmul.f32 %v1345, %v75
  %v1388 = vmul.f32 %v1344, %v76
  %v1389 = vmul.f32 %v1343, %v77
  %v1390 = vmul.f32 %v1346, %v78
  %v1391 = vmul.f32 %v1357, %v79
  %v1392 = vmul.f32 %v1356, %v80
  %v1393 = vmul.f32 %v1355, %v81
  %v1394 = vmul.f32 %v1358, %v82
  %v1395 = vpack.c.bf16 %v1363, %v1359
  %v1396 = vpack.c.bf16 %v1364, %v1360
  %v1397 = vpack.c.bf16 %v1365, %v1361
  %v1398 = vpack.c.bf16 %v1366, %v1362
  %v1399 = vpack.c.bf16 %v1371, %v1367
  %v1400 = vpack.c.bf16 %v1372, %v1368
  %v1401 = vpack.c.bf16 %v1373, %v1369
  %v1402 = vpack.c.bf16 %v1374, %v1370
  %v1403 = vpack.c.bf16 %v1379, %v1375
  %v1404 = vpack.c.bf16 %v1380, %v1376
  %v1405 = vpack.c.bf16 %v1381, %v1377
  %v1406 = vpack.c.bf16 %v1382, %v1378
  %v1407 = vpack.c.bf16 %v1387, %v1383
  %v1408 = vpack.c.bf16 %v1388, %v1384
  %v1409 = vpack.c.bf16 %v1389, %v1385
  %v1410 = vpack.c.bf16 %v1390, %v1386
  %v1411 = vpack.c.bf16 %v1391, %v1391
  %v1412 = vpack.c.bf16 %v1392, %v1392
  %v1413 = vpack.c.bf16 %v1393, %v1393
  %v1414 = vpack.c.bf16 %v1394, %v1394
  %1416 = vset.pattern.permute.xlu0 0
  %1417 = vperm.xlu0 %1416, %v1262
  %v1418 = vpop.permute.xlu0 %1417
  %v1421 = vsel %vm256, %v1261, 0
  %v1424 = vsel %vm260, %v1411, 0
  %v1427 = vsel %vm260, %v1412, 0
  %v1430 = vsel %vm260, %v1413, 0
  %v1433 = vsel %vm260, %v1414, 0
  %1435 = vmatpush.bf16.msra.mxu0 0
  %1436 = vmatpush.bf16.msra.mxu0 0
  %1437 = vmatpush.bf16.msra.mxu0 0
  %1438 = vmatpush.bf16.msra.mxu0 %v1424
  %1439 = vmatpush.bf16.msra.mxu0 %v1407
  %1440 = vmatpush.bf16.msra.mxu0 %v1403
  %1441 = vmatpush.bf16.msra.mxu0 %v1399
  %1442 = vmatpush.bf16.msra.mxu0 %v1395
  %1443 = vmatmul.bf16.gmra.mxu0 %v1421
  %v1444 = vpop.f32.mrf.mxu0
  %v1445 = vadd.f32 %v1418, %v1444
  %v1446 = vpop.f32.mrf.mxu0
  %1447 = vdwg.mxu0
  %1448 = vmatpush.bf16.msra.mxu0 0
  %1449 = vmatpush.bf16.msra.mxu0 0
  %1450 = vmatpush.bf16.msra.mxu0 0
  %1451 = vmatpush.bf16.msra.mxu0 %v1427
  %1452 = vmatpush.bf16.msra.mxu0 %v1408
  %1453 = vmatpush.bf16.msra.mxu0 %v1404
  %1454 = vmatpush.bf16.msra.mxu0 %v1400
  %1455 = vmatpush.bf16.msra.mxu0 %v1396
  %1456 = vmatmul.bf16.gmra.mxu0 %v1421
  %v1457 = vpop.f32.mrf.mxu0
  %v1458 = vadd.f32 %v1418, %v1457
  %v1459 = vpop.f32.mrf.mxu0
  %1460 = vdwg.mxu0
  %1461 = vmatpush.bf16.msra.mxu0 0
  %1462 = vmatpush.bf16.msra.mxu0 0
  %1463 = vmatpush.bf16.msra.mxu0 0
  %1464 = vmatpush.bf16.msra.mxu0 %v1430
  %1465 = vmatpush.bf16.msra.mxu0 %v1409
  %1466 = vmatpush.bf16.msra.mxu0 %v1405
  %1467 = vmatpush.bf16.msra.mxu0 %v1401
  %1468 = vmatpush.bf16.msra.mxu0 %v1397
  %1469 = vmatmul.bf16.gmra.mxu0 %v1421
  %v1470 = vpop.f32.mrf.mxu0
  %v1471 = vadd.f32 %v1418, %v1470
  %v1472 = vpop.f32.mrf.mxu0
  %1473 = vdwg.mxu0
  %1474 = vmatpush.bf16.msra.mxu0 0
  %1475 = vmatpush.bf16.msra.mxu0 0
  %1476 = vmatpush.bf16.msra.mxu0 0
  %1477 = vmatpush.bf16.msra.mxu0 %v1433
  %1478 = vmatpush.bf16.msra.mxu0 %v1410
  %1479 = vmatpush.bf16.msra.mxu0 %v1406
  %1480 = vmatpush.bf16.msra.mxu0 %v1402
  %1481 = vmatpush.bf16.msra.mxu0 %v1398
  %1482 = vmatmul.bf16.gmra.mxu0 %v1421
  %v1483 = vpop.f32.mrf.mxu0
  %v1484 = vadd.f32 %v1418, %v1483
  %v1485 = vpop.f32.mrf.mxu0
  %1486 = vdwg.mxu0
  %v1487 = vmax.f32 %v1445, 0.0
  %v1488 = vmax.f32 %v1458, 0.0
  %v1489 = vmax.f32 %v1471, 0.0
  %v1490 = vmax.f32 %v1484, 0.0
  %v1491 = vld [vmem:[%s9] sm:$0xf]
  %v1492 = vld [vmem:[%s10] sm:$0xff]
  %1493 = vrot.lane.b32.xlu0 %v1487, 17
  %v1494 = vpop.permute.xlu0 %1493
  %1495 = vrot.lane.b32.xlu0 %v1488, 17
  %v1496 = vpop.permute.xlu0 %1495
  %1497 = vrot.lane.b32.xlu0 %v1489, 17
  %v1498 = vpop.permute.xlu0 %1497
  %1499 = vrot.lane.b32.xlu0 %v1490, 17
  %v1500 = vpop.permute.xlu0 %1499
  %v1501 = vsel %vm99, %v1498, %v1500
  %v1502 = vsel %vm99, %v1496, %v1498
  %v1503 = vsel %vm99, %v1494, %v1496
  %v1504 = vsel %vm99, %v1500, %v1494
  %1505 = vrot.lane.b32.xlu0 %v1487, 16
  %v1506 = vpop.permute.xlu0 %1505
  %1507 = vrot.lane.b32.xlu0 %v1488, 16
  %v1508 = vpop.permute.xlu0 %1507
  %1509 = vrot.lane.b32.xlu0 %v1489, 16
  %v1510 = vpop.permute.xlu0 %1509
  %1511 = vrot.lane.b32.xlu0 %v1490, 16
  %v1512 = vpop.permute.xlu0 %1511
  %v1513 = vsel %vm112, %v1510, %v1512
  %v1514 = vsel %vm112, %v1508, %v1510
  %v1515 = vsel %vm112, %v1506, %v1508
  %v1516 = vsel %vm112, %v1512, %v1506
  %1517 = vrot.lane.b32.xlu0 %v1487, 15
  %v1518 = vpop.permute.xlu0 %1517
  %1519 = vrot.lane.b32.xlu0 %v1488, 15
  %v1520 = vpop.permute.xlu0 %1519
  %1521 = vrot.lane.b32.xlu0 %v1489, 15
  %v1522 = vpop.permute.xlu0 %1521
  %1523 = vrot.lane.b32.xlu0 %v1490, 15
  %v1524 = vpop.permute.xlu0 %1523
  %v1525 = vsel %vm125, %v1522, %v1524
  %v1526 = vsel %vm125, %v1520, %v1522
  %v1527 = vsel %vm125, %v1518, %v1520
  %v1528 = vsel %vm125, %v1524, %v1518
  %1529 = vrot.lane.b32.xlu0 %v1487, 1
  %v1530 = vpop.permute.xlu0 %1529
  %1531 = vrot.lane.b32.xlu0 %v1488, 1
  %v1532 = vpop.permute.xlu0 %1531
  %1533 = vrot.lane.b32.xlu0 %v1489, 1
  %v1534 = vpop.permute.xlu0 %1533
  %1535 = vrot.lane.b32.xlu0 %v1490, 1
  %v1536 = vpop.permute.xlu0 %1535
  %v1537 = vsel %vm138, %v1534, %v1536
  %v1538 = vsel %vm138, %v1532, %v1534
  %v1539 = vsel %vm138, %v1530, %v1532
  %v1540 = vsel %vm138, %v1536, %v1530
  %1541 = vrot.lane.b32.xlu0 %v1487, 127
  %v1542 = vpop.permute.xlu0 %1541
  %1543 = vrot.lane.b32.xlu0 %v1488, 127
  %v1544 = vpop.permute.xlu0 %1543
  %1545 = vrot.lane.b32.xlu0 %v1489, 127
  %v1546 = vpop.permute.xlu0 %1545
  %1547 = vrot.lane.b32.xlu0 %v1490, 127
  %v1548 = vpop.permute.xlu0 %1547
  %v1549 = vsel %vm151, %v1546, %v1548
  %v1550 = vsel %vm151, %v1544, %v1546
  %v1551 = vsel %vm151, %v1542, %v1544
  %v1552 = vsel %vm151, %v1548, %v1542
  %1553 = vrot.lane.b32.xlu0 %v1487, 113
  %v1554 = vpop.permute.xlu0 %1553
  %1555 = vrot.lane.b32.xlu0 %v1488, 113
  %v1556 = vpop.permute.xlu0 %1555
  %1557 = vrot.lane.b32.xlu0 %v1489, 113
  %v1558 = vpop.permute.xlu0 %1557
  %1559 = vrot.lane.b32.xlu0 %v1490, 113
  %v1560 = vpop.permute.xlu0 %1559
  %v1561 = vsel %vm164, %v1558, %v1560
  %v1562 = vsel %vm164, %v1556, %v1558
  %v1563 = vsel %vm164, %v1554, %v1556
  %v1564 = vsel %vm164, %v1560, %v1554
  %1565 = vrot.lane.b32.xlu0 %v1487, 112
  %v1566 = vpop.permute.xlu0 %1565
  %1567 = vrot.lane.b32.xlu0 %v1488, 112
  %v1568 = vpop.permute.xlu0 %1567
  %1569 = vrot.lane.b32.xlu0 %v1489, 112
  %v1570 = vpop.permute.xlu0 %1569
  %1571 = vrot.lane.b32.xlu0 %v1490, 112
  %v1572 = vpop.permute.xlu0 %1571
  %v1573 = vsel %vm177, %v1570, %v1572
  %v1574 = vsel %vm177, %v1568, %v1570
  %v1575 = vsel %vm177, %v1566, %v1568
  %v1576 = vsel %vm177, %v1572, %v1566
  %1577 = vrot.lane.b32.xlu0 %v1487, 111
  %v1578 = vpop.permute.xlu0 %1577
  %1579 = vrot.lane.b32.xlu0 %v1488, 111
  %v1580 = vpop.permute.xlu0 %1579
  %1581 = vrot.lane.b32.xlu0 %v1489, 111
  %v1582 = vpop.permute.xlu0 %1581
  %1583 = vrot.lane.b32.xlu0 %v1490, 111
  %v1584 = vpop.permute.xlu0 %1583
  %v1585 = vsel %vm190, %v1582, %v1584
  %v1586 = vsel %vm190, %v1580, %v1582
  %v1587 = vsel %vm190, %v1578, %v1580
  %v1588 = vsel %vm190, %v1584, %v1578
  %v1589 = vmul.f32 %v1504, %v47
  %v1590 = vmul.f32 %v1503, %v48
  %v1591 = vmul.f32 %v1502, %v49
  %v1592 = vmul.f32 %v1501, %v50
  %v1593 = vmul.f32 %v1516, %v51
  %v1594 = vmul.f32 %v1515, %v52
  %v1595 = vmul.f32 %v1514, %v53
  %v1596 = vmul.f32 %v1513, %v54
  %v1597 = vmul.f32 %v1528, %v55
  %v1598 = vmul.f32 %v1527, %v56
  %v1599 = vmul.f32 %v1526, %v57
  %v1600 = vmul.f32 %v1525, %v58
  %v1601 = vmul.f32 %v1540, %v59
  %v1602 = vmul.f32 %v1539, %v60
  %v1603 = vmul.f32 %v1538, %v61
  %v1604 = vmul.f32 %v1537, %v62
  %v1605 = vmul.f32 %v1487, %v63
  %v1606 = vmul.f32 %v1488, %v64
  %v1607 = vmul.f32 %v1489, %v65
  %v1608 = vmul.f32 %v1490, %v66
  %v1609 = vmul.f32 %v1551, %v67
  %v1610 = vmul.f32 %v1550, %v68
  %v1611 = vmul.f32 %v1549, %v69
  %v1612 = vmul.f32 %v1552, %v70
  %v1613 = vmul.f32 %v1563, %v71
  %v1614 = vmul.f32 %v1562, %v72
  %v1615 = vmul.f32 %v1561, %v73
  %v1616 = vmul.f32 %v1564, %v74
  %v1617 = vmul.f32 %v1575, %v75
  %v1618 = vmul.f32 %v1574, %v76
  %v1619 = vmul.f32 %v1573, %v77
  %v1620 = vmul.f32 %v1576, %v78
  %v1621 = vmul.f32 %v1587, %v79
  %v1622 = vmul.f32 %v1586, %v80
  %v1623 = vmul.f32 %v1585, %v81
  %v1624 = vmul.f32 %v1588, %v82
  %v1625 = vpack.c.bf16 %v1593, %v1589
  %v1626 = vpack.c.bf16 %v1594, %v1590
  %v1627 = vpack.c.bf16 %v1595, %v1591
  %v1628 = vpack.c.bf16 %v1596, %v1592
  %v1629 = vpack.c.bf16 %v1601, %v1597
  %v1630 = vpack.c.bf16 %v1602, %v1598
  %v1631 = vpack.c.bf16 %v1603, %v1599
  %v1632 = vpack.c.bf16 %v1604, %v1600
  %v1633 = vpack.c.bf16 %v1609, %v1605
  %v1634 = vpack.c.bf16 %v1610, %v1606
  %v1635 = vpack.c.bf16 %v1611, %v1607
  %v1636 = vpack.c.bf16 %v1612, %v1608
  %v1637 = vpack.c.bf16 %v1617, %v1613
  %v1638 = vpack.c.bf16 %v1618, %v1614
  %v1639 = vpack.c.bf16 %v1619, %v1615
  %v1640 = vpack.c.bf16 %v1620, %v1616
  %v1641 = vpack.c.bf16 %v1621, %v1621
  %v1642 = vpack.c.bf16 %v1622, %v1622
  %v1643 = vpack.c.bf16 %v1623, %v1623
  %v1644 = vpack.c.bf16 %v1624, %v1624
  %1646 = vset.pattern.permute.xlu0 0
  %1647 = vperm.xlu0 %1646, %v1492
  %v1648 = vpop.permute.xlu0 %1647
  %v1651 = vsel %vm256, %v1491, 0
  %v1654 = vsel %vm260, %v1641, 0
  %v1657 = vsel %vm260, %v1642, 0
  %v1660 = vsel %vm260, %v1643, 0
  %v1663 = vsel %vm260, %v1644, 0
  %1665 = vmatpush.bf16.msra.mxu0 0
  %1666 = vmatpush.bf16.msra.mxu0 0
  %1667 = vmatpush.bf16.msra.mxu0 0
  %1668 = vmatpush.bf16.msra.mxu0 %v1654
  %1669 = vmatpush.bf16.msra.mxu0 %v1637
  %1670 = vmatpush.bf16.msra.mxu0 %v1633
  %1671 = vmatpush.bf16.msra.mxu0 %v1629
  %1672 = vmatpush.bf16.msra.mxu0 %v1625
  %1673 = vmatmul.bf16.gmra.mxu0 %v1651
  %v1674 = vpop.f32.mrf.mxu0
  %v1675 = vadd.f32 %v1648, %v1674
  %v1676 = vpop.f32.mrf.mxu0
  %1677 = vdwg.mxu0
  %1678 = vmatpush.bf16.msra.mxu0 0
  %1679 = vmatpush.bf16.msra.mxu0 0
  %1680 = vmatpush.bf16.msra.mxu0 0
  %1681 = vmatpush.bf16.msra.mxu0 %v1657
  %1682 = vmatpush.bf16.msra.mxu0 %v1638
  %1683 = vmatpush.bf16.msra.mxu0 %v1634
  %1684 = vmatpush.bf16.msra.mxu0 %v1630
  %1685 = vmatpush.bf16.msra.mxu0 %v1626
  %1686 = vmatmul.bf16.gmra.mxu0 %v1651
  %v1687 = vpop.f32.mrf.mxu0
  %v1688 = vadd.f32 %v1648, %v1687
  %v1689 = vpop.f32.mrf.mxu0
  %1690 = vdwg.mxu0
  %1691 = vmatpush.bf16.msra.mxu0 0
  %1692 = vmatpush.bf16.msra.mxu0 0
  %1693 = vmatpush.bf16.msra.mxu0 0
  %1694 = vmatpush.bf16.msra.mxu0 %v1660
  %1695 = vmatpush.bf16.msra.mxu0 %v1639
  %1696 = vmatpush.bf16.msra.mxu0 %v1635
  %1697 = vmatpush.bf16.msra.mxu0 %v1631
  %1698 = vmatpush.bf16.msra.mxu0 %v1627
  %1699 = vmatmul.bf16.gmra.mxu0 %v1651
  %v1700 = vpop.f32.mrf.mxu0
  %v1701 = vadd.f32 %v1648, %v1700
  %v1702 = vpop.f32.mrf.mxu0
  %1703 = vdwg.mxu0
  %1704 = vmatpush.bf16.msra.mxu0 0
  %1705 = vmatpush.bf16.msra.mxu0 0
  %1706 = vmatpush.bf16.msra.mxu0 0
  %1707 = vmatpush.bf16.msra.mxu0 %v1663
  %1708 = vmatpush.bf16.msra.mxu0 %v1640
  %1709 = vmatpush.bf16.msra.mxu0 %v1636
  %1710 = vmatpush.bf16.msra.mxu0 %v1632
  %1711 = vmatpush.bf16.msra.mxu0 %v1628
  %1712 = vmatmul.bf16.gmra.mxu0 %v1651
  %v1713 = vpop.f32.mrf.mxu0
  %v1714 = vadd.f32 %v1648, %v1713
  %v1715 = vpop.f32.mrf.mxu0
  %1716 = vdwg.mxu0
  %v1717 = vadd.f32 %v1257, %v1675
  %v1718 = vadd.f32 %v1258, %v1688
  %v1719 = vadd.f32 %v1259, %v1701
  %v1720 = vadd.f32 %v1260, %v1714
  %s1721 = scalar_lea.vmem %s7, 4
  %v1722 = vld [vmem:[%s1721] sm:$0xf]
  %s1723 = scalar_lea.vmem %s8, 8
  %v1724 = vld [vmem:[%s1723] sm:$0xff]
  %1725 = vrot.lane.b32.xlu0 %v1717, 17
  %v1726 = vpop.permute.xlu0 %1725
  %1727 = vrot.lane.b32.xlu0 %v1718, 17
  %v1728 = vpop.permute.xlu0 %1727
  %1729 = vrot.lane.b32.xlu0 %v1719, 17
  %v1730 = vpop.permute.xlu0 %1729
  %1731 = vrot.lane.b32.xlu0 %v1720, 17
  %v1732 = vpop.permute.xlu0 %1731
  %v1733 = vsel %vm99, %v1730, %v1732
  %v1734 = vsel %vm99, %v1728, %v1730
  %v1735 = vsel %vm99, %v1726, %v1728
  %v1736 = vsel %vm99, %v1732, %v1726
  %1737 = vrot.lane.b32.xlu0 %v1717, 16
  %v1738 = vpop.permute.xlu0 %1737
  %1739 = vrot.lane.b32.xlu0 %v1718, 16
  %v1740 = vpop.permute.xlu0 %1739
  %1741 = vrot.lane.b32.xlu0 %v1719, 16
  %v1742 = vpop.permute.xlu0 %1741
  %1743 = vrot.lane.b32.xlu0 %v1720, 16
  %v1744 = vpop.permute.xlu0 %1743
  %v1745 = vsel %vm112, %v1742, %v1744
  %v1746 = vsel %vm112, %v1740, %v1742
  %v1747 = vsel %vm112, %v1738, %v1740
  %v1748 = vsel %vm112, %v1744, %v1738
  %1749 = vrot.lane.b32.xlu0 %v1717, 15
  %v1750 = vpop.permute.xlu0 %1749
  %1751 = vrot.lane.b32.xlu0 %v1718, 15
  %v1752 = vpop.permute.xlu0 %1751
  %1753 = vrot.lane.b32.xlu0 %v1719, 15
  %v1754 = vpop.permute.xlu0 %1753
  %1755 = vrot.lane.b32.xlu0 %v1720, 15
  %v1756 = vpop.permute.xlu0 %1755
  %v1757 = vsel %vm125, %v1754, %v1756
  %v1758 = vsel %vm125, %v1752, %v1754
  %v1759 = vsel %vm125, %v1750, %v1752
  %v1760 = vsel %vm125, %v1756, %v1750
  %1761 = vrot.lane.b32.xlu0 %v1717, 1
  %v1762 = vpop.permute.xlu0 %1761
  %1763 = vrot.lane.b32.xlu0 %v1718, 1
  %v1764 = vpop.permute.xlu0 %1763
  %1765 = vrot.lane.b32.xlu0 %v1719, 1
  %v1766 = vpop.permute.xlu0 %1765
  %1767 = vrot.lane.b32.xlu0 %v1720, 1
  %v1768 = vpop.permute.xlu0 %1767
  %v1769 = vsel %vm138, %v1766, %v1768
  %v1770 = vsel %vm138, %v1764, %v1766
  %v1771 = vsel %vm138, %v1762, %v1764
  %v1772 = vsel %vm138, %v1768, %v1762
  %1773 = vrot.lane.b32.xlu0 %v1717, 127
  %v1774 = vpop.permute.xlu0 %1773
  %1775 = vrot.lane.b32.xlu0 %v1718, 127
  %v1776 = vpop.permute.xlu0 %1775
  %1777 = vrot.lane.b32.xlu0 %v1719, 127
  %v1778 = vpop.permute.xlu0 %1777
  %1779 = vrot.lane.b32.xlu0 %v1720, 127
  %v1780 = vpop.permute.xlu0 %1779
  %v1781 = vsel %vm151, %v1778, %v1780
  %v1782 = vsel %vm151, %v1776, %v1778
  %v1783 = vsel %vm151, %v1774, %v1776
  %v1784 = vsel %vm151, %v1780, %v1774
  %1785 = vrot.lane.b32.xlu0 %v1717, 113
  %v1786 = vpop.permute.xlu0 %1785
  %1787 = vrot.lane.b32.xlu0 %v1718, 113
  %v1788 = vpop.permute.xlu0 %1787
  %1789 = vrot.lane.b32.xlu0 %v1719, 113
  %v1790 = vpop.permute.xlu0 %1789
  %1791 = vrot.lane.b32.xlu0 %v1720, 113
  %v1792 = vpop.permute.xlu0 %1791
  %v1793 = vsel %vm164, %v1790, %v1792
  %v1794 = vsel %vm164, %v1788, %v1790
  %v1795 = vsel %vm164, %v1786, %v1788
  %v1796 = vsel %vm164, %v1792, %v1786
  %1797 = vrot.lane.b32.xlu0 %v1717, 112
  %v1798 = vpop.permute.xlu0 %1797
  %1799 = vrot.lane.b32.xlu0 %v1718, 112
  %v1800 = vpop.permute.xlu0 %1799
  %1801 = vrot.lane.b32.xlu0 %v1719, 112
  %v1802 = vpop.permute.xlu0 %1801
  %1803 = vrot.lane.b32.xlu0 %v1720, 112
  %v1804 = vpop.permute.xlu0 %1803
  %v1805 = vsel %vm177, %v1802, %v1804
  %v1806 = vsel %vm177, %v1800, %v1802
  %v1807 = vsel %vm177, %v1798, %v1800
  %v1808 = vsel %vm177, %v1804, %v1798
  %1809 = vrot.lane.b32.xlu0 %v1717, 111
  %v1810 = vpop.permute.xlu0 %1809
  %1811 = vrot.lane.b32.xlu0 %v1718, 111
  %v1812 = vpop.permute.xlu0 %1811
  %1813 = vrot.lane.b32.xlu0 %v1719, 111
  %v1814 = vpop.permute.xlu0 %1813
  %1815 = vrot.lane.b32.xlu0 %v1720, 111
  %v1816 = vpop.permute.xlu0 %1815
  %v1817 = vsel %vm190, %v1814, %v1816
  %v1818 = vsel %vm190, %v1812, %v1814
  %v1819 = vsel %vm190, %v1810, %v1812
  %v1820 = vsel %vm190, %v1816, %v1810
  %v1821 = vmul.f32 %v1736, %v47
  %v1822 = vmul.f32 %v1735, %v48
  %v1823 = vmul.f32 %v1734, %v49
  %v1824 = vmul.f32 %v1733, %v50
  %v1825 = vmul.f32 %v1748, %v51
  %v1826 = vmul.f32 %v1747, %v52
  %v1827 = vmul.f32 %v1746, %v53
  %v1828 = vmul.f32 %v1745, %v54
  %v1829 = vmul.f32 %v1760, %v55
  %v1830 = vmul.f32 %v1759, %v56
  %v1831 = vmul.f32 %v1758, %v57
  %v1832 = vmul.f32 %v1757, %v58
  %v1833 = vmul.f32 %v1772, %v59
  %v1834 = vmul.f32 %v1771, %v60
  %v1835 = vmul.f32 %v1770, %v61
  %v1836 = vmul.f32 %v1769, %v62
  %v1837 = vmul.f32 %v1717, %v63
  %v1838 = vmul.f32 %v1718, %v64
  %v1839 = vmul.f32 %v1719, %v65
  %v1840 = vmul.f32 %v1720, %v66
  %v1841 = vmul.f32 %v1783, %v67
  %v1842 = vmul.f32 %v1782, %v68
  %v1843 = vmul.f32 %v1781, %v69
  %v1844 = vmul.f32 %v1784, %v70
  %v1845 = vmul.f32 %v1795, %v71
  %v1846 = vmul.f32 %v1794, %v72
  %v1847 = vmul.f32 %v1793, %v73
  %v1848 = vmul.f32 %v1796, %v74
  %v1849 = vmul.f32 %v1807, %v75
  %v1850 = vmul.f32 %v1806, %v76
  %v1851 = vmul.f32 %v1805, %v77
  %v1852 = vmul.f32 %v1808, %v78
  %v1853 = vmul.f32 %v1819, %v79
  %v1854 = vmul.f32 %v1818, %v80
  %v1855 = vmul.f32 %v1817, %v81
  %v1856 = vmul.f32 %v1820, %v82
  %v1857 = vpack.c.bf16 %v1825, %v1821
  %v1858 = vpack.c.bf16 %v1826, %v1822
  %v1859 = vpack.c.bf16 %v1827, %v1823
  %v1860 = vpack.c.bf16 %v1828, %v1824
  %v1861 = vpack.c.bf16 %v1833, %v1829
  %v1862 = vpack.c.bf16 %v1834, %v1830
  %v1863 = vpack.c.bf16 %v1835, %v1831
  %v1864 = vpack.c.bf16 %v1836, %v1832
  %v1865 = vpack.c.bf16 %v1841, %v1837
  %v1866 = vpack.c.bf16 %v1842, %v1838
  %v1867 = vpack.c.bf16 %v1843, %v1839
  %v1868 = vpack.c.bf16 %v1844, %v1840
  %v1869 = vpack.c.bf16 %v1849, %v1845
  %v1870 = vpack.c.bf16 %v1850, %v1846
  %v1871 = vpack.c.bf16 %v1851, %v1847
  %v1872 = vpack.c.bf16 %v1852, %v1848
  %v1873 = vpack.c.bf16 %v1853, %v1853
  %v1874 = vpack.c.bf16 %v1854, %v1854
  %v1875 = vpack.c.bf16 %v1855, %v1855
  %v1876 = vpack.c.bf16 %v1856, %v1856
  %1878 = vset.pattern.permute.xlu0 0
  %1879 = vperm.xlu0 %1878, %v1724
  %v1880 = vpop.permute.xlu0 %1879
  %v1883 = vsel %vm256, %v1722, 0
  %v1886 = vsel %vm260, %v1873, 0
  %v1889 = vsel %vm260, %v1874, 0
  %v1892 = vsel %vm260, %v1875, 0
  %v1895 = vsel %vm260, %v1876, 0
  %1897 = vmatpush.bf16.msra.mxu0 0
  %1898 = vmatpush.bf16.msra.mxu0 0
  %1899 = vmatpush.bf16.msra.mxu0 0
  %1900 = vmatpush.bf16.msra.mxu0 %v1886
  %1901 = vmatpush.bf16.msra.mxu0 %v1869
  %1902 = vmatpush.bf16.msra.mxu0 %v1865
  %1903 = vmatpush.bf16.msra.mxu0 %v1861
  %1904 = vmatpush.bf16.msra.mxu0 %v1857
  %1905 = vmatmul.bf16.gmra.mxu0 %v1883
  %v1906 = vpop.f32.mrf.mxu0
  %v1907 = vadd.f32 %v1880, %v1906
  %v1908 = vpop.f32.mrf.mxu0
  %1909 = vdwg.mxu0
  %1910 = vmatpush.bf16.msra.mxu0 0
  %1911 = vmatpush.bf16.msra.mxu0 0
  %1912 = vmatpush.bf16.msra.mxu0 0
  %1913 = vmatpush.bf16.msra.mxu0 %v1889
  %1914 = vmatpush.bf16.msra.mxu0 %v1870
  %1915 = vmatpush.bf16.msra.mxu0 %v1866
  %1916 = vmatpush.bf16.msra.mxu0 %v1862
  %1917 = vmatpush.bf16.msra.mxu0 %v1858
  %1918 = vmatmul.bf16.gmra.mxu0 %v1883
  %v1919 = vpop.f32.mrf.mxu0
  %v1920 = vadd.f32 %v1880, %v1919
  %v1921 = vpop.f32.mrf.mxu0
  %1922 = vdwg.mxu0
  %1923 = vmatpush.bf16.msra.mxu0 0
  %1924 = vmatpush.bf16.msra.mxu0 0
  %1925 = vmatpush.bf16.msra.mxu0 0
  %1926 = vmatpush.bf16.msra.mxu0 %v1892
  %1927 = vmatpush.bf16.msra.mxu0 %v1871
  %1928 = vmatpush.bf16.msra.mxu0 %v1867
  %1929 = vmatpush.bf16.msra.mxu0 %v1863
  %1930 = vmatpush.bf16.msra.mxu0 %v1859
  %1931 = vmatmul.bf16.gmra.mxu0 %v1883
  %v1932 = vpop.f32.mrf.mxu0
  %v1933 = vadd.f32 %v1880, %v1932
  %v1934 = vpop.f32.mrf.mxu0
  %1935 = vdwg.mxu0
  %1936 = vmatpush.bf16.msra.mxu0 0
  %1937 = vmatpush.bf16.msra.mxu0 0
  %1938 = vmatpush.bf16.msra.mxu0 0
  %1939 = vmatpush.bf16.msra.mxu0 %v1895
  %1940 = vmatpush.bf16.msra.mxu0 %v1872
  %1941 = vmatpush.bf16.msra.mxu0 %v1868
  %1942 = vmatpush.bf16.msra.mxu0 %v1864
  %1943 = vmatpush.bf16.msra.mxu0 %v1860
  %1944 = vmatmul.bf16.gmra.mxu0 %v1883
  %v1945 = vpop.f32.mrf.mxu0
  %v1946 = vadd.f32 %v1880, %v1945
  %v1947 = vpop.f32.mrf.mxu0
  %1948 = vdwg.mxu0
  %v1949 = vmax.f32 %v1907, 0.0
  %v1950 = vmax.f32 %v1920, 0.0
  %v1951 = vmax.f32 %v1933, 0.0
  %v1952 = vmax.f32 %v1946, 0.0
  %s1953 = scalar_lea.vmem %s9, 4
  %v1954 = vld [vmem:[%s1953] sm:$0xf]
  %s1955 = scalar_lea.vmem %s10, 8
  %v1956 = vld [vmem:[%s1955] sm:$0xff]
  %1957 = vrot.lane.b32.xlu0 %v1949, 17
  %v1958 = vpop.permute.xlu0 %1957
  %1959 = vrot.lane.b32.xlu0 %v1950, 17
  %v1960 = vpop.permute.xlu0 %1959
  %1961 = vrot.lane.b32.xlu0 %v1951, 17
  %v1962 = vpop.permute.xlu0 %1961
  %1963 = vrot.lane.b32.xlu0 %v1952, 17
  %v1964 = vpop.permute.xlu0 %1963
  %v1965 = vsel %vm99, %v1962, %v1964
  %v1966 = vsel %vm99, %v1960, %v1962
  %v1967 = vsel %vm99, %v1958, %v1960
  %v1968 = vsel %vm99, %v1964, %v1958
  %1969 = vrot.lane.b32.xlu0 %v1949, 16
  %v1970 = vpop.permute.xlu0 %1969
  %1971 = vrot.lane.b32.xlu0 %v1950, 16
  %v1972 = vpop.permute.xlu0 %1971
  %1973 = vrot.lane.b32.xlu0 %v1951, 16
  %v1974 = vpop.permute.xlu0 %1973
  %1975 = vrot.lane.b32.xlu0 %v1952, 16
  %v1976 = vpop.permute.xlu0 %1975
  %v1977 = vsel %vm112, %v1974, %v1976
  %v1978 = vsel %vm112, %v1972, %v1974
  %v1979 = vsel %vm112, %v1970, %v1972
  %v1980 = vsel %vm112, %v1976, %v1970
  %1981 = vrot.lane.b32.xlu0 %v1949, 15
  %v1982 = vpop.permute.xlu0 %1981
  %1983 = vrot.lane.b32.xlu0 %v1950, 15
  %v1984 = vpop.permute.xlu0 %1983
  %1985 = vrot.lane.b32.xlu0 %v1951, 15
  %v1986 = vpop.permute.xlu0 %1985
  %1987 = vrot.lane.b32.xlu0 %v1952, 15
  %v1988 = vpop.permute.xlu0 %1987
  %v1989 = vsel %vm125, %v1986, %v1988
  %v1990 = vsel %vm125, %v1984, %v1986
  %v1991 = vsel %vm125, %v1982, %v1984
  %v1992 = vsel %vm125, %v1988, %v1982
  %1993 = vrot.lane.b32.xlu0 %v1949, 1
  %v1994 = vpop.permute.xlu0 %1993
  %1995 = vrot.lane.b32.xlu0 %v1950, 1
  %v1996 = vpop.permute.xlu0 %1995
  %1997 = vrot.lane.b32.xlu0 %v1951, 1
  %v1998 = vpop.permute.xlu0 %1997
  %1999 = vrot.lane.b32.xlu0 %v1952, 1
  %v2000 = vpop.permute.xlu0 %1999
  %v2001 = vsel %vm138, %v1998, %v2000
  %v2002 = vsel %vm138, %v1996, %v1998
  %v2003 = vsel %vm138, %v1994, %v1996
  %v2004 = vsel %vm138, %v2000, %v1994
  %2005 = vrot.lane.b32.xlu0 %v1949, 127
  %v2006 = vpop.permute.xlu0 %2005
  %2007 = vrot.lane.b32.xlu0 %v1950, 127
  %v2008 = vpop.permute.xlu0 %2007
  %2009 = vrot.lane.b32.xlu0 %v1951, 127
  %v2010 = vpop.permute.xlu0 %2009
  %2011 = vrot.lane.b32.xlu0 %v1952, 127
  %v2012 = vpop.permute.xlu0 %2011
  %v2013 = vsel %vm151, %v2010, %v2012
  %v2014 = vsel %vm151, %v2008, %v2010
  %v2015 = vsel %vm151, %v2006, %v2008
  %v2016 = vsel %vm151, %v2012, %v2006
  %2017 = vrot.lane.b32.xlu0 %v1949, 113
  %v2018 = vpop.permute.xlu0 %2017
  %2019 = vrot.lane.b32.xlu0 %v1950, 113
  %v2020 = vpop.permute.xlu0 %2019
  %2021 = vrot.lane.b32.xlu0 %v1951, 113
  %v2022 = vpop.permute.xlu0 %2021
  %2023 = vrot.lane.b32.xlu0 %v1952, 113
  %v2024 = vpop.permute.xlu0 %2023
  %v2025 = vsel %vm164, %v2022, %v2024
  %v2026 = vsel %vm164, %v2020, %v2022
  %v2027 = vsel %vm164, %v2018, %v2020
  %v2028 = vsel %vm164, %v2024, %v2018
  %2029 = vrot.lane.b32.xlu0 %v1949, 112
  %v2030 = vpop.permute.xlu0 %2029
  %2031 = vrot.lane.b32.xlu0 %v1950, 112
  %v2032 = vpop.permute.xlu0 %2031
  %2033 = vrot.lane.b32.xlu0 %v1951, 112
  %v2034 = vpop.permute.xlu0 %2033
  %2035 = vrot.lane.b32.xlu0 %v1952, 112
  %v2036 = vpop.permute.xlu0 %2035
  %v2037 = vsel %vm177, %v2034, %v2036
  %v2038 = vsel %vm177, %v2032, %v2034
  %v2039 = vsel %vm177, %v2030, %v2032
  %v2040 = vsel %vm177, %v2036, %v2030
  %2041 = vrot.lane.b32.xlu0 %v1949, 111
  %v2042 = vpop.permute.xlu0 %2041
  %2043 = vrot.lane.b32.xlu0 %v1950, 111
  %v2044 = vpop.permute.xlu0 %2043
  %2045 = vrot.lane.b32.xlu0 %v1951, 111
  %v2046 = vpop.permute.xlu0 %2045
  %2047 = vrot.lane.b32.xlu0 %v1952, 111
  %v2048 = vpop.permute.xlu0 %2047
  %v2049 = vsel %vm190, %v2046, %v2048
  %v2050 = vsel %vm190, %v2044, %v2046
  %v2051 = vsel %vm190, %v2042, %v2044
  %v2052 = vsel %vm190, %v2048, %v2042
  %v2053 = vmul.f32 %v1968, %v47
  %v2054 = vmul.f32 %v1967, %v48
  %v2055 = vmul.f32 %v1966, %v49
  %v2056 = vmul.f32 %v1965, %v50
  %v2057 = vmul.f32 %v1980, %v51
  %v2058 = vmul.f32 %v1979, %v52
  %v2059 = vmul.f32 %v1978, %v53
  %v2060 = vmul.f32 %v1977, %v54
  %v2061 = vmul.f32 %v1992, %v55
  %v2062 = vmul.f32 %v1991, %v56
  %v2063 = vmul.f32 %v1990, %v57
  %v2064 = vmul.f32 %v1989, %v58
  %v2065 = vmul.f32 %v2004, %v59
  %v2066 = vmul.f32 %v2003, %v60
  %v2067 = vmul.f32 %v2002, %v61
  %v2068 = vmul.f32 %v2001, %v62
  %v2069 = vmul.f32 %v1949, %v63
  %v2070 = vmul.f32 %v1950, %v64
  %v2071 = vmul.f32 %v1951, %v65
  %v2072 = vmul.f32 %v1952, %v66
  %v2073 = vmul.f32 %v2015, %v67
  %v2074 = vmul.f32 %v2014, %v68
  %v2075 = vmul.f32 %v2013, %v69
  %v2076 = vmul.f32 %v2016, %v70
  %v2077 = vmul.f32 %v2027, %v71
  %v2078 = vmul.f32 %v2026, %v72
  %v2079 = vmul.f32 %v2025, %v73
  %v2080 = vmul.f32 %v2028, %v74
  %v2081 = vmul.f32 %v2039, %v75
  %v2082 = vmul.f32 %v2038, %v76
  %v2083 = vmul.f32 %v2037, %v77
  %v2084 = vmul.f32 %v2040, %v78
  %v2085 = vmul.f32 %v2051, %v79
  %v2086 = vmul.f32 %v2050, %v80
  %v2087 = vmul.f32 %v2049, %v81
  %v2088 = vmul.f32 %v2052, %v82
  %v2089 = vpack.c.bf16 %v2057, %v2053
  %v2090 = vpack.c.bf16 %v2058, %v2054
  %v2091 = vpack.c.bf16 %v2059, %v2055
  %v2092 = vpack.c.bf16 %v2060, %v2056
  %v2093 = vpack.c.bf16 %v2065, %v2061
  %v2094 = vpack.c.bf16 %v2066, %v2062
  %v2095 = vpack.c.bf16 %v2067, %v2063
  %v2096 = vpack.c.bf16 %v2068, %v2064
  %v2097 = vpack.c.bf16 %v2073, %v2069
  %v2098 = vpack.c.bf16 %v2074, %v2070
  %v2099 = vpack.c.bf16 %v2075, %v2071
  %v2100 = vpack.c.bf16 %v2076, %v2072
  %v2101 = vpack.c.bf16 %v2081, %v2077
  %v2102 = vpack.c.bf16 %v2082, %v2078
  %v2103 = vpack.c.bf16 %v2083, %v2079
  %v2104 = vpack.c.bf16 %v2084, %v2080
  %v2105 = vpack.c.bf16 %v2085, %v2085
  %v2106 = vpack.c.bf16 %v2086, %v2086
  %v2107 = vpack.c.bf16 %v2087, %v2087
  %v2108 = vpack.c.bf16 %v2088, %v2088
  %2110 = vset.pattern.permute.xlu0 0
  %2111 = vperm.xlu0 %2110, %v1956
  %v2112 = vpop.permute.xlu0 %2111
  %v2115 = vsel %vm256, %v1954, 0
  %v2118 = vsel %vm260, %v2105, 0
  %v2121 = vsel %vm260, %v2106, 0
  %v2124 = vsel %vm260, %v2107, 0
  %v2127 = vsel %vm260, %v2108, 0
  %2129 = vmatpush.bf16.msra.mxu0 0
  %2130 = vmatpush.bf16.msra.mxu0 0
  %2131 = vmatpush.bf16.msra.mxu0 0
  %2132 = vmatpush.bf16.msra.mxu0 %v2118
  %2133 = vmatpush.bf16.msra.mxu0 %v2101
  %2134 = vmatpush.bf16.msra.mxu0 %v2097
  %2135 = vmatpush.bf16.msra.mxu0 %v2093
  %2136 = vmatpush.bf16.msra.mxu0 %v2089
  %2137 = vmatmul.bf16.gmra.mxu0 %v2115
  %v2138 = vpop.f32.mrf.mxu0
  %v2139 = vadd.f32 %v2112, %v2138
  %v2140 = vpop.f32.mrf.mxu0
  %2141 = vdwg.mxu0
  %2142 = vmatpush.bf16.msra.mxu0 0
  %2143 = vmatpush.bf16.msra.mxu0 0
  %2144 = vmatpush.bf16.msra.mxu0 0
  %2145 = vmatpush.bf16.msra.mxu0 %v2121
  %2146 = vmatpush.bf16.msra.mxu0 %v2102
  %2147 = vmatpush.bf16.msra.mxu0 %v2098
  %2148 = vmatpush.bf16.msra.mxu0 %v2094
  %2149 = vmatpush.bf16.msra.mxu0 %v2090
  %2150 = vmatmul.bf16.gmra.mxu0 %v2115
  %v2151 = vpop.f32.mrf.mxu0
  %v2152 = vadd.f32 %v2112, %v2151
  %v2153 = vpop.f32.mrf.mxu0
  %2154 = vdwg.mxu0
  %2155 = vmatpush.bf16.msra.mxu0 0
  %2156 = vmatpush.bf16.msra.mxu0 0
  %2157 = vmatpush.bf16.msra.mxu0 0
  %2158 = vmatpush.bf16.msra.mxu0 %v2124
  %2159 = vmatpush.bf16.msra.mxu0 %v2103
  %2160 = vmatpush.bf16.msra.mxu0 %v2099
  %2161 = vmatpush.bf16.msra.mxu0 %v2095
  %2162 = vmatpush.bf16.msra.mxu0 %v2091
  %2163 = vmatmul.bf16.gmra.mxu0 %v2115
  %v2164 = vpop.f32.mrf.mxu0
  %v2165 = vadd.f32 %v2112, %v2164
  %v2166 = vpop.f32.mrf.mxu0
  %2167 = vdwg.mxu0
  %2168 = vmatpush.bf16.msra.mxu0 0
  %2169 = vmatpush.bf16.msra.mxu0 0
  %2170 = vmatpush.bf16.msra.mxu0 0
  %2171 = vmatpush.bf16.msra.mxu0 %v2127
  %2172 = vmatpush.bf16.msra.mxu0 %v2104
  %2173 = vmatpush.bf16.msra.mxu0 %v2100
  %2174 = vmatpush.bf16.msra.mxu0 %v2096
  %2175 = vmatpush.bf16.msra.mxu0 %v2092
  %2176 = vmatmul.bf16.gmra.mxu0 %v2115
  %v2177 = vpop.f32.mrf.mxu0
  %v2178 = vadd.f32 %v2112, %v2177
  %v2179 = vpop.f32.mrf.mxu0
  %2180 = vdwg.mxu0
  %v2181 = vadd.f32 %v1717, %v2139
  %v2182 = vadd.f32 %v1718, %v2152
  %v2183 = vadd.f32 %v1719, %v2165
  %v2184 = vadd.f32 %v1720, %v2178
  %2185 = vst [vmem:[%s14] sm:$0xff] %v2181
  %2186 = vst [vmem:[%s14 + $0x8] sm:$0xff] %v2182
  %2187 = vst [vmem:[%s14 + $0x10] sm:$0xff] %v2183
  %2188 = vst [vmem:[%s14 + $0x18] sm:$0xff] %v2184
  // Predicated region
  $region54: #{_lambda_.3} parent=0 // pred_check
    _
  $region55: #{_lambda_.3} parent=0 // pred_check_branch
    %2190 = sbr.rel (0) target = $region57
  $region56: #{_lambda_.3} parent=0 // pred_region
    _
  $region57: #{_lambda_.3} parent=0 // pred_fallthru
    _
  // Predicated region
  $region58: #{_lambda_.3} parent=0 // pred_check
    _
  $region59: #{_lambda_.3} parent=0 // pred_check_branch
    %2192 = sbr.rel (0) target = $region61
  $region60: #{_lambda_.3} parent=0 // pred_region
    _
  $region61: #{_lambda_.3} parent=0 // pred_fallthru
    _
  // Predicated region
  $region62: #{_lambda_.3} parent=0 // pred_check
    _
  $region63: #{_lambda_.3} parent=0 // pred_check_branch
    %2194 = sbr.rel (0) target = $region65
  $region64: #{_lambda_.3} parent=0 // pred_region
    _
  $region65: #{_lambda_.3} parent=0 // pred_fallthru
    _
  // Predicated region
  $region66: #{_lambda_.3} parent=0 // pred_check
    _
  $region67: #{_lambda_.3} parent=0 // pred_check_branch
    %2196 = sbr.rel (0) target = $region69
  $region68: #{_lambda_.3} parent=0 // pred_region
    _
  $region69: #{_lambda_.3} parent=0 // pred_fallthru
    _

// kernel: _lambda_.4
$region0: #{_lambda_.4}
  #allocation0 [shape = 'u32[]', space=smem, size = 0x4, offset = 0x4, fixed_abs, tag = 'smem constant byte address 0x4 - core index']
  #allocation1 [shape = 'u32[72,128]{1,0:T(1,128)}', space=vmem, size = 0x9000, scoped, tag = 'internal scratch']
  %s0 = inlined_call_operand.vmem [shape: f32[72,512], index: 0, kind: input, shape index: {}]
  %s1 = inlined_call_operand.vmem [shape: bf16[2,8,72], index: 1, kind: input, shape index: {}]
  %s2 = inlined_call_operand.vmem [shape: f32[2,8,1], index: 2, kind: input, shape index: {}]
  %s3 = inlined_call_operand.vmem [shape: bf16[2,8,72], index: 3, kind: input, shape index: {}]
  %s4 = inlined_call_operand.vmem [shape: f32[2,8,1], index: 4, kind: input, shape index: {}]
  %s5 = inlined_call_operand.vmem [shape: f32[8,512], index: 5, kind: input, shape index: {}]
  %s6 = inlined_call_operand.vmem [shape: f32[8,512], index: 6, kind: input, shape index: {}]
  %s7 = inlined_call_operand.vmem [shape: f32[8,512], index: 7, kind: output, shape index: {}]
  %s8 = sld [smem:[#allocation0]]
  $region38: #{_lambda_.4} parent=0
    _
  %s10 = ssub.s32 1, %s8
  %s11 = scalar_select 0, %s10, %s8
  // Predicated region
  $region2: #{_lambda_.4} parent=0 // pred_check
    _
  $region3: #{_lambda_.4} parent=0 // pred_check_branch
    %13 = sbr.rel (0) target = $region5
  $region4: #{_lambda_.4} parent=0 // pred_region
    _
  $region5: #{_lambda_.4} parent=0 // pred_fallthru
    _
  // Predicated region
  $region6: #{_lambda_.4} parent=0 // pred_check
    _
  $region7: #{_lambda_.4} parent=0 // pred_check_branch
    %15 = sbr.rel (0) target = $region9
  $region8: #{_lambda_.4} parent=0 // pred_region
    _
  $region9: #{_lambda_.4} parent=0 // pred_fallthru
    _
  // Predicated region
  $region10: #{_lambda_.4} parent=0 // pred_check
    _
  $region11: #{_lambda_.4} parent=0 // pred_check_branch
    %17 = sbr.rel (0) target = $region13
  $region12: #{_lambda_.4} parent=0 // pred_region
    _
  $region13: #{_lambda_.4} parent=0 // pred_fallthru
    _
  // Predicated region
  $region14: #{_lambda_.4} parent=0 // pred_check
    _
  $region15: #{_lambda_.4} parent=0 // pred_check_branch
    %19 = sbr.rel (0) target = $region17
  $region16: #{_lambda_.4} parent=0 // pred_region
    _
  $region17: #{_lambda_.4} parent=0 // pred_fallthru
    _
  // Predicated region
  $region18: #{_lambda_.4} parent=0 // pred_check
    _
  $region19: #{_lambda_.4} parent=0 // pred_check_branch
    %21 = sbr.rel (0) target = $region21
  $region20: #{_lambda_.4} parent=0 // pred_region
    _
  $region21: #{_lambda_.4} parent=0 // pred_fallthru
    _
  // Predicated region
  $region22: #{_lambda_.4} parent=0 // pred_check
    _
  $region23: #{_lambda_.4} parent=0 // pred_check_branch
    %23 = sbr.rel (0) target = $region25
  $region24: #{_lambda_.4} parent=0 // pred_region
    _
  $region25: #{_lambda_.4} parent=0 // pred_fallthru
    _
  // Predicated region
  $region26: #{_lambda_.4} parent=0 // pred_check
    _
  $region27: #{_lambda_.4} parent=0 // pred_check_branch
    %25 = sbr.rel (0) target = $region29
  $region28: #{_lambda_.4} parent=0 // pred_region
    _
  $region29: #{_lambda_.4} parent=0 // pred_fallthru
    _
  %v27 = vld [vmem:[%s0] sm:$0xff]
  %v28 = vld [vmem:[%s0 + $0x8] sm:$0xff]
  %v29 = vld [vmem:[%s0 + $0x10] sm:$0xff]
  %v30 = vld [vmem:[%s0 + $0x18] sm:$0xff]
  %v31 = vld [vmem:[%s0 + $0x20] sm:$0xff]
  %v32 = vld [vmem:[%s0 + $0x28] sm:$0xff]
  %v33 = vld [vmem:[%s0 + $0x30] sm:$0xff]
  %v34 = vld [vmem:[%s0 + $0x38] sm:$0xff]
  %v35 = vld [vmem:[%s0 + $0x40] sm:$0xff]
  %v36 = vld [vmem:[%s0 + $0x48] sm:$0xff]
  %v37 = vld [vmem:[%s0 + $0x50] sm:$0xff]
  %v38 = vld [vmem:[%s0 + $0x58] sm:$0xff]
  %v39 = vld [vmem:[%s0 + $0x60] sm:$0xff]
  %v40 = vld [vmem:[%s0 + $0x68] sm:$0xff]
  %v41 = vld [vmem:[%s0 + $0x70] sm:$0xff]
  %v42 = vld [vmem:[%s0 + $0x78] sm:$0xff]
  %v43 = vld [vmem:[%s0 + $0x80] sm:$0xff]
  %v44 = vld [vmem:[%s0 + $0x88] sm:$0xff]
  %v45 = vld [vmem:[%s0 + $0x90] sm:$0xff]
  %v46 = vld [vmem:[%s0 + $0x98] sm:$0xff]
  %v47 = vld [vmem:[%s0 + $0xa0] sm:$0xff]
  %v48 = vld [vmem:[%s0 + $0xa8] sm:$0xff]
  %v49 = vld [vmem:[%s0 + $0xb0] sm:$0xff]
  %v50 = vld [vmem:[%s0 + $0xb8] sm:$0xff]
  %v51 = vld [vmem:[%s0 + $0xc0] sm:$0xff]
  %v52 = vld [vmem:[%s0 + $0xc8] sm:$0xff]
  %v53 = vld [vmem:[%s0 + $0xd0] sm:$0xff]
  %v54 = vld [vmem:[%s0 + $0xd8] sm:$0xff]
  %v55 = vld [vmem:[%s0 + $0xe0] sm:$0xff]
  %v56 = vld [vmem:[%s0 + $0xe8] sm:$0xff]
  %v57 = vld [vmem:[%s0 + $0xf0] sm:$0xff]
  %v58 = vld [vmem:[%s0 + $0xf8] sm:$0xff]
  %v59 = vld [vmem:[%s0 + $0x100] sm:$0xff]
  %v60 = vld [vmem:[%s0 + $0x108] sm:$0xff]
  %v61 = vld [vmem:[%s0 + $0x110] sm:$0xff]
  %v62 = vld [vmem:[%s0 + $0x118] sm:$0xff]
  %v63 = vld [vmem:[%s6] sm:$0xff]
  %v64 = vld [vmem:[%s6 + $0x8] sm:$0xff]
  %v65 = vld [vmem:[%s6 + $0x10] sm:$0xff]
  %v66 = vld [vmem:[%s6 + $0x18] sm:$0xff]
  %v67 = vlaneseq
  %v68 = vshrl.u32 %v67, 7
  %vm69 = vcmp.lt.s32.totalorder %v68, 2
  %v70 = vld [vmem:[%s5] sm:$0xff]
  %v71 = vld [vmem:[%s5 + $0x8] sm:$0xff]
  %v72 = vld [vmem:[%s5 + $0x10] sm:$0xff]
  %v73 = vld [vmem:[%s5 + $0x18] sm:$0xff]
  %v74 = vsel %vm69, %v70, %v63
  %v75 = vsel %vm69, %v71, %v64
  %v76 = vsel %vm69, %v72, %v65
  %v77 = vsel %vm69, %v73, %v66
  %v78 = vld [vmem:[%s1] sm:$0xf]
  %v79 = vld [vmem:[%s2] sm:$0xff]
  %80 = vrot.lane.b32.xlu0 %v74, 17
  %v81 = vpop.permute.xlu0 %80
  %82 = vrot.lane.b32.xlu0 %v75, 17
  %v83 = vpop.permute.xlu0 %82
  %84 = vrot.lane.b32.xlu0 %v76, 17
  %v85 = vpop.permute.xlu0 %84
  %86 = vrot.lane.b32.xlu0 %v77, 17
  %v87 = vpop.permute.xlu0 %86
  %v88 = vlaneseq
  %v89 = vand.u32 %v88, 127
  %vm90 = vcmp.lt.s32.totalorder %v89, 17
  %v91 = vsel %vm90, %v85, %v87
  %v92 = vsel %vm90, %v83, %v85
  %v93 = vsel %vm90, %v81, %v83
  %v94 = vsel %vm90, %v87, %v81
  %95 = vrot.lane.b32.xlu0 %v74, 16
  %v96 = vpop.permute.xlu0 %95
  %97 = vrot.lane.b32.xlu0 %v75, 16
  %v98 = vpop.permute.xlu0 %97
  %99 = vrot.lane.b32.xlu0 %v76, 16
  %v100 = vpop.permute.xlu0 %99
  %101 = vrot.lane.b32.xlu0 %v77, 16
  %v102 = vpop.permute.xlu0 %101
  %vm103 = vcmp.lt.s32.totalorder %v89, 16
  %v104 = vsel %vm103, %v100, %v102
  %v105 = vsel %vm103, %v98, %v100
  %v106 = vsel %vm103, %v96, %v98
  %v107 = vsel %vm103, %v102, %v96
  %108 = vrot.lane.b32.xlu0 %v74, 15
  %v109 = vpop.permute.xlu0 %108
  %110 = vrot.lane.b32.xlu0 %v75, 15
  %v111 = vpop.permute.xlu0 %110
  %112 = vrot.lane.b32.xlu0 %v76, 15
  %v113 = vpop.permute.xlu0 %112
  %114 = vrot.lane.b32.xlu0 %v77, 15
  %v115 = vpop.permute.xlu0 %114
  %vm116 = vcmp.lt.s32.totalorder %v89, 15
  %v117 = vsel %vm116, %v113, %v115
  %v118 = vsel %vm116, %v111, %v113
  %v119 = vsel %vm116, %v109, %v111
  %v120 = vsel %vm116, %v115, %v109
  %121 = vrot.lane.b32.xlu0 %v74, 1
  %v122 = vpop.permute.xlu0 %121
  %123 = vrot.lane.b32.xlu0 %v75, 1
  %v124 = vpop.permute.xlu0 %123
  %125 = vrot.lane.b32.xlu0 %v76, 1
  %v126 = vpop.permute.xlu0 %125
  %127 = vrot.lane.b32.xlu0 %v77, 1
  %v128 = vpop.permute.xlu0 %127
  %vm129 = vcmp.lt.s32.totalorder %v89, 1
  %v130 = vsel %vm129, %v126, %v128
  %v131 = vsel %vm129, %v124, %v126
  %v132 = vsel %vm129, %v122, %v124
  %v133 = vsel %vm129, %v128, %v122
  %134 = vrot.lane.b32.xlu0 %v74, 127
  %v135 = vpop.permute.xlu0 %134
  %136 = vrot.lane.b32.xlu0 %v75, 127
  %v137 = vpop.permute.xlu0 %136
  %138 = vrot.lane.b32.xlu0 %v76, 127
  %v139 = vpop.permute.xlu0 %138
  %140 = vrot.lane.b32.xlu0 %v77, 127
  %v141 = vpop.permute.xlu0 %140
  %vm142 = vcmp.lt.s32.totalorder %v89, 127
  %v143 = vsel %vm142, %v139, %v141
  %v144 = vsel %vm142, %v137, %v139
  %v145 = vsel %vm142, %v135, %v137
  %v146 = vsel %vm142, %v141, %v135
  %147 = vrot.lane.b32.xlu0 %v74, 113
  %v148 = vpop.permute.xlu0 %147
  %149 = vrot.lane.b32.xlu0 %v75, 113
  %v150 = vpop.permute.xlu0 %149
  %151 = vrot.lane.b32.xlu0 %v76, 113
  %v152 = vpop.permute.xlu0 %151
  %153 = vrot.lane.b32.xlu0 %v77, 113
  %v154 = vpop.permute.xlu0 %153
  %vm155 = vcmp.lt.s32.totalorder %v89, 113
  %v156 = vsel %vm155, %v152, %v154
  %v157 = vsel %vm155, %v150, %v152
  %v158 = vsel %vm155, %v148, %v150
  %v159 = vsel %vm155, %v154, %v148
  %160 = vrot.lane.b32.xlu0 %v74, 112
  %v161 = vpop.permute.xlu0 %160
  %162 = vrot.lane.b32.xlu0 %v75, 112
  %v163 = vpop.permute.xlu0 %162
  %164 = vrot.lane.b32.xlu0 %v76, 112
  %v165 = vpop.permute.xlu0 %164
  %166 = vrot.lane.b32.xlu0 %v77, 112
  %v167 = vpop.permute.xlu0 %166
  %vm168 = vcmp.lt.s32.totalorder %v89, 112
  %v169 = vsel %vm168, %v165, %v167
  %v170 = vsel %vm168, %v163, %v165
  %v171 = vsel %vm168, %v161, %v163
  %v172 = vsel %vm168, %v167, %v161
  %173 = vrot.lane.b32.xlu0 %v74, 111
  %v174 = vpop.permute.xlu0 %173
  %175 = vrot.lane.b32.xlu0 %v75, 111
  %v176 = vpop.permute.xlu0 %175
  %177 = vrot.lane.b32.xlu0 %v76, 111
  %v178 = vpop.permute.xlu0 %177
  %179 = vrot.lane.b32.xlu0 %v77, 111
  %v180 = vpop.permute.xlu0 %179
  %vm181 = vcmp.lt.s32.totalorder %v89, 111
  %v182 = vsel %vm181, %v178, %v180
  %v183 = vsel %vm181, %v176, %v178
  %v184 = vsel %vm181, %v174, %v176
  %v185 = vsel %vm181, %v180, %v174
  %v186 = vmul.f32 %v94, %v27
  %v187 = vmul.f32 %v93, %v28
  %v188 = vmul.f32 %v92, %v29
  %v189 = vmul.f32 %v91, %v30
  %v190 = vmul.f32 %v107, %v31
  %v191 = vmul.f32 %v106, %v32
  %v192 = vmul.f32 %v105, %v33
  %v193 = vmul.f32 %v104, %v34
  %v194 = vmul.f32 %v120, %v35
  %v195 = vmul.f32 %v119, %v36
  %v196 = vmul.f32 %v118, %v37
  %v197 = vmul.f32 %v117, %v38
  %v198 = vmul.f32 %v133, %v39
  %v199 = vmul.f32 %v132, %v40
  %v200 = vmul.f32 %v131, %v41
  %v201 = vmul.f32 %v130, %v42
  %v202 = vmul.f32 %v74, %v43
  %v203 = vmul.f32 %v75, %v44
  %v204 = vmul.f32 %v76, %v45
  %v205 = vmul.f32 %v77, %v46
  %v206 = vmul.f32 %v145, %v47
  %v207 = vmul.f32 %v144, %v48
  %v208 = vmul.f32 %v143, %v49
  %v209 = vmul.f32 %v146, %v50
  %v210 = vmul.f32 %v158, %v51
  %v211 = vmul.f32 %v157, %v52
  %v212 = vmul.f32 %v156, %v53
  %v213 = vmul.f32 %v159, %v54
  %v214 = vmul.f32 %v171, %v55
  %v215 = vmul.f32 %v170, %v56
  %v216 = vmul.f32 %v169, %v57
  %v217 = vmul.f32 %v172, %v58
  %v218 = vmul.f32 %v184, %v59
  %v219 = vmul.f32 %v183, %v60
  %v220 = vmul.f32 %v182, %v61
  %v221 = vmul.f32 %v185, %v62
  %v222 = vpack.c.bf16 %v190, %v186
  %v223 = vpack.c.bf16 %v191, %v187
  %v224 = vpack.c.bf16 %v192, %v188
  %v225 = vpack.c.bf16 %v193, %v189
  %v226 = vpack.c.bf16 %v198, %v194
  %v227 = vpack.c.bf16 %v199, %v195
  %v228 = vpack.c.bf16 %v200, %v196
  %v229 = vpack.c.bf16 %v201, %v197
  %v230 = vpack.c.bf16 %v206, %v202
  %v231 = vpack.c.bf16 %v207, %v203
  %v232 = vpack.c.bf16 %v208, %v204
  %v233 = vpack.c.bf16 %v209, %v205
  %v234 = vpack.c.bf16 %v214, %v210
  %v235 = vpack.c.bf16 %v215, %v211
  %v236 = vpack.c.bf16 %v216, %v212
  %v237 = vpack.c.bf16 %v217, %v213
  %v238 = vpack.c.bf16 %v218, %v218
  %v239 = vpack.c.bf16 %v219, %v219
  %v240 = vpack.c.bf16 %v220, %v220
  %v241 = vpack.c.bf16 %v221, %v221
  %243 = vset.pattern.permute.xlu0 0
  %244 = vperm.xlu0 %243, %v79
  %v245 = vpop.permute.xlu0 %244
  %vm247 = vcmask 588800
  %v249 = vsel %vm247, %v78, 0
  %vm251 = vcmask 1043456
  %v253 = vsel %vm251, %v238, 0
  %v256 = vsel %vm251, %v239, 0
  %v259 = vsel %vm251, %v240, 0
  %v262 = vsel %vm251, %v241, 0
  %264 = vmatpush.bf16.msra.mxu0 0
  %265 = vmatpush.bf16.msra.mxu0 0
  %266 = vmatpush.bf16.msra.mxu0 0
  %267 = vmatpush.bf16.msra.mxu0 %v253
  %268 = vmatpush.bf16.msra.mxu0 %v234
  %269 = vmatpush.bf16.msra.mxu0 %v230
  %270 = vmatpush.bf16.msra.mxu0 %v226
  %271 = vmatpush.bf16.msra.mxu0 %v222
  %272 = vmatmul.bf16.gmra.mxu0 %v249
  %v273 = vpop.f32.mrf.mxu0
  %v274 = vadd.f32 %v245, %v273
  %v275 = vpop.f32.mrf.mxu0
  %276 = vdwg.mxu0
  %277 = vmatpush.bf16.msra.mxu0 0
  %278 = vmatpush.bf16.msra.mxu0 0
  %279 = vmatpush.bf16.msra.mxu0 0
  %280 = vmatpush.bf16.msra.mxu0 %v256
  %281 = vmatpush.bf16.msra.mxu0 %v235
  %282 = vmatpush.bf16.msra.mxu0 %v231
  %283 = vmatpush.bf16.msra.mxu0 %v227
  %284 = vmatpush.bf16.msra.mxu0 %v223
  %285 = vmatmul.bf16.gmra.mxu0 %v249
  %v286 = vpop.f32.mrf.mxu0
  %v287 = vadd.f32 %v245, %v286
  %v288 = vpop.f32.mrf.mxu0
  %289 = vdwg.mxu0
  %290 = vmatpush.bf16.msra.mxu0 0
  %291 = vmatpush.bf16.msra.mxu0 0
  %292 = vmatpush.bf16.msra.mxu0 0
  %293 = vmatpush.bf16.msra.mxu0 %v259
  %294 = vmatpush.bf16.msra.mxu0 %v236
  %295 = vmatpush.bf16.msra.mxu0 %v232
  %296 = vmatpush.bf16.msra.mxu0 %v228
  %297 = vmatpush.bf16.msra.mxu0 %v224
  %298 = vmatmul.bf16.gmra.mxu0 %v249
  %v299 = vpop.f32.mrf.mxu0
  %v300 = vadd.f32 %v245, %v299
  %v301 = vpop.f32.mrf.mxu0
  %302 = vdwg.mxu0
  %303 = vmatpush.bf16.msra.mxu0 0
  %304 = vmatpush.bf16.msra.mxu0 0
  %305 = vmatpush.bf16.msra.mxu0 0
  %306 = vmatpush.bf16.msra.mxu0 %v262
  %307 = vmatpush.bf16.msra.mxu0 %v237
  %308 = vmatpush.bf16.msra.mxu0 %v233
  %309 = vmatpush.bf16.msra.mxu0 %v229
  %310 = vmatpush.bf16.msra.mxu0 %v225
  %311 = vmatmul.bf16.gmra.mxu0 %v249
  %v312 = vpop.f32.mrf.mxu0
  %v313 = vadd.f32 %v245, %v312
  %v314 = vpop.f32.mrf.mxu0
  %315 = vdwg.mxu0
  %v316 = vmax.f32 %v274, 0.0
  %v317 = vmax.f32 %v287, 0.0
  %v318 = vmax.f32 %v300, 0.0
  %v319 = vmax.f32 %v313, 0.0
  %v320 = vld [vmem:[%s3] sm:$0xf]
  %v321 = vld [vmem:[%s4] sm:$0xff]
  %322 = vrot.lane.b32.xlu0 %v316, 17
  %v323 = vpop.permute.xlu0 %322
  %324 = vrot.lane.b32.xlu0 %v317, 17
  %v325 = vpop.permute.xlu0 %324
  %326 = vrot.lane.b32.xlu0 %v318, 17
  %v327 = vpop.permute.xlu0 %326
  %328 = vrot.lane.b32.xlu0 %v319, 17
  %v329 = vpop.permute.xlu0 %328
  %v330 = vsel %vm90, %v327, %v329
  %v331 = vsel %vm90, %v325, %v327
  %v332 = vsel %vm90, %v323, %v325
  %v333 = vsel %vm90, %v329, %v323
  %334 = vrot.lane.b32.xlu0 %v316, 16
  %v335 = vpop.permute.xlu0 %334
  %336 = vrot.lane.b32.xlu0 %v317, 16
  %v337 = vpop.permute.xlu0 %336
  %338 = vrot.lane.b32.xlu0 %v318, 16
  %v339 = vpop.permute.xlu0 %338
  %340 = vrot.lane.b32.xlu0 %v319, 16
  %v341 = vpop.permute.xlu0 %340
  %v342 = vsel %vm103, %v339, %v341
  %v343 = vsel %vm103, %v337, %v339
  %v344 = vsel %vm103, %v335, %v337
  %v345 = vsel %vm103, %v341, %v335
  %346 = vrot.lane.b32.xlu0 %v316, 15
  %v347 = vpop.permute.xlu0 %346
  %348 = vrot.lane.b32.xlu0 %v317, 15
  %v349 = vpop.permute.xlu0 %348
  %350 = vrot.lane.b32.xlu0 %v318, 15
  %v351 = vpop.permute.xlu0 %350
  %352 = vrot.lane.b32.xlu0 %v319, 15
  %v353 = vpop.permute.xlu0 %352
  %v354 = vsel %vm116, %v351, %v353
  %v355 = vsel %vm116, %v349, %v351
  %v356 = vsel %vm116, %v347, %v349
  %v357 = vsel %vm116, %v353, %v347
  %358 = vrot.lane.b32.xlu0 %v316, 1
  %v359 = vpop.permute.xlu0 %358
  %360 = vrot.lane.b32.xlu0 %v317, 1
  %v361 = vpop.permute.xlu0 %360
  %362 = vrot.lane.b32.xlu0 %v318, 1
  %v363 = vpop.permute.xlu0 %362
  %364 = vrot.lane.b32.xlu0 %v319, 1
  %v365 = vpop.permute.xlu0 %364
  %v366 = vsel %vm129, %v363, %v365
  %v367 = vsel %vm129, %v361, %v363
  %v368 = vsel %vm129, %v359, %v361
  %v369 = vsel %vm129, %v365, %v359
  %370 = vrot.lane.b32.xlu0 %v316, 127
  %v371 = vpop.permute.xlu0 %370
  %372 = vrot.lane.b32.xlu0 %v317, 127
  %v373 = vpop.permute.xlu0 %372
  %374 = vrot.lane.b32.xlu0 %v318, 127
  %v375 = vpop.permute.xlu0 %374
  %376 = vrot.lane.b32.xlu0 %v319, 127
  %v377 = vpop.permute.xlu0 %376
  %v378 = vsel %vm142, %v375, %v377
  %v379 = vsel %vm142, %v373, %v375
  %v380 = vsel %vm142, %v371, %v373
  %v381 = vsel %vm142, %v377, %v371
  %382 = vrot.lane.b32.xlu0 %v316, 113
  %v383 = vpop.permute.xlu0 %382
  %384 = vrot.lane.b32.xlu0 %v317, 113
  %v385 = vpop.permute.xlu0 %384
  %386 = vrot.lane.b32.xlu0 %v318, 113
  %v387 = vpop.permute.xlu0 %386
  %388 = vrot.lane.b32.xlu0 %v319, 113
  %v389 = vpop.permute.xlu0 %388
  %v390 = vsel %vm155, %v387, %v389
  %v391 = vsel %vm155, %v385, %v387
  %v392 = vsel %vm155, %v383, %v385
  %v393 = vsel %vm155, %v389, %v383
  %394 = vrot.lane.b32.xlu0 %v316, 112
  %v395 = vpop.permute.xlu0 %394
  %396 = vrot.lane.b32.xlu0 %v317, 112
  %v397 = vpop.permute.xlu0 %396
  %398 = vrot.lane.b32.xlu0 %v318, 112
  %v399 = vpop.permute.xlu0 %398
  %400 = vrot.lane.b32.xlu0 %v319, 112
  %v401 = vpop.permute.xlu0 %400
  %v402 = vsel %vm168, %v399, %v401
  %v403 = vsel %vm168, %v397, %v399
  %v404 = vsel %vm168, %v395, %v397
  %v405 = vsel %vm168, %v401, %v395
  %406 = vrot.lane.b32.xlu0 %v316, 111
  %v407 = vpop.permute.xlu0 %406
  %408 = vrot.lane.b32.xlu0 %v317, 111
  %v409 = vpop.permute.xlu0 %408
  %410 = vrot.lane.b32.xlu0 %v318, 111
  %v411 = vpop.permute.xlu0 %410
  %412 = vrot.lane.b32.xlu0 %v319, 111
  %v413 = vpop.permute.xlu0 %412
  %v414 = vsel %vm181, %v411, %v413
  %v415 = vsel %vm181, %v409, %v411
  %v416 = vsel %vm181, %v407, %v409
  %v417 = vsel %vm181, %v413, %v407
  %v418 = vmul.f32 %v333, %v27
  %v419 = vmul.f32 %v332, %v28
  %v420 = vmul.f32 %v331, %v29
  %v421 = vmul.f32 %v330, %v30
  %v422 = vmul.f32 %v345, %v31
  %v423 = vmul.f32 %v344, %v32
  %v424 = vmul.f32 %v343, %v33
  %v425 = vmul.f32 %v342, %v34
  %v426 = vmul.f32 %v357, %v35
  %v427 = vmul.f32 %v356, %v36
  %v428 = vmul.f32 %v355, %v37
  %v429 = vmul.f32 %v354, %v38
  %v430 = vmul.f32 %v369, %v39
  %v431 = vmul.f32 %v368, %v40
  %v432 = vmul.f32 %v367, %v41
  %v433 = vmul.f32 %v366, %v42
  %v434 = vmul.f32 %v316, %v43
  %v435 = vmul.f32 %v317, %v44
  %v436 = vmul.f32 %v318, %v45
  %v437 = vmul.f32 %v319, %v46
  %v438 = vmul.f32 %v380, %v47
  %v439 = vmul.f32 %v379, %v48
  %v440 = vmul.f32 %v378, %v49
  %v441 = vmul.f32 %v381, %v50
  %v442 = vmul.f32 %v392, %v51
  %v443 = vmul.f32 %v391, %v52
  %v444 = vmul.f32 %v390, %v53
  %v445 = vmul.f32 %v393, %v54
  %v446 = vmul.f32 %v404, %v55
  %v447 = vmul.f32 %v403, %v56
  %v448 = vmul.f32 %v402, %v57
  %v449 = vmul.f32 %v405, %v58
  %v450 = vmul.f32 %v416, %v59
  %v451 = vmul.f32 %v415, %v60
  %v452 = vmul.f32 %v414, %v61
  %v453 = vmul.f32 %v417, %v62
  %v454 = vpack.c.bf16 %v422, %v418
  %v455 = vpack.c.bf16 %v423, %v419
  %v456 = vpack.c.bf16 %v424, %v420
  %v457 = vpack.c.bf16 %v425, %v421
  %v458 = vpack.c.bf16 %v430, %v426
  %v459 = vpack.c.bf16 %v431, %v427
  %v460 = vpack.c.bf16 %v432, %v428
  %v461 = vpack.c.bf16 %v433, %v429
  %v462 = vpack.c.bf16 %v438, %v434
  %v463 = vpack.c.bf16 %v439, %v435
  %v464 = vpack.c.bf16 %v440, %v436
  %v465 = vpack.c.bf16 %v441, %v437
  %v466 = vpack.c.bf16 %v446, %v442
  %v467 = vpack.c.bf16 %v447, %v443
  %v468 = vpack.c.bf16 %v448, %v444
  %v469 = vpack.c.bf16 %v449, %v445
  %v470 = vpack.c.bf16 %v450, %v450
  %v471 = vpack.c.bf16 %v451, %v451
  %v472 = vpack.c.bf16 %v452, %v452
  %v473 = vpack.c.bf16 %v453, %v453
  %475 = vset.pattern.permute.xlu0 0
  %476 = vperm.xlu0 %475, %v321
  %v477 = vpop.permute.xlu0 %476
  %v480 = vsel %vm247, %v320, 0
  %v483 = vsel %vm251, %v470, 0
  %v486 = vsel %vm251, %v471, 0
  %v489 = vsel %vm251, %v472, 0
  %v492 = vsel %vm251, %v473, 0
  %494 = vmatpush.bf16.msra.mxu0 0
  %495 = vmatpush.bf16.msra.mxu0 0
  %496 = vmatpush.bf16.msra.mxu0 0
  %497 = vmatpush.bf16.msra.mxu0 %v483
  %498 = vmatpush.bf16.msra.mxu0 %v466
  %499 = vmatpush.bf16.msra.mxu0 %v462
  %500 = vmatpush.bf16.msra.mxu0 %v458
  %501 = vmatpush.bf16.msra.mxu0 %v454
  %502 = vmatmul.bf16.gmra.mxu0 %v480
  %v503 = vpop.f32.mrf.mxu0
  %v504 = vadd.f32 %v477, %v503
  %v505 = vpop.f32.mrf.mxu0
  %506 = vdwg.mxu0
  %507 = vmatpush.bf16.msra.mxu0 0
  %508 = vmatpush.bf16.msra.mxu0 0
  %509 = vmatpush.bf16.msra.mxu0 0
  %510 = vmatpush.bf16.msra.mxu0 %v486
  %511 = vmatpush.bf16.msra.mxu0 %v467
  %512 = vmatpush.bf16.msra.mxu0 %v463
  %513 = vmatpush.bf16.msra.mxu0 %v459
  %514 = vmatpush.bf16.msra.mxu0 %v455
  %515 = vmatmul.bf16.gmra.mxu0 %v480
  %v516 = vpop.f32.mrf.mxu0
  %v517 = vadd.f32 %v477, %v516
  %v518 = vpop.f32.mrf.mxu0
  %519 = vdwg.mxu0
  %520 = vmatpush.bf16.msra.mxu0 0
  %521 = vmatpush.bf16.msra.mxu0 0
  %522 = vmatpush.bf16.msra.mxu0 0
  %523 = vmatpush.bf16.msra.mxu0 %v489
  %524 = vmatpush.bf16.msra.mxu0 %v468
  %525 = vmatpush.bf16.msra.mxu0 %v464
  %526 = vmatpush.bf16.msra.mxu0 %v460
  %527 = vmatpush.bf16.msra.mxu0 %v456
  %528 = vmatmul.bf16.gmra.mxu0 %v480
  %v529 = vpop.f32.mrf.mxu0
  %v530 = vadd.f32 %v477, %v529
  %v531 = vpop.f32.mrf.mxu0
  %532 = vdwg.mxu0
  %533 = vmatpush.bf16.msra.mxu0 0
  %534 = vmatpush.bf16.msra.mxu0 0
  %535 = vmatpush.bf16.msra.mxu0 0
  %536 = vmatpush.bf16.msra.mxu0 %v492
  %537 = vmatpush.bf16.msra.mxu0 %v469
  %538 = vmatpush.bf16.msra.mxu0 %v465
  %539 = vmatpush.bf16.msra.mxu0 %v461
  %540 = vmatpush.bf16.msra.mxu0 %v457
  %541 = vmatmul.bf16.gmra.mxu0 %v480
  %v542 = vpop.f32.mrf.mxu0
  %v543 = vadd.f32 %v477, %v542
  %v544 = vpop.f32.mrf.mxu0
  %545 = vdwg.mxu0
  %v546 = vadd.f32 %v74, %v504
  %v547 = vadd.f32 %v75, %v517
  %v548 = vadd.f32 %v76, %v530
  %v549 = vadd.f32 %v77, %v543
  %s550 = scalar_lea.vmem %s1, 4
  %v551 = vld [vmem:[%s550] sm:$0xf]
  %s552 = scalar_lea.vmem %s2, 8
  %v553 = vld [vmem:[%s552] sm:$0xff]
  %554 = vrot.lane.b32.xlu0 %v546, 17
  %v555 = vpop.permute.xlu0 %554
  %556 = vrot.lane.b32.xlu0 %v547, 17
  %v557 = vpop.permute.xlu0 %556
  %558 = vrot.lane.b32.xlu0 %v548, 17
  %v559 = vpop.permute.xlu0 %558
  %560 = vrot.lane.b32.xlu0 %v549, 17
  %v561 = vpop.permute.xlu0 %560
  %v562 = vsel %vm90, %v559, %v561
  %v563 = vsel %vm90, %v557, %v559
  %v564 = vsel %vm90, %v555, %v557
  %v565 = vsel %vm90, %v561, %v555
  %566 = vrot.lane.b32.xlu0 %v546, 16
  %v567 = vpop.permute.xlu0 %566
  %568 = vrot.lane.b32.xlu0 %v547, 16
  %v569 = vpop.permute.xlu0 %568
  %570 = vrot.lane.b32.xlu0 %v548, 16
  %v571 = vpop.permute.xlu0 %570
  %572 = vrot.lane.b32.xlu0 %v549, 16
  %v573 = vpop.permute.xlu0 %572
  %v574 = vsel %vm103, %v571, %v573
  %v575 = vsel %vm103, %v569, %v571
  %v576 = vsel %vm103, %v567, %v569
  %v577 = vsel %vm103, %v573, %v567
  %578 = vrot.lane.b32.xlu0 %v546, 15
  %v579 = vpop.permute.xlu0 %578
  %580 = vrot.lane.b32.xlu0 %v547, 15
  %v581 = vpop.permute.xlu0 %580
  %582 = vrot.lane.b32.xlu0 %v548, 15
  %v583 = vpop.permute.xlu0 %582
  %584 = vrot.lane.b32.xlu0 %v549, 15
  %v585 = vpop.permute.xlu0 %584
  %v586 = vsel %vm116, %v583, %v585
  %v587 = vsel %vm116, %v581, %v583
  %v588 = vsel %vm116, %v579, %v581
  %v589 = vsel %vm116, %v585, %v579
  %590 = vrot.lane.b32.xlu0 %v546, 1
  %v591 = vpop.permute.xlu0 %590
  %592 = vrot.lane.b32.xlu0 %v547, 1
  %v593 = vpop.permute.xlu0 %592
  %594 = vrot.lane.b32.xlu0 %v548, 1
  %v595 = vpop.permute.xlu0 %594
  %596 = vrot.lane.b32.xlu0 %v549, 1
  %v597 = vpop.permute.xlu0 %596
  %v598 = vsel %vm129, %v595, %v597
  %v599 = vsel %vm129, %v593, %v595
  %v600 = vsel %vm129, %v591, %v593
  %v601 = vsel %vm129, %v597, %v591
  %602 = vrot.lane.b32.xlu0 %v546, 127
  %v603 = vpop.permute.xlu0 %602
  %604 = vrot.lane.b32.xlu0 %v547, 127
  %v605 = vpop.permute.xlu0 %604
  %606 = vrot.lane.b32.xlu0 %v548, 127
  %v607 = vpop.permute.xlu0 %606
  %608 = vrot.lane.b32.xlu0 %v549, 127
  %v609 = vpop.permute.xlu0 %608
  %v610 = vsel %vm142, %v607, %v609
  %v611 = vsel %vm142, %v605, %v607
  %v612 = vsel %vm142, %v603, %v605
  %v613 = vsel %vm142, %v609, %v603
  %614 = vrot.lane.b32.xlu0 %v546, 113
  %v615 = vpop.permute.xlu0 %614
  %616 = vrot.lane.b32.xlu0 %v547, 113
  %v617 = vpop.permute.xlu0 %616
  %618 = vrot.lane.b32.xlu0 %v548, 113
  %v619 = vpop.permute.xlu0 %618
  %620 = vrot.lane.b32.xlu0 %v549, 113
  %v621 = vpop.permute.xlu0 %620
  %v622 = vsel %vm155, %v619, %v621
  %v623 = vsel %vm155, %v617, %v619
  %v624 = vsel %vm155, %v615, %v617
  %v625 = vsel %vm155, %v621, %v615
  %626 = vrot.lane.b32.xlu0 %v546, 112
  %v627 = vpop.permute.xlu0 %626
  %628 = vrot.lane.b32.xlu0 %v547, 112
  %v629 = vpop.permute.xlu0 %628
  %630 = vrot.lane.b32.xlu0 %v548, 112
  %v631 = vpop.permute.xlu0 %630
  %632 = vrot.lane.b32.xlu0 %v549, 112
  %v633 = vpop.permute.xlu0 %632
  %v634 = vsel %vm168, %v631, %v633
  %v635 = vsel %vm168, %v629, %v631
  %v636 = vsel %vm168, %v627, %v629
  %v637 = vsel %vm168, %v633, %v627
  %638 = vrot.lane.b32.xlu0 %v546, 111
  %v639 = vpop.permute.xlu0 %638
  %640 = vrot.lane.b32.xlu0 %v547, 111
  %v641 = vpop.permute.xlu0 %640
  %642 = vrot.lane.b32.xlu0 %v548, 111
  %v643 = vpop.permute.xlu0 %642
  %644 = vrot.lane.b32.xlu0 %v549, 111
  %v645 = vpop.permute.xlu0 %644
  %v646 = vsel %vm181, %v643, %v645
  %v647 = vsel %vm181, %v641, %v643
  %v648 = vsel %vm181, %v639, %v641
  %v649 = vsel %vm181, %v645, %v639
  %v650 = vmul.f32 %v565, %v27
  %v651 = vmul.f32 %v564, %v28
  %v652 = vmul.f32 %v563, %v29
  %v653 = vmul.f32 %v562, %v30
  %v654 = vmul.f32 %v577, %v31
  %v655 = vmul.f32 %v576, %v32
  %v656 = vmul.f32 %v575, %v33
  %v657 = vmul.f32 %v574, %v34
  %v658 = vmul.f32 %v589, %v35
  %v659 = vmul.f32 %v588, %v36
  %v660 = vmul.f32 %v587, %v37
  %v661 = vmul.f32 %v586, %v38
  %v662 = vmul.f32 %v601, %v39
  %v663 = vmul.f32 %v600, %v40
  %v664 = vmul.f32 %v599, %v41
  %v665 = vmul.f32 %v598, %v42
  %v666 = vmul.f32 %v546, %v43
  %v667 = vmul.f32 %v547, %v44
  %v668 = vmul.f32 %v548, %v45
  %v669 = vmul.f32 %v549, %v46
  %v670 = vmul.f32 %v612, %v47
  %v671 = vmul.f32 %v611, %v48
  %v672 = vmul.f32 %v610, %v49
  %v673 = vmul.f32 %v613, %v50
  %v674 = vmul.f32 %v624, %v51
  %v675 = vmul.f32 %v623, %v52
  %v676 = vmul.f32 %v622, %v53
  %v677 = vmul.f32 %v625, %v54
  %v678 = vmul.f32 %v636, %v55
  %v679 = vmul.f32 %v635, %v56
  %v680 = vmul.f32 %v634, %v57
  %v681 = vmul.f32 %v637, %v58
  %v682 = vmul.f32 %v648, %v59
  %v683 = vmul.f32 %v647, %v60
  %v684 = vmul.f32 %v646, %v61
  %v685 = vmul.f32 %v649, %v62
  %v686 = vpack.c.bf16 %v654, %v650
  %v687 = vpack.c.bf16 %v655, %v651
  %v688 = vpack.c.bf16 %v656, %v652
  %v689 = vpack.c.bf16 %v657, %v653
  %v690 = vpack.c.bf16 %v662, %v658
  %v691 = vpack.c.bf16 %v663, %v659
  %v692 = vpack.c.bf16 %v664, %v660
  %v693 = vpack.c.bf16 %v665, %v661
  %v694 = vpack.c.bf16 %v670, %v666
  %v695 = vpack.c.bf16 %v671, %v667
  %v696 = vpack.c.bf16 %v672, %v668
  %v697 = vpack.c.bf16 %v673, %v669
  %v698 = vpack.c.bf16 %v678, %v674
  %v699 = vpack.c.bf16 %v679, %v675
  %v700 = vpack.c.bf16 %v680, %v676
  %v701 = vpack.c.bf16 %v681, %v677
  %v702 = vpack.c.bf16 %v682, %v682
  %v703 = vpack.c.bf16 %v683, %v683
  %v704 = vpack.c.bf16 %v684, %v684
  %v705 = vpack.c.bf16 %v685, %v685
  %707 = vset.pattern.permute.xlu0 0
  %708 = vperm.xlu0 %707, %v553
  %v709 = vpop.permute.xlu0 %708
  %v712 = vsel %vm247, %v551, 0
  %v715 = vsel %vm251, %v702, 0
  %v718 = vsel %vm251, %v703, 0
  %v721 = vsel %vm251, %v704, 0
  %v724 = vsel %vm251, %v705, 0
  %726 = vmatpush.bf16.msra.mxu0 0
  %727 = vmatpush.bf16.msra.mxu0 0
  %728 = vmatpush.bf16.msra.mxu0 0
  %729 = vmatpush.bf16.msra.mxu0 %v715
  %730 = vmatpush.bf16.msra.mxu0 %v698
  %731 = vmatpush.bf16.msra.mxu0 %v694
  %732 = vmatpush.bf16.msra.mxu0 %v690
  %733 = vmatpush.bf16.msra.mxu0 %v686
  %734 = vmatmul.bf16.gmra.mxu0 %v712
  %v735 = vpop.f32.mrf.mxu0
  %v736 = vadd.f32 %v709, %v735
  %v737 = vpop.f32.mrf.mxu0
  %738 = vdwg.mxu0
  %739 = vmatpush.bf16.msra.mxu0 0
  %740 = vmatpush.bf16.msra.mxu0 0
  %741 = vmatpush.bf16.msra.mxu0 0
  %742 = vmatpush.bf16.msra.mxu0 %v718
  %743 = vmatpush.bf16.msra.mxu0 %v699
  %744 = vmatpush.bf16.msra.mxu0 %v695
  %745 = vmatpush.bf16.msra.mxu0 %v691
  %746 = vmatpush.bf16.msra.mxu0 %v687
  %747 = vmatmul.bf16.gmra.mxu0 %v712
  %v748 = vpop.f32.mrf.mxu0
  %v749 = vadd.f32 %v709, %v748
  %v750 = vpop.f32.mrf.mxu0
  %751 = vdwg.mxu0
  %752 = vmatpush.bf16.msra.mxu0 0
  %753 = vmatpush.bf16.msra.mxu0 0
  %754 = vmatpush.bf16.msra.mxu0 0
  %755 = vmatpush.bf16.msra.mxu0 %v721
  %756 = vmatpush.bf16.msra.mxu0 %v700
  %757 = vmatpush.bf16.msra.mxu0 %v696
  %758 = vmatpush.bf16.msra.mxu0 %v692
  %759 = vmatpush.bf16.msra.mxu0 %v688
  %760 = vmatmul.bf16.gmra.mxu0 %v712
  %v761 = vpop.f32.mrf.mxu0
  %v762 = vadd.f32 %v709, %v761
  %v763 = vpop.f32.mrf.mxu0
  %764 = vdwg.mxu0
  %765 = vmatpush.bf16.msra.mxu0 0
  %766 = vmatpush.bf16.msra.mxu0 0
  %767 = vmatpush.bf16.msra.mxu0 0
  %768 = vmatpush.bf16.msra.mxu0 %v724
  %769 = vmatpush.bf16.msra.mxu0 %v701
  %770 = vmatpush.bf16.msra.mxu0 %v697
  %771 = vmatpush.bf16.msra.mxu0 %v693
  %772 = vmatpush.bf16.msra.mxu0 %v689
  %773 = vmatmul.bf16.gmra.mxu0 %v712
  %v774 = vpop.f32.mrf.mxu0
  %v775 = vadd.f32 %v709, %v774
  %v776 = vpop.f32.mrf.mxu0
  %777 = vdwg.mxu0
  %v778 = vmax.f32 %v736, 0.0
  %v779 = vmax.f32 %v749, 0.0
  %v780 = vmax.f32 %v762, 0.0
  %v781 = vmax.f32 %v775, 0.0
  %s782 = scalar_lea.vmem %s3, 4
  %v783 = vld [vmem:[%s782] sm:$0xf]
  %s784 = scalar_lea.vmem %s4, 8
  %v785 = vld [vmem:[%s784] sm:$0xff]
  %786 = vrot.lane.b32.xlu0 %v778, 17
  %v787 = vpop.permute.xlu0 %786
  %788 = vrot.lane.b32.xlu0 %v779, 17
  %v789 = vpop.permute.xlu0 %788
  %790 = vrot.lane.b32.xlu0 %v780, 17
  %v791 = vpop.permute.xlu0 %790
  %792 = vrot.lane.b32.xlu0 %v781, 17
  %v793 = vpop.permute.xlu0 %792
  %v794 = vsel %vm90, %v791, %v793
  %v795 = vsel %vm90, %v789, %v791
  %v796 = vsel %vm90, %v787, %v789
  %v797 = vsel %vm90, %v793, %v787
  %798 = vrot.lane.b32.xlu0 %v778, 16
  %v799 = vpop.permute.xlu0 %798
  %800 = vrot.lane.b32.xlu0 %v779, 16
  %v801 = vpop.permute.xlu0 %800
  %802 = vrot.lane.b32.xlu0 %v780, 16
  %v803 = vpop.permute.xlu0 %802
  %804 = vrot.lane.b32.xlu0 %v781, 16
  %v805 = vpop.permute.xlu0 %804
  %v806 = vsel %vm103, %v803, %v805
  %v807 = vsel %vm103, %v801, %v803
  %v808 = vsel %vm103, %v799, %v801
  %v809 = vsel %vm103, %v805, %v799
  %810 = vrot.lane.b32.xlu0 %v778, 15
  %v811 = vpop.permute.xlu0 %810
  %812 = vrot.lane.b32.xlu0 %v779, 15
  %v813 = vpop.permute.xlu0 %812
  %814 = vrot.lane.b32.xlu0 %v780, 15
  %v815 = vpop.permute.xlu0 %814
  %816 = vrot.lane.b32.xlu0 %v781, 15
  %v817 = vpop.permute.xlu0 %816
  %v818 = vsel %vm116, %v815, %v817
  %v819 = vsel %vm116, %v813, %v815
  %v820 = vsel %vm116, %v811, %v813
  %v821 = vsel %vm116, %v817, %v811
  %822 = vrot.lane.b32.xlu0 %v778, 1
  %v823 = vpop.permute.xlu0 %822
  %824 = vrot.lane.b32.xlu0 %v779, 1
  %v825 = vpop.permute.xlu0 %824
  %826 = vrot.lane.b32.xlu0 %v780, 1
  %v827 = vpop.permute.xlu0 %826
  %828 = vrot.lane.b32.xlu0 %v781, 1
  %v829 = vpop.permute.xlu0 %828
  %v830 = vsel %vm129, %v827, %v829
  %v831 = vsel %vm129, %v825, %v827
  %v832 = vsel %vm129, %v823, %v825
  %v833 = vsel %vm129, %v829, %v823
  %834 = vrot.lane.b32.xlu0 %v778, 127
  %v835 = vpop.permute.xlu0 %834
  %836 = vrot.lane.b32.xlu0 %v779, 127
  %v837 = vpop.permute.xlu0 %836
  %838 = vrot.lane.b32.xlu0 %v780, 127
  %v839 = vpop.permute.xlu0 %838
  %840 = vrot.lane.b32.xlu0 %v781, 127
  %v841 = vpop.permute.xlu0 %840
  %v842 = vsel %vm142, %v839, %v841
  %v843 = vsel %vm142, %v837, %v839
  %v844 = vsel %vm142, %v835, %v837
  %v845 = vsel %vm142, %v841, %v835
  %846 = vrot.lane.b32.xlu0 %v778, 113
  %v847 = vpop.permute.xlu0 %846
  %848 = vrot.lane.b32.xlu0 %v779, 113
  %v849 = vpop.permute.xlu0 %848
  %850 = vrot.lane.b32.xlu0 %v780, 113
  %v851 = vpop.permute.xlu0 %850
  %852 = vrot.lane.b32.xlu0 %v781, 113
  %v853 = vpop.permute.xlu0 %852
  %v854 = vsel %vm155, %v851, %v853
  %v855 = vsel %vm155, %v849, %v851
  %v856 = vsel %vm155, %v847, %v849
  %v857 = vsel %vm155, %v853, %v847
  %858 = vrot.lane.b32.xlu0 %v778, 112
  %v859 = vpop.permute.xlu0 %858
  %860 = vrot.lane.b32.xlu0 %v779, 112
  %v861 = vpop.permute.xlu0 %860
  %862 = vrot.lane.b32.xlu0 %v780, 112
  %v863 = vpop.permute.xlu0 %862
  %864 = vrot.lane.b32.xlu0 %v781, 112
  %v865 = vpop.permute.xlu0 %864
  %v866 = vsel %vm168, %v863, %v865
  %v867 = vsel %vm168, %v861, %v863
  %v868 = vsel %vm168, %v859, %v861
  %v869 = vsel %vm168, %v865, %v859
  %870 = vrot.lane.b32.xlu0 %v778, 111
  %v871 = vpop.permute.xlu0 %870
  %872 = vrot.lane.b32.xlu0 %v779, 111
  %v873 = vpop.permute.xlu0 %872
  %874 = vrot.lane.b32.xlu0 %v780, 111
  %v875 = vpop.permute.xlu0 %874
  %876 = vrot.lane.b32.xlu0 %v781, 111
  %v877 = vpop.permute.xlu0 %876
  %v878 = vsel %vm181, %v875, %v877
  %v879 = vsel %vm181, %v873, %v875
  %v880 = vsel %vm181, %v871, %v873
  %v881 = vsel %vm181, %v877, %v871
  %v882 = vmul.f32 %v797, %v27
  %v883 = vmul.f32 %v796, %v28
  %v884 = vmul.f32 %v795, %v29
  %v885 = vmul.f32 %v794, %v30
  %v886 = vmul.f32 %v809, %v31
  %v887 = vmul.f32 %v808, %v32
  %v888 = vmul.f32 %v807, %v33
  %v889 = vmul.f32 %v806, %v34
  %v890 = vmul.f32 %v821, %v35
  %v891 = vmul.f32 %v820, %v36
  %v892 = vmul.f32 %v819, %v37
  %v893 = vmul.f32 %v818, %v38
  %v894 = vmul.f32 %v833, %v39
  %v895 = vmul.f32 %v832, %v40
  %v896 = vmul.f32 %v831, %v41
  %v897 = vmul.f32 %v830, %v42
  %v898 = vmul.f32 %v778, %v43
  %v899 = vmul.f32 %v779, %v44
  %v900 = vmul.f32 %v780, %v45
  %v901 = vmul.f32 %v781, %v46
  %v902 = vmul.f32 %v844, %v47
  %v903 = vmul.f32 %v843, %v48
  %v904 = vmul.f32 %v842, %v49
  %v905 = vmul.f32 %v845, %v50
  %v906 = vmul.f32 %v856, %v51
  %v907 = vmul.f32 %v855, %v52
  %v908 = vmul.f32 %v854, %v53
  %v909 = vmul.f32 %v857, %v54
  %v910 = vmul.f32 %v868, %v55
  %v911 = vmul.f32 %v867, %v56
  %v912 = vmul.f32 %v866, %v57
  %v913 = vmul.f32 %v869, %v58
  %v914 = vmul.f32 %v880, %v59
  %v915 = vmul.f32 %v879, %v60
  %v916 = vmul.f32 %v878, %v61
  %v917 = vmul.f32 %v881, %v62
  %v918 = vpack.c.bf16 %v886, %v882
  %v919 = vpack.c.bf16 %v887, %v883
  %v920 = vpack.c.bf16 %v888, %v884
  %v921 = vpack.c.bf16 %v889, %v885
  %v922 = vpack.c.bf16 %v894, %v890
  %v923 = vpack.c.bf16 %v895, %v891
  %v924 = vpack.c.bf16 %v896, %v892
  %v925 = vpack.c.bf16 %v897, %v893
  %v926 = vpack.c.bf16 %v902, %v898
  %v927 = vpack.c.bf16 %v903, %v899
  %v928 = vpack.c.bf16 %v904, %v900
  %v929 = vpack.c.bf16 %v905, %v901
  %v930 = vpack.c.bf16 %v910, %v906
  %v931 = vpack.c.bf16 %v911, %v907
  %v932 = vpack.c.bf16 %v912, %v908
  %v933 = vpack.c.bf16 %v913, %v909
  %v934 = vpack.c.bf16 %v914, %v914
  %v935 = vpack.c.bf16 %v915, %v915
  %v936 = vpack.c.bf16 %v916, %v916
  %v937 = vpack.c.bf16 %v917, %v917
  %939 = vset.pattern.permute.xlu0 0
  %940 = vperm.xlu0 %939, %v785
  %v941 = vpop.permute.xlu0 %940
  %v944 = vsel %vm247, %v783, 0
  %v947 = vsel %vm251, %v934, 0
  %v950 = vsel %vm251, %v935, 0
  %v953 = vsel %vm251, %v936, 0
  %v956 = vsel %vm251, %v937, 0
  %958 = vmatpush.bf16.msra.mxu0 0
  %959 = vmatpush.bf16.msra.mxu0 0
  %960 = vmatpush.bf16.msra.mxu0 0
  %961 = vmatpush.bf16.msra.mxu0 %v947
  %962 = vmatpush.bf16.msra.mxu0 %v930
  %963 = vmatpush.bf16.msra.mxu0 %v926
  %964 = vmatpush.bf16.msra.mxu0 %v922
  %965 = vmatpush.bf16.msra.mxu0 %v918
  %966 = vmatmul.bf16.gmra.mxu0 %v944
  %v967 = vpop.f32.mrf.mxu0
  %v968 = vadd.f32 %v941, %v967
  %v969 = vpop.f32.mrf.mxu0
  %970 = vdwg.mxu0
  %971 = vmatpush.bf16.msra.mxu0 0
  %972 = vmatpush.bf16.msra.mxu0 0
  %973 = vmatpush.bf16.msra.mxu0 0
  %974 = vmatpush.bf16.msra.mxu0 %v950
  %975 = vmatpush.bf16.msra.mxu0 %v931
  %976 = vmatpush.bf16.msra.mxu0 %v927
  %977 = vmatpush.bf16.msra.mxu0 %v923
  %978 = vmatpush.bf16.msra.mxu0 %v919
  %979 = vmatmul.bf16.gmra.mxu0 %v944
  %v980 = vpop.f32.mrf.mxu0
  %v981 = vadd.f32 %v941, %v980
  %v982 = vpop.f32.mrf.mxu0
  %983 = vdwg.mxu0
  %984 = vmatpush.bf16.msra.mxu0 0
  %985 = vmatpush.bf16.msra.mxu0 0
  %986 = vmatpush.bf16.msra.mxu0 0
  %987 = vmatpush.bf16.msra.mxu0 %v953
  %988 = vmatpush.bf16.msra.mxu0 %v932
  %989 = vmatpush.bf16.msra.mxu0 %v928
  %990 = vmatpush.bf16.msra.mxu0 %v924
  %991 = vmatpush.bf16.msra.mxu0 %v920
  %992 = vmatmul.bf16.gmra.mxu0 %v944
  %v993 = vpop.f32.mrf.mxu0
  %v994 = vadd.f32 %v941, %v993
  %v995 = vpop.f32.mrf.mxu0
  %996 = vdwg.mxu0
  %997 = vmatpush.bf16.msra.mxu0 0
  %998 = vmatpush.bf16.msra.mxu0 0
  %999 = vmatpush.bf16.msra.mxu0 0
  %1000 = vmatpush.bf16.msra.mxu0 %v956
  %1001 = vmatpush.bf16.msra.mxu0 %v933
  %1002 = vmatpush.bf16.msra.mxu0 %v929
  %1003 = vmatpush.bf16.msra.mxu0 %v925
  %1004 = vmatpush.bf16.msra.mxu0 %v921
  %1005 = vmatmul.bf16.gmra.mxu0 %v944
  %v1006 = vpop.f32.mrf.mxu0
  %v1007 = vadd.f32 %v941, %v1006
  %v1008 = vpop.f32.mrf.mxu0
  %1009 = vdwg.mxu0
  %v1010 = vadd.f32 %v546, %v968
  %v1011 = vadd.f32 %v547, %v981
  %v1012 = vadd.f32 %v548, %v994
  %v1013 = vadd.f32 %v549, %v1007
  %1014 = vst [vmem:[%s7] sm:$0xff] %v1010
  %1015 = vst [vmem:[%s7 + $0x8] sm:$0xff] %v1011
  %1016 = vst [vmem:[%s7 + $0x10] sm:$0xff] %v1012
  %1017 = vst [vmem:[%s7 + $0x18] sm:$0xff] %v1013
  // Predicated region
  $region30: #{_lambda_.4} parent=0 // pred_check
    _
  $region31: #{_lambda_.4} parent=0 // pred_check_branch
    %1019 = sbr.rel (0) target = $region33
  $region32: #{_lambda_.4} parent=0 // pred_region
    _
  $region33: #{_lambda_.4} parent=0 // pred_fallthru
    _
  // Predicated region
  $region34: #{_lambda_.4} parent=0 // pred_check
    _
  $region35: #{_lambda_.4} parent=0 // pred_check_branch
    %1021 = sbr.rel (0) target = $region37
  $region36: #{_lambda_.4} parent=0 // pred_region
    _
  $region37: #{_lambda_.4} parent=0 // pred_fallthru
    _

</llo_original>
